<compile_context>
chip_gen: v7x
topology: tpu7x:2x2x1
jax: 0.10.0
libtpu: 0.0.40
codegen_flags: <defaults>
</compile_context>

<pallas_src>
import numpy as np
import jax
import jax.numpy as jnp
from jax.experimental import pallas as pl
from jax.experimental.pallas import tpu as pltpu

# ---------------- tiny CLIP-vision config ----------------
B, T = 2, 2                    # batch, frames
C, IMG, PATCH = 3, 16, 8       # channels, image size, patch size
GH = IMG // PATCH              # patches per side
P = GH * GH                    # 4 patches
S = P + 1                      # 5 tokens (CLS + patches)
D = 32                         # hidden size
NH, HD = 4, 8                  # num heads, head dim
INTER = 64                     # MLP intermediate size
PD = 16                        # projection_dim
LAYERS = 2
EPS = 1e-5
PATCH_DIM = C * PATCH * PATCH  # 192


def _layernorm(x, g, b):
    mu = jnp.mean(x, axis=-1, keepdims=True)
    var = jnp.mean((x - mu) ** 2, axis=-1, keepdims=True)
    return (x - mu) * jax.lax.rsqrt(var + EPS) * g + b


# ---------------- fused single-program kernel ----------------
def clip_fused_kernel(patches_ref, clspos_ref, pre_g_ref, pre_b_ref,
                      mask_ref, sel_ref,
                      ln1g_ref, ln1b_ref, wqkv_ref, bqkv_ref, wo_ref, bo_ref,
                      ln2g_ref, ln2b_ref, w1_ref, b1_ref, w2_ref, b2_ref,
                      wpatch_ref, post_g_ref, post_b_ref, wproj_ref,
                      out_ref):
    # patch-conv embedding (im2col matmul) + class/position embeddings + pre-LayerNorm
    pe = jnp.dot(patches_ref[...], wpatch_ref[...],
                 preferred_element_type=jnp.float32)                 # (NS, D)
    h = _layernorm(pe + clspos_ref[...], pre_g_ref[...], pre_b_ref[...])

    mask = mask_ref[...]                                             # (NS, NS) block-diag additive

    for l in range(LAYERS):                                          # unrolled
        # ---- self-attention ----
        x = _layernorm(h, ln1g_ref[l], ln1b_ref[l])
        qkv = jnp.dot(x, wqkv_ref[l],
                      preferred_element_type=jnp.float32) + bqkv_ref[l]   # (NS, 3D), q pre-scaled
        q = qkv[:, 0:D]
        k = qkv[:, D:2 * D]
        v = qkv[:, 2 * D:3 * D]

        heads = []
        for hh in range(NH):
            qh = q[:, hh * HD:(hh + 1) * HD]
            kh = k[:, hh * HD:(hh + 1) * HD]
            vh = v[:, hh * HD:(hh + 1) * HD]
            s = jax.lax.dot_general(qh, kh, (((1,), (1,)), ((), ())),
                                    preferred_element_type=jnp.float32) + mask   # (NS, NS)
            s = s - jnp.max(s, axis=-1, keepdims=True)
            p = jnp.exp(s)
            p = p * pl.reciprocal(jnp.sum(p, axis=-1, keepdims=True), approx=True)
            heads.append(jnp.dot(p, vh, preferred_element_type=jnp.float32))     # (NS, HD)
        attn = jnp.concatenate(heads, axis=-1)                                    # (NS, D)

        h = h + jnp.dot(attn, wo_ref[l], preferred_element_type=jnp.float32) + bo_ref[l]

        # ---- MLP (quick_gelu) ----
        x2 = _layernorm(h, ln2g_ref[l], ln2b_ref[l])
        m = jnp.dot(x2, w1_ref[l], preferred_element_type=jnp.float32) + b1_ref[l]
        m = m * jax.nn.sigmoid(1.702 * m)
        h = h + jnp.dot(m, w2_ref[l], preferred_element_type=jnp.float32) + b2_ref[l]

    # ---- pool CLS rows (selection matmul), post-LayerNorm, visual_projection ----
    pooled = jnp.dot(sel_ref[...], h, preferred_element_type=jnp.float32)   # (N, D)
    pooled = _layernorm(pooled, post_g_ref[...], post_b_ref[...])
    out_ref[...] = jnp.dot(pooled, wproj_ref[...],
                           preferred_element_type=jnp.float32)              # (N, PD)


# ---------------- forward (Pallas) ----------------
@jax.jit
def feature_extractor_forward(x, params):
    Bx, Tx = x.shape[0], x.shape[1]
    N = Bx * Tx
    NS = N * S

    # torch.flatten(x, 0, 1) + patch extraction == Conv2d(k=patch, stride=patch) im2col,
    # (C, ph, pw) ordering identical to the Conv2d weight layout.
    xf = x.reshape(N, C, GH, PATCH, GH, PATCH)
    patches = xf.transpose(0, 2, 4, 1, 3, 5).reshape(N, P, PATCH_DIM)
    patches_pad = jnp.concatenate(
        [jnp.zeros((N, 1, PATCH_DIM), jnp.float32), patches], axis=1
    ).reshape(NS, PATCH_DIM)                                            # row i*S is CLS slot (zeros)

    cls_pos = params['pos'] + jnp.concatenate(
        [params['cls'][None, :], jnp.zeros((P, D), jnp.float32)], axis=0)        # (S, D)
    cls_pos_full = jnp.tile(cls_pos, (N, 1))                                     # (NS, D)

    # trace-time constants: block-diagonal attention mask + CLS-row selector
    tok = jnp.arange(NS) // S
    mask = jnp.where(tok[:, None] == tok[None, :], 0.0, -1e9).astype(jnp.float32)   # (NS, NS)
    sel = (jnp.arange(N)[:, None] * S == jnp.arange(NS)[None, :]).astype(jnp.float32)  # (N, NS)

    # stack per-layer weights; fold CLIP q-scale into the fused QKV weight/bias
    scale = HD ** -0.5
    st = lambda key: jnp.stack([lp[key] for lp in params['layers']])
    w_qkv = jnp.stack([jnp.concatenate([lp['wq'] * scale, lp['wk'], lp['wv']], axis=-1)
                       for lp in params['layers']])                     # (L, D, 3D)
    b_qkv = jnp.stack([jnp.concatenate([lp['bq'] * scale, lp['bk'], lp['bv']], axis=-1)
                       for lp in params['layers']])                     # (L, 1, 3D)

    full = lambda shape: pl.BlockSpec(shape, lambda i, _s=shape: (0,) * len(_s))

    out = pl.pallas_call(
        clip_fused_kernel,
        out_shape=jax.ShapeDtypeStruct((N, PD), jnp.float32),
        grid=(1,),
        in_specs=[
            full((NS, PATCH_DIM)), full((NS, D)), full((1, D)), full((1, D)),
            full((NS, NS)), full((N, NS)),
            full((LAYERS, 1, D)), full((LAYERS, 1, D)),
            full((LAYERS, D, 3 * D)), full((LAYERS, 1, 3 * D)),
            full((LAYERS, D, D)), full((LAYERS, 1, D)),
            full((LAYERS, 1, D)), full((LAYERS, 1, D)),
            full((LAYERS, D, INTER)), full((LAYERS, 1, INTER)),
            full((LAYERS, INTER, D)), full((LAYERS, 1, D)),
            full((PATCH_DIM, D)), full((1, D)), full((1, D)), full((D, PD)),
        ],
        out_specs=full((N, PD)),
        compiler_params=pltpu.CompilerParams(dimension_semantics=("arbitrary",)),
    )(patches_pad, cls_pos_full, params['pre_ln_g'], params['pre_ln_b'],
      mask, sel,
      st('ln1_g'), st('ln1_b'), w_qkv, b_qkv, st('wo'), st('bo'),
      st('ln2_g'), st('ln2_b'), st('w1'), st('b1'), st('w2'), st('b2'),
      params['w_patch'], params['post_ln_g'], params['post_ln_b'], params['w_proj'])

    # torch.unflatten(x, 0, (B, T))
    return out.reshape(Bx, Tx, PD)


# ---------------- pure-JAX reference (for correctness check) ----------------
def reference_forward(x, params):
    Bx, Tx = x.shape[0], x.shape[1]
    N = Bx * Tx
    xf = x.reshape(N, C, GH, PATCH, GH, PATCH)
    patches = xf.transpose(0, 2, 4, 1, 3, 5).reshape(N, P, PATCH_DIM)
    emb = patches @ params['w_patch']
    emb = jnp.concatenate([jnp.broadcast_to(params['cls'], (N, 1, D)), emb], axis=1)
    emb = emb + params['pos'][None]

    def ln(a, g, b):
        mu = jnp.mean(a, axis=-1, keepdims=True)
        var = jnp.mean((a - mu) ** 2, axis=-1, keepdims=True)
        return (a - mu) * jax.lax.rsqrt(var + EPS) * g + b

    h = ln(emb, params['pre_ln_g'], params['pre_ln_b'])
    for lp in params['layers']:
        x1 = ln(h, lp['ln1_g'], lp['ln1_b'])
        q = (x1 @ lp['wq'] + lp['bq']) * (HD ** -0.5)
        k = x1 @ lp['wk'] + lp['bk']
        v = x1 @ lp['wv'] + lp['bv']
        qh = q.reshape(N, S, NH, HD).transpose(0, 2, 1, 3)
        kh = k.reshape(N, S, NH, HD).transpose(0, 2, 1, 3)
        vh = v.reshape(N, S, NH, HD).transpose(0, 2, 1, 3)
        s = qh @ kh.transpose(0, 1, 3, 2)
        p = jax.nn.softmax(s, axis=-1)
        o = (p @ vh).transpose(0, 2, 1, 3).reshape(N, S, D)
        h = h + (o @ lp['wo'] + lp['bo'])
        x2 = ln(h, lp['ln2_g'], lp['ln2_b'])
        m = x2 @ lp['w1'] + lp['b1']
        m = m * jax.nn.sigmoid(1.702 * m)
        h = h + (m @ lp['w2'] + lp['b2'])
    pooled = ln(h[:, 0, :], params['post_ln_g'], params['post_ln_b'])
    feats = pooled @ params['w_proj']
    return feats.reshape(Bx, Tx, PD)


# ---------------- deterministic parameter construction ----------------
def make_params(key):
    ks = iter(jax.random.split(key, 128))
    nrm = lambda shape, scale=0.02: scale * jax.random.normal(next(ks), shape, jnp.float32)
    params = {
        'w_patch': nrm((PATCH_DIM, D)),          # Conv2d(D, C, P, P).weight.reshape(D,-1).T
        'cls': nrm((D,)),
        'pos': nrm((S, D)),
        'pre_ln_g': jnp.ones((1, D), jnp.float32),
        'pre_ln_b': jnp.zeros((1, D), jnp.float32),
        'post_ln_g': jnp.ones((1, D), jnp.float32),
        'post_ln_b': jnp.zeros((1, D), jnp.float32),
        'w_proj': nrm((D, PD)),                  # visual_projection (bias=False)
        'layers': [],
    }
    for _ in range(LAYERS):
        params['layers'].append({
            'ln1_g': jnp.ones((1, D), jnp.float32), 'ln1_b': jnp.zeros((1, D), jnp.float32),
            'wq': nrm((D, D)), 'bq': nrm((1, D)),
            'wk': nrm((D, D)), 'bk': nrm((1, D)),
            'wv': nrm((D, D)), 'bv': nrm((1, D)),
            'wo': nrm((D, D)), 'bo': nrm((1, D)),
            'ln2_g': jnp.ones((1, D), jnp.float32), 'ln2_b': jnp.zeros((1, D), jnp.float32),
            'w1': nrm((D, INTER)), 'b1': nrm((1, INTER)),
            'w2': nrm((INTER, D)), 'b2': nrm((1, D)),
        })
    return params


if __name__ == "__main__":
    root = jax.random.PRNGKey(0)
    kx, kp = jax.random.split(root)
    x = jax.random.normal(kx, (B, T, C, IMG, IMG), jnp.float32)   # (B, T, C, H, W) — NCHW frames
    params = make_params(kp)

    out = feature_extractor_forward(x, params)
    out = jax.block_until_ready(out)
    assert out.shape == (B, T, PD), out.shape

    ref = reference_forward(x, params)
    np.testing.assert_allclose(np.asarray(out), np.asarray(ref), rtol=2e-2, atol=2e-3)

    print("KERNEL_OK")
</pallas_src>

<mosaic_0001>
module attributes {stable_mosaic.version = 11 : i64} {
  func.func @clip_fused_kernel(%arg0: i32, %arg1: memref<20x192xf32, #tpu.memory_space<vmem>>, %arg2: memref<20x32xf32, #tpu.memory_space<vmem>>, %arg3: memref<1x32xf32, #tpu.memory_space<vmem>>, %arg4: memref<1x32xf32, #tpu.memory_space<vmem>>, %arg5: memref<20x20xf32, #tpu.memory_space<vmem>>, %arg6: memref<4x20xf32, #tpu.memory_space<vmem>>, %arg7: memref<2x1x32xf32, #tpu.memory_space<vmem>>, %arg8: memref<2x1x32xf32, #tpu.memory_space<vmem>>, %arg9: memref<2x32x96xf32, #tpu.memory_space<vmem>>, %arg10: memref<2x1x96xf32, #tpu.memory_space<vmem>>, %arg11: memref<2x32x32xf32, #tpu.memory_space<vmem>>, %arg12: memref<2x1x32xf32, #tpu.memory_space<vmem>>, %arg13: memref<2x1x32xf32, #tpu.memory_space<vmem>>, %arg14: memref<2x1x32xf32, #tpu.memory_space<vmem>>, %arg15: memref<2x32x64xf32, #tpu.memory_space<vmem>>, %arg16: memref<2x1x64xf32, #tpu.memory_space<vmem>>, %arg17: memref<2x64x32xf32, #tpu.memory_space<vmem>>, %arg18: memref<2x1x32xf32, #tpu.memory_space<vmem>>, %arg19: memref<192x32xf32, #tpu.memory_space<vmem>>, %arg20: memref<1x32xf32, #tpu.memory_space<vmem>>, %arg21: memref<1x32xf32, #tpu.memory_space<vmem>>, %arg22: memref<32x16xf32, #tpu.memory_space<vmem>>, %arg23: memref<4x16xf32, #tpu.memory_space<vmem>>) attributes {dimension_semantics = [#tpu.dimension_semantics<arbitrary>], iteration_bounds = array<i64: 1>, scalar_prefetch = 0 : i64, scratch_operands = 0 : i64, tpu.core_type = #tpu.core_type<tc>, window_params = [{pipeline_mode = #tpu.pipeline_mode<synchronous>, transform_indices = @transform_0, window_bounds = array<i64: 20, 192>}, {pipeline_mode = #tpu.pipeline_mode<synchronous>, transform_indices = @transform_1, window_bounds = array<i64: 20, 32>}, {pipeline_mode = #tpu.pipeline_mode<synchronous>, transform_indices = @transform_2, window_bounds = array<i64: 1, 32>}, {pipeline_mode = #tpu.pipeline_mode<synchronous>, transform_indices = @transform_3, window_bounds = array<i64: 1, 32>}, {pipeline_mode = #tpu.pipeline_mode<synchronous>, transform_indices = @transform_4, window_bounds = array<i64: 20, 20>}, {pipeline_mode = #tpu.pipeline_mode<synchronous>, transform_indices = @transform_5, window_bounds = array<i64: 4, 20>}, {pipeline_mode = #tpu.pipeline_mode<synchronous>, transform_indices = @transform_6, window_bounds = array<i64: 2, 1, 32>}, {pipeline_mode = #tpu.pipeline_mode<synchronous>, transform_indices = @transform_7, window_bounds = array<i64: 2, 1, 32>}, {pipeline_mode = #tpu.pipeline_mode<synchronous>, transform_indices = @transform_8, window_bounds = array<i64: 2, 32, 96>}, {pipeline_mode = #tpu.pipeline_mode<synchronous>, transform_indices = @transform_9, window_bounds = array<i64: 2, 1, 96>}, {pipeline_mode = #tpu.pipeline_mode<synchronous>, transform_indices = @transform_10, window_bounds = array<i64: 2, 32, 32>}, {pipeline_mode = #tpu.pipeline_mode<synchronous>, transform_indices = @transform_11, window_bounds = array<i64: 2, 1, 32>}, {pipeline_mode = #tpu.pipeline_mode<synchronous>, transform_indices = @transform_12, window_bounds = array<i64: 2, 1, 32>}, {pipeline_mode = #tpu.pipeline_mode<synchronous>, transform_indices = @transform_13, window_bounds = array<i64: 2, 1, 32>}, {pipeline_mode = #tpu.pipeline_mode<synchronous>, transform_indices = @transform_14, window_bounds = array<i64: 2, 32, 64>}, {pipeline_mode = #tpu.pipeline_mode<synchronous>, transform_indices = @transform_15, window_bounds = array<i64: 2, 1, 64>}, {pipeline_mode = #tpu.pipeline_mode<synchronous>, transform_indices = @transform_16, window_bounds = array<i64: 2, 64, 32>}, {pipeline_mode = #tpu.pipeline_mode<synchronous>, transform_indices = @transform_17, window_bounds = array<i64: 2, 1, 32>}, {pipeline_mode = #tpu.pipeline_mode<synchronous>, transform_indices = @transform_18, window_bounds = array<i64: 192, 32>}, {pipeline_mode = #tpu.pipeline_mode<synchronous>, transform_indices = @transform_19, window_bounds = array<i64: 1, 32>}, {pipeline_mode = #tpu.pipeline_mode<synchronous>, transform_indices = @transform_20, window_bounds = array<i64: 1, 32>}, {pipeline_mode = #tpu.pipeline_mode<synchronous>, transform_indices = @transform_21, window_bounds = array<i64: 32, 16>}, {pipeline_mode = #tpu.pipeline_mode<synchronous>, transform_indices = @transform_22, window_bounds = array<i64: 4, 16>}]} {
    %c0 = arith.constant 0 : index
    %c0_0 = arith.constant 0 : index
    %0 = vector.load %arg1[%c0, %c0_0] : memref<20x192xf32, #tpu.memory_space<vmem>>, vector<20x192xf32>
    %c0_1 = arith.constant 0 : index
    %c0_2 = arith.constant 0 : index
    %1 = vector.load %arg19[%c0_1, %c0_2] : memref<192x32xf32, #tpu.memory_space<vmem>>, vector<192x32xf32>
    %cst = arith.constant dense<0.000000e+00> : vector<20x32xf32>
    %2 = tpu.matmul %0, %1, %cst {dimension_numbers = #tpu.dot_dimension_numbers<[1], [0], [0], [1], [0, 0, 1, 1], [], []>} : vector<20x192xf32>, vector<192x32xf32>, vector<20x32xf32> -> vector<20x32xf32>
    %c0_3 = arith.constant 0 : index
    %c0_4 = arith.constant 0 : index
    %3 = vector.load %arg2[%c0_3, %c0_4] : memref<20x32xf32, #tpu.memory_space<vmem>>, vector<20x32xf32>
    %4 = arith.addf %2, %3 : vector<20x32xf32>
    %c0_5 = arith.constant 0 : index
    %c0_6 = arith.constant 0 : index
    %5 = vector.load %arg3[%c0_5, %c0_6] : memref<1x32xf32, #tpu.memory_space<vmem>>, vector<1x32xf32>
    %c0_7 = arith.constant 0 : index
    %c0_8 = arith.constant 0 : index
    %6 = vector.load %arg4[%c0_7, %c0_8] : memref<1x32xf32, #tpu.memory_space<vmem>>, vector<1x32xf32>
    %cst_9 = arith.constant dense<0.000000e+00> : vector<20xf32>
    %7 = vector.multi_reduction <add>, %4, %cst_9 [1] : vector<20x32xf32> to vector<20xf32>
    %8 = vector.shape_cast %7 : vector<20xf32> to vector<20x1xf32>
    %cst_10 = arith.constant 3.200000e+01 : f32
    %9 = vector.broadcast %cst_10 : f32 to vector<20x1xf32>
    %10 = arith.divf %8, %9 : vector<20x1xf32>
    %11 = vector.broadcast %10 : vector<20x1xf32> to vector<20x32xf32>
    %12 = arith.subf %4, %11 : vector<20x32xf32>
    %13 = arith.mulf %12, %12 : vector<20x32xf32>
    %cst_11 = arith.constant dense<0.000000e+00> : vector<20xf32>
    %14 = vector.multi_reduction <add>, %13, %cst_11 [1] : vector<20x32xf32> to vector<20xf32>
    %15 = vector.shape_cast %14 : vector<20xf32> to vector<20x1xf32>
    %cst_12 = arith.constant 3.200000e+01 : f32
    %16 = vector.broadcast %cst_12 : f32 to vector<20x1xf32>
    %17 = arith.divf %15, %16 : vector<20x1xf32>
    %18 = vector.broadcast %10 : vector<20x1xf32> to vector<20x32xf32>
    %19 = arith.subf %4, %18 : vector<20x32xf32>
    %cst_13 = arith.constant 9.99999974E-6 : f32
    %20 = vector.broadcast %cst_13 : f32 to vector<20x1xf32>
    %21 = arith.addf %17, %20 : vector<20x1xf32>
    %22 = math.rsqrt %21 : vector<20x1xf32>
    %23 = vector.broadcast %22 : vector<20x1xf32> to vector<20x32xf32>
    %24 = arith.mulf %19, %23 : vector<20x32xf32>
    %25 = vector.broadcast %5 : vector<1x32xf32> to vector<20x32xf32>
    %26 = arith.mulf %24, %25 : vector<20x32xf32>
    %27 = vector.broadcast %6 : vector<1x32xf32> to vector<20x32xf32>
    %28 = arith.addf %26, %27 : vector<20x32xf32>
    %c0_14 = arith.constant 0 : index
    %c0_15 = arith.constant 0 : index
    %29 = vector.load %arg5[%c0_14, %c0_15] : memref<20x20xf32, #tpu.memory_space<vmem>>, vector<20x20xf32>
    %c0_16 = arith.constant 0 : index
    %c0_17 = arith.constant 0 : index
    %c0_18 = arith.constant 0 : index
    %30 = vector.load %arg7[%c0_16, %c0_17, %c0_18] : memref<2x1x32xf32, #tpu.memory_space<vmem>>, vector<1x1x32xf32>
    %31 = vector.shape_cast %30 : vector<1x1x32xf32> to vector<1x32xf32>
    %c0_19 = arith.constant 0 : index
    %c0_20 = arith.constant 0 : index
    %c0_21 = arith.constant 0 : index
    %32 = vector.load %arg8[%c0_19, %c0_20, %c0_21] : memref<2x1x32xf32, #tpu.memory_space<vmem>>, vector<1x1x32xf32>
    %33 = vector.shape_cast %32 : vector<1x1x32xf32> to vector<1x32xf32>
    %cst_22 = arith.constant dense<0.000000e+00> : vector<20xf32>
    %34 = vector.multi_reduction <add>, %28, %cst_22 [1] : vector<20x32xf32> to vector<20xf32>
    %35 = vector.shape_cast %34 : vector<20xf32> to vector<20x1xf32>
    %cst_23 = arith.constant 3.200000e+01 : f32
    %36 = vector.broadcast %cst_23 : f32 to vector<20x1xf32>
    %37 = arith.divf %35, %36 : vector<20x1xf32>
    %38 = vector.broadcast %37 : vector<20x1xf32> to vector<20x32xf32>
    %39 = arith.subf %28, %38 : vector<20x32xf32>
    %40 = arith.mulf %39, %39 : vector<20x32xf32>
    %cst_24 = arith.constant dense<0.000000e+00> : vector<20xf32>
    %41 = vector.multi_reduction <add>, %40, %cst_24 [1] : vector<20x32xf32> to vector<20xf32>
    %42 = vector.shape_cast %41 : vector<20xf32> to vector<20x1xf32>
    %cst_25 = arith.constant 3.200000e+01 : f32
    %43 = vector.broadcast %cst_25 : f32 to vector<20x1xf32>
    %44 = arith.divf %42, %43 : vector<20x1xf32>
    %45 = vector.broadcast %37 : vector<20x1xf32> to vector<20x32xf32>
    %46 = arith.subf %28, %45 : vector<20x32xf32>
    %cst_26 = arith.constant 9.99999974E-6 : f32
    %47 = vector.broadcast %cst_26 : f32 to vector<20x1xf32>
    %48 = arith.addf %44, %47 : vector<20x1xf32>
    %49 = math.rsqrt %48 : vector<20x1xf32>
    %50 = vector.broadcast %49 : vector<20x1xf32> to vector<20x32xf32>
    %51 = arith.mulf %46, %50 : vector<20x32xf32>
    %52 = vector.broadcast %31 : vector<1x32xf32> to vector<20x32xf32>
    %53 = arith.mulf %51, %52 : vector<20x32xf32>
    %54 = vector.broadcast %33 : vector<1x32xf32> to vector<20x32xf32>
    %55 = arith.addf %53, %54 : vector<20x32xf32>
    %c0_27 = arith.constant 0 : index
    %c0_28 = arith.constant 0 : index
    %c0_29 = arith.constant 0 : index
    %56 = vector.load %arg9[%c0_27, %c0_28, %c0_29] : memref<2x32x96xf32, #tpu.memory_space<vmem>>, vector<1x32x96xf32>
    %57 = vector.shape_cast %56 : vector<1x32x96xf32> to vector<32x96xf32>
    %cst_30 = arith.constant dense<0.000000e+00> : vector<20x96xf32>
    %58 = tpu.matmul %55, %57, %cst_30 {dimension_numbers = #tpu.dot_dimension_numbers<[1], [0], [0], [1], [0, 0, 1, 1], [], []>} : vector<20x32xf32>, vector<32x96xf32>, vector<20x96xf32> -> vector<20x96xf32>
    %c0_31 = arith.constant 0 : index
    %c0_32 = arith.constant 0 : index
    %c0_33 = arith.constant 0 : index
    %59 = vector.load %arg10[%c0_31, %c0_32, %c0_33] : memref<2x1x96xf32, #tpu.memory_space<vmem>>, vector<1x1x96xf32>
    %60 = vector.shape_cast %59 : vector<1x1x96xf32> to vector<1x96xf32>
    %61 = vector.broadcast %60 : vector<1x96xf32> to vector<20x96xf32>
    %62 = arith.addf %58, %61 : vector<20x96xf32>
    %63 = vector.extract_strided_slice %62 {offsets = [0, 0], sizes = [20, 32], strides = [1, 1]} : vector<20x96xf32> to vector<20x32xf32>
    %64 = vector.extract_strided_slice %62 {offsets = [0, 32], sizes = [20, 32], strides = [1, 1]} : vector<20x96xf32> to vector<20x32xf32>
    %65 = vector.extract_strided_slice %62 {offsets = [0, 64], sizes = [20, 32], strides = [1, 1]} : vector<20x96xf32> to vector<20x32xf32>
    %66 = vector.extract_strided_slice %63 {offsets = [0, 0], sizes = [20, 8], strides = [1, 1]} : vector<20x32xf32> to vector<20x8xf32>
    %67 = vector.extract_strided_slice %64 {offsets = [0, 0], sizes = [20, 8], strides = [1, 1]} : vector<20x32xf32> to vector<20x8xf32>
    %68 = vector.extract_strided_slice %65 {offsets = [0, 0], sizes = [20, 8], strides = [1, 1]} : vector<20x32xf32> to vector<20x8xf32>
    %cst_34 = arith.constant dense<0.000000e+00> : vector<20x20xf32>
    %69 = tpu.matmul %66, %67, %cst_34 {dimension_numbers = #tpu.dot_dimension_numbers<[1], [1], [0], [0], [0, 0, 1, 0], [], []>} : vector<20x8xf32>, vector<20x8xf32>, vector<20x20xf32> -> vector<20x20xf32>
    %70 = arith.addf %69, %29 : vector<20x20xf32>
    %cst_35 = arith.constant dense<0xFF800000> : vector<20xf32>
    %71 = vector.multi_reduction <maximumf>, %70, %cst_35 [1] : vector<20x20xf32> to vector<20xf32>
    %72 = vector.shape_cast %71 : vector<20xf32> to vector<20x1xf32>
    %73 = vector.broadcast %72 : vector<20x1xf32> to vector<20x20xf32>
    %74 = arith.subf %70, %73 : vector<20x20xf32>
    %75 = math.exp %74 : vector<20x20xf32>
    %cst_36 = arith.constant dense<0.000000e+00> : vector<20xf32>
    %76 = vector.multi_reduction <add>, %75, %cst_36 [1] : vector<20x20xf32> to vector<20xf32>
    %77 = vector.shape_cast %76 : vector<20xf32> to vector<20x1xf32>
    %78 = tpu.reciprocal %77 {approx = true} : vector<20x1xf32> -> vector<20x1xf32>
    %79 = vector.broadcast %78 : vector<20x1xf32> to vector<20x20xf32>
    %80 = arith.mulf %75, %79 : vector<20x20xf32>
    %cst_37 = arith.constant dense<0.000000e+00> : vector<20x8xf32>
    %81 = tpu.matmul %80, %68, %cst_37 {dimension_numbers = #tpu.dot_dimension_numbers<[1], [0], [0], [1], [0, 0, 1, 1], [], []>} : vector<20x20xf32>, vector<20x8xf32>, vector<20x8xf32> -> vector<20x8xf32>
    %82 = vector.extract_strided_slice %63 {offsets = [0, 8], sizes = [20, 8], strides = [1, 1]} : vector<20x32xf32> to vector<20x8xf32>
    %83 = vector.extract_strided_slice %64 {offsets = [0, 8], sizes = [20, 8], strides = [1, 1]} : vector<20x32xf32> to vector<20x8xf32>
    %84 = vector.extract_strided_slice %65 {offsets = [0, 8], sizes = [20, 8], strides = [1, 1]} : vector<20x32xf32> to vector<20x8xf32>
    %cst_38 = arith.constant dense<0.000000e+00> : vector<20x20xf32>
    %85 = tpu.matmul %82, %83, %cst_38 {dimension_numbers = #tpu.dot_dimension_numbers<[1], [1], [0], [0], [0, 0, 1, 0], [], []>} : vector<20x8xf32>, vector<20x8xf32>, vector<20x20xf32> -> vector<20x20xf32>
    %86 = arith.addf %85, %29 : vector<20x20xf32>
    %cst_39 = arith.constant dense<0xFF800000> : vector<20xf32>
    %87 = vector.multi_reduction <maximumf>, %86, %cst_39 [1] : vector<20x20xf32> to vector<20xf32>
    %88 = vector.shape_cast %87 : vector<20xf32> to vector<20x1xf32>
    %89 = vector.broadcast %88 : vector<20x1xf32> to vector<20x20xf32>
    %90 = arith.subf %86, %89 : vector<20x20xf32>
    %91 = math.exp %90 : vector<20x20xf32>
    %cst_40 = arith.constant dense<0.000000e+00> : vector<20xf32>
    %92 = vector.multi_reduction <add>, %91, %cst_40 [1] : vector<20x20xf32> to vector<20xf32>
    %93 = vector.shape_cast %92 : vector<20xf32> to vector<20x1xf32>
    %94 = tpu.reciprocal %93 {approx = true} : vector<20x1xf32> -> vector<20x1xf32>
    %95 = vector.broadcast %94 : vector<20x1xf32> to vector<20x20xf32>
    %96 = arith.mulf %91, %95 : vector<20x20xf32>
    %cst_41 = arith.constant dense<0.000000e+00> : vector<20x8xf32>
    %97 = tpu.matmul %96, %84, %cst_41 {dimension_numbers = #tpu.dot_dimension_numbers<[1], [0], [0], [1], [0, 0, 1, 1], [], []>} : vector<20x20xf32>, vector<20x8xf32>, vector<20x8xf32> -> vector<20x8xf32>
    %98 = vector.extract_strided_slice %63 {offsets = [0, 16], sizes = [20, 8], strides = [1, 1]} : vector<20x32xf32> to vector<20x8xf32>
    %99 = vector.extract_strided_slice %64 {offsets = [0, 16], sizes = [20, 8], strides = [1, 1]} : vector<20x32xf32> to vector<20x8xf32>
    %100 = vector.extract_strided_slice %65 {offsets = [0, 16], sizes = [20, 8], strides = [1, 1]} : vector<20x32xf32> to vector<20x8xf32>
    %cst_42 = arith.constant dense<0.000000e+00> : vector<20x20xf32>
    %101 = tpu.matmul %98, %99, %cst_42 {dimension_numbers = #tpu.dot_dimension_numbers<[1], [1], [0], [0], [0, 0, 1, 0], [], []>} : vector<20x8xf32>, vector<20x8xf32>, vector<20x20xf32> -> vector<20x20xf32>
    %102 = arith.addf %101, %29 : vector<20x20xf32>
    %cst_43 = arith.constant dense<0xFF800000> : vector<20xf32>
    %103 = vector.multi_reduction <maximumf>, %102, %cst_43 [1] : vector<20x20xf32> to vector<20xf32>
    %104 = vector.shape_cast %103 : vector<20xf32> to vector<20x1xf32>
    %105 = vector.broadcast %104 : vector<20x1xf32> to vector<20x20xf32>
    %106 = arith.subf %102, %105 : vector<20x20xf32>
    %107 = math.exp %106 : vector<20x20xf32>
    %cst_44 = arith.constant dense<0.000000e+00> : vector<20xf32>
    %108 = vector.multi_reduction <add>, %107, %cst_44 [1] : vector<20x20xf32> to vector<20xf32>
    %109 = vector.shape_cast %108 : vector<20xf32> to vector<20x1xf32>
    %110 = tpu.reciprocal %109 {approx = true} : vector<20x1xf32> -> vector<20x1xf32>
    %111 = vector.broadcast %110 : vector<20x1xf32> to vector<20x20xf32>
    %112 = arith.mulf %107, %111 : vector<20x20xf32>
    %cst_45 = arith.constant dense<0.000000e+00> : vector<20x8xf32>
    %113 = tpu.matmul %112, %100, %cst_45 {dimension_numbers = #tpu.dot_dimension_numbers<[1], [0], [0], [1], [0, 0, 1, 1], [], []>} : vector<20x20xf32>, vector<20x8xf32>, vector<20x8xf32> -> vector<20x8xf32>
    %114 = vector.extract_strided_slice %63 {offsets = [0, 24], sizes = [20, 8], strides = [1, 1]} : vector<20x32xf32> to vector<20x8xf32>
    %115 = vector.extract_strided_slice %64 {offsets = [0, 24], sizes = [20, 8], strides = [1, 1]} : vector<20x32xf32> to vector<20x8xf32>
    %116 = vector.extract_strided_slice %65 {offsets = [0, 24], sizes = [20, 8], strides = [1, 1]} : vector<20x32xf32> to vector<20x8xf32>
    %cst_46 = arith.constant dense<0.000000e+00> : vector<20x20xf32>
    %117 = tpu.matmul %114, %115, %cst_46 {dimension_numbers = #tpu.dot_dimension_numbers<[1], [1], [0], [0], [0, 0, 1, 0], [], []>} : vector<20x8xf32>, vector<20x8xf32>, vector<20x20xf32> -> vector<20x20xf32>
    %118 = arith.addf %117, %29 : vector<20x20xf32>
    %cst_47 = arith.constant dense<0xFF800000> : vector<20xf32>
    %119 = vector.multi_reduction <maximumf>, %118, %cst_47 [1] : vector<20x20xf32> to vector<20xf32>
    %120 = vector.shape_cast %119 : vector<20xf32> to vector<20x1xf32>
    %121 = vector.broadcast %120 : vector<20x1xf32> to vector<20x20xf32>
    %122 = arith.subf %118, %121 : vector<20x20xf32>
    %123 = math.exp %122 : vector<20x20xf32>
    %cst_48 = arith.constant dense<0.000000e+00> : vector<20xf32>
    %124 = vector.multi_reduction <add>, %123, %cst_48 [1] : vector<20x20xf32> to vector<20xf32>
    %125 = vector.shape_cast %124 : vector<20xf32> to vector<20x1xf32>
    %126 = tpu.reciprocal %125 {approx = true} : vector<20x1xf32> -> vector<20x1xf32>
    %127 = vector.broadcast %126 : vector<20x1xf32> to vector<20x20xf32>
    %128 = arith.mulf %123, %127 : vector<20x20xf32>
    %cst_49 = arith.constant dense<0.000000e+00> : vector<20x8xf32>
    %129 = tpu.matmul %128, %116, %cst_49 {dimension_numbers = #tpu.dot_dimension_numbers<[1], [0], [0], [1], [0, 0, 1, 1], [], []>} : vector<20x20xf32>, vector<20x8xf32>, vector<20x8xf32> -> vector<20x8xf32>
    %130 = tpu.concatenate %81, %97, %113, %129 in 1 : vector<20x8xf32>, vector<20x8xf32>, vector<20x8xf32>, vector<20x8xf32> -> vector<20x32xf32>
    %c0_50 = arith.constant 0 : index
    %c0_51 = arith.constant 0 : index
    %c0_52 = arith.constant 0 : index
    %131 = vector.load %arg11[%c0_50, %c0_51, %c0_52] : memref<2x32x32xf32, #tpu.memory_space<vmem>>, vector<1x32x32xf32>
    %132 = vector.shape_cast %131 : vector<1x32x32xf32> to vector<32x32xf32>
    %cst_53 = arith.constant dense<0.000000e+00> : vector<20x32xf32>
    %133 = tpu.matmul %130, %132, %cst_53 {dimension_numbers = #tpu.dot_dimension_numbers<[1], [0], [0], [1], [0, 0, 1, 1], [], []>} : vector<20x32xf32>, vector<32x32xf32>, vector<20x32xf32> -> vector<20x32xf32>
    %134 = arith.addf %28, %133 : vector<20x32xf32>
    %c0_54 = arith.constant 0 : index
    %c0_55 = arith.constant 0 : index
    %c0_56 = arith.constant 0 : index
    %135 = vector.load %arg12[%c0_54, %c0_55, %c0_56] : memref<2x1x32xf32, #tpu.memory_space<vmem>>, vector<1x1x32xf32>
    %136 = vector.shape_cast %135 : vector<1x1x32xf32> to vector<1x32xf32>
    %137 = vector.broadcast %136 : vector<1x32xf32> to vector<20x32xf32>
    %138 = arith.addf %134, %137 : vector<20x32xf32>
    %c0_57 = arith.constant 0 : index
    %c0_58 = arith.constant 0 : index
    %c0_59 = arith.constant 0 : index
    %139 = vector.load %arg13[%c0_57, %c0_58, %c0_59] : memref<2x1x32xf32, #tpu.memory_space<vmem>>, vector<1x1x32xf32>
    %140 = vector.shape_cast %139 : vector<1x1x32xf32> to vector<1x32xf32>
    %c0_60 = arith.constant 0 : index
    %c0_61 = arith.constant 0 : index
    %c0_62 = arith.constant 0 : index
    %141 = vector.load %arg14[%c0_60, %c0_61, %c0_62] : memref<2x1x32xf32, #tpu.memory_space<vmem>>, vector<1x1x32xf32>
    %142 = vector.shape_cast %141 : vector<1x1x32xf32> to vector<1x32xf32>
    %cst_63 = arith.constant dense<0.000000e+00> : vector<20xf32>
    %143 = vector.multi_reduction <add>, %138, %cst_63 [1] : vector<20x32xf32> to vector<20xf32>
    %144 = vector.shape_cast %143 : vector<20xf32> to vector<20x1xf32>
    %cst_64 = arith.constant 3.200000e+01 : f32
    %145 = vector.broadcast %cst_64 : f32 to vector<20x1xf32>
    %146 = arith.divf %144, %145 : vector<20x1xf32>
    %147 = vector.broadcast %146 : vector<20x1xf32> to vector<20x32xf32>
    %148 = arith.subf %138, %147 : vector<20x32xf32>
    %149 = arith.mulf %148, %148 : vector<20x32xf32>
    %cst_65 = arith.constant dense<0.000000e+00> : vector<20xf32>
    %150 = vector.multi_reduction <add>, %149, %cst_65 [1] : vector<20x32xf32> to vector<20xf32>
    %151 = vector.shape_cast %150 : vector<20xf32> to vector<20x1xf32>
    %cst_66 = arith.constant 3.200000e+01 : f32
    %152 = vector.broadcast %cst_66 : f32 to vector<20x1xf32>
    %153 = arith.divf %151, %152 : vector<20x1xf32>
    %154 = vector.broadcast %146 : vector<20x1xf32> to vector<20x32xf32>
    %155 = arith.subf %138, %154 : vector<20x32xf32>
    %cst_67 = arith.constant 9.99999974E-6 : f32
    %156 = vector.broadcast %cst_67 : f32 to vector<20x1xf32>
    %157 = arith.addf %153, %156 : vector<20x1xf32>
    %158 = math.rsqrt %157 : vector<20x1xf32>
    %159 = vector.broadcast %158 : vector<20x1xf32> to vector<20x32xf32>
    %160 = arith.mulf %155, %159 : vector<20x32xf32>
    %161 = vector.broadcast %140 : vector<1x32xf32> to vector<20x32xf32>
    %162 = arith.mulf %160, %161 : vector<20x32xf32>
    %163 = vector.broadcast %142 : vector<1x32xf32> to vector<20x32xf32>
    %164 = arith.addf %162, %163 : vector<20x32xf32>
    %c0_68 = arith.constant 0 : index
    %c0_69 = arith.constant 0 : index
    %c0_70 = arith.constant 0 : index
    %165 = vector.load %arg15[%c0_68, %c0_69, %c0_70] : memref<2x32x64xf32, #tpu.memory_space<vmem>>, vector<1x32x64xf32>
    %166 = vector.shape_cast %165 : vector<1x32x64xf32> to vector<32x64xf32>
    %cst_71 = arith.constant dense<0.000000e+00> : vector<20x64xf32>
    %167 = tpu.matmul %164, %166, %cst_71 {dimension_numbers = #tpu.dot_dimension_numbers<[1], [0], [0], [1], [0, 0, 1, 1], [], []>} : vector<20x32xf32>, vector<32x64xf32>, vector<20x64xf32> -> vector<20x64xf32>
    %c0_72 = arith.constant 0 : index
    %c0_73 = arith.constant 0 : index
    %c0_74 = arith.constant 0 : index
    %168 = vector.load %arg16[%c0_72, %c0_73, %c0_74] : memref<2x1x64xf32, #tpu.memory_space<vmem>>, vector<1x1x64xf32>
    %169 = vector.shape_cast %168 : vector<1x1x64xf32> to vector<1x64xf32>
    %170 = vector.broadcast %169 : vector<1x64xf32> to vector<20x64xf32>
    %171 = arith.addf %167, %170 : vector<20x64xf32>
    %cst_75 = arith.constant 1.702000e+00 : f32
    %172 = vector.broadcast %cst_75 : f32 to vector<20x64xf32>
    %173 = arith.mulf %172, %171 : vector<20x64xf32>
    %174 = arith.negf %173 : vector<20x64xf32>
    %175 = math.exp %174 : vector<20x64xf32>
    %cst_76 = arith.constant 1.000000e+00 : f32
    %176 = vector.broadcast %cst_76 : f32 to vector<20x64xf32>
    %177 = arith.addf %176, %175 : vector<20x64xf32>
    %178 = arith.divf %176, %177 : vector<20x64xf32>
    %179 = arith.mulf %171, %178 : vector<20x64xf32>
    %c0_77 = arith.constant 0 : index
    %c0_78 = arith.constant 0 : index
    %c0_79 = arith.constant 0 : index
    %180 = vector.load %arg17[%c0_77, %c0_78, %c0_79] : memref<2x64x32xf32, #tpu.memory_space<vmem>>, vector<1x64x32xf32>
    %181 = vector.shape_cast %180 : vector<1x64x32xf32> to vector<64x32xf32>
    %cst_80 = arith.constant dense<0.000000e+00> : vector<20x32xf32>
    %182 = tpu.matmul %179, %181, %cst_80 {dimension_numbers = #tpu.dot_dimension_numbers<[1], [0], [0], [1], [0, 0, 1, 1], [], []>} : vector<20x64xf32>, vector<64x32xf32>, vector<20x32xf32> -> vector<20x32xf32>
    %183 = arith.addf %138, %182 : vector<20x32xf32>
    %c0_81 = arith.constant 0 : index
    %c0_82 = arith.constant 0 : index
    %c0_83 = arith.constant 0 : index
    %184 = vector.load %arg18[%c0_81, %c0_82, %c0_83] : memref<2x1x32xf32, #tpu.memory_space<vmem>>, vector<1x1x32xf32>
    %185 = vector.shape_cast %184 : vector<1x1x32xf32> to vector<1x32xf32>
    %186 = vector.broadcast %185 : vector<1x32xf32> to vector<20x32xf32>
    %187 = arith.addf %183, %186 : vector<20x32xf32>
    %c1 = arith.constant 1 : index
    %c0_84 = arith.constant 0 : index
    %c0_85 = arith.constant 0 : index
    %188 = vector.load %arg7[%c1, %c0_84, %c0_85] : memref<2x1x32xf32, #tpu.memory_space<vmem>>, vector<1x1x32xf32>
    %189 = vector.shape_cast %188 : vector<1x1x32xf32> to vector<1x32xf32>
    %c1_86 = arith.constant 1 : index
    %c0_87 = arith.constant 0 : index
    %c0_88 = arith.constant 0 : index
    %190 = vector.load %arg8[%c1_86, %c0_87, %c0_88] : memref<2x1x32xf32, #tpu.memory_space<vmem>>, vector<1x1x32xf32>
    %191 = vector.shape_cast %190 : vector<1x1x32xf32> to vector<1x32xf32>
    %cst_89 = arith.constant dense<0.000000e+00> : vector<20xf32>
    %192 = vector.multi_reduction <add>, %187, %cst_89 [1] : vector<20x32xf32> to vector<20xf32>
    %193 = vector.shape_cast %192 : vector<20xf32> to vector<20x1xf32>
    %cst_90 = arith.constant 3.200000e+01 : f32
    %194 = vector.broadcast %cst_90 : f32 to vector<20x1xf32>
    %195 = arith.divf %193, %194 : vector<20x1xf32>
    %196 = vector.broadcast %195 : vector<20x1xf32> to vector<20x32xf32>
    %197 = arith.subf %187, %196 : vector<20x32xf32>
    %198 = arith.mulf %197, %197 : vector<20x32xf32>
    %cst_91 = arith.constant dense<0.000000e+00> : vector<20xf32>
    %199 = vector.multi_reduction <add>, %198, %cst_91 [1] : vector<20x32xf32> to vector<20xf32>
    %200 = vector.shape_cast %199 : vector<20xf32> to vector<20x1xf32>
    %cst_92 = arith.constant 3.200000e+01 : f32
    %201 = vector.broadcast %cst_92 : f32 to vector<20x1xf32>
    %202 = arith.divf %200, %201 : vector<20x1xf32>
    %203 = vector.broadcast %195 : vector<20x1xf32> to vector<20x32xf32>
    %204 = arith.subf %187, %203 : vector<20x32xf32>
    %cst_93 = arith.constant 9.99999974E-6 : f32
    %205 = vector.broadcast %cst_93 : f32 to vector<20x1xf32>
    %206 = arith.addf %202, %205 : vector<20x1xf32>
    %207 = math.rsqrt %206 : vector<20x1xf32>
    %208 = vector.broadcast %207 : vector<20x1xf32> to vector<20x32xf32>
    %209 = arith.mulf %204, %208 : vector<20x32xf32>
    %210 = vector.broadcast %189 : vector<1x32xf32> to vector<20x32xf32>
    %211 = arith.mulf %209, %210 : vector<20x32xf32>
    %212 = vector.broadcast %191 : vector<1x32xf32> to vector<20x32xf32>
    %213 = arith.addf %211, %212 : vector<20x32xf32>
    %c1_94 = arith.constant 1 : index
    %c0_95 = arith.constant 0 : index
    %c0_96 = arith.constant 0 : index
    %214 = vector.load %arg9[%c1_94, %c0_95, %c0_96] : memref<2x32x96xf32, #tpu.memory_space<vmem>>, vector<1x32x96xf32>
    %215 = vector.shape_cast %214 : vector<1x32x96xf32> to vector<32x96xf32>
    %cst_97 = arith.constant dense<0.000000e+00> : vector<20x96xf32>
    %216 = tpu.matmul %213, %215, %cst_97 {dimension_numbers = #tpu.dot_dimension_numbers<[1], [0], [0], [1], [0, 0, 1, 1], [], []>} : vector<20x32xf32>, vector<32x96xf32>, vector<20x96xf32> -> vector<20x96xf32>
    %c1_98 = arith.constant 1 : index
    %c0_99 = arith.constant 0 : index
    %c0_100 = arith.constant 0 : index
    %217 = vector.load %arg10[%c1_98, %c0_99, %c0_100] : memref<2x1x96xf32, #tpu.memory_space<vmem>>, vector<1x1x96xf32>
    %218 = vector.shape_cast %217 : vector<1x1x96xf32> to vector<1x96xf32>
    %219 = vector.broadcast %218 : vector<1x96xf32> to vector<20x96xf32>
    %220 = arith.addf %216, %219 : vector<20x96xf32>
    %221 = vector.extract_strided_slice %220 {offsets = [0, 0], sizes = [20, 32], strides = [1, 1]} : vector<20x96xf32> to vector<20x32xf32>
    %222 = vector.extract_strided_slice %220 {offsets = [0, 32], sizes = [20, 32], strides = [1, 1]} : vector<20x96xf32> to vector<20x32xf32>
    %223 = vector.extract_strided_slice %220 {offsets = [0, 64], sizes = [20, 32], strides = [1, 1]} : vector<20x96xf32> to vector<20x32xf32>
    %224 = vector.extract_strided_slice %221 {offsets = [0, 0], sizes = [20, 8], strides = [1, 1]} : vector<20x32xf32> to vector<20x8xf32>
    %225 = vector.extract_strided_slice %222 {offsets = [0, 0], sizes = [20, 8], strides = [1, 1]} : vector<20x32xf32> to vector<20x8xf32>
    %226 = vector.extract_strided_slice %223 {offsets = [0, 0], sizes = [20, 8], strides = [1, 1]} : vector<20x32xf32> to vector<20x8xf32>
    %cst_101 = arith.constant dense<0.000000e+00> : vector<20x20xf32>
    %227 = tpu.matmul %224, %225, %cst_101 {dimension_numbers = #tpu.dot_dimension_numbers<[1], [1], [0], [0], [0, 0, 1, 0], [], []>} : vector<20x8xf32>, vector<20x8xf32>, vector<20x20xf32> -> vector<20x20xf32>
    %228 = arith.addf %227, %29 : vector<20x20xf32>
    %cst_102 = arith.constant dense<0xFF800000> : vector<20xf32>
    %229 = vector.multi_reduction <maximumf>, %228, %cst_102 [1] : vector<20x20xf32> to vector<20xf32>
    %230 = vector.shape_cast %229 : vector<20xf32> to vector<20x1xf32>
    %231 = vector.broadcast %230 : vector<20x1xf32> to vector<20x20xf32>
    %232 = arith.subf %228, %231 : vector<20x20xf32>
    %233 = math.exp %232 : vector<20x20xf32>
    %cst_103 = arith.constant dense<0.000000e+00> : vector<20xf32>
    %234 = vector.multi_reduction <add>, %233, %cst_103 [1] : vector<20x20xf32> to vector<20xf32>
    %235 = vector.shape_cast %234 : vector<20xf32> to vector<20x1xf32>
    %236 = tpu.reciprocal %235 {approx = true} : vector<20x1xf32> -> vector<20x1xf32>
    %237 = vector.broadcast %236 : vector<20x1xf32> to vector<20x20xf32>
    %238 = arith.mulf %233, %237 : vector<20x20xf32>
    %cst_104 = arith.constant dense<0.000000e+00> : vector<20x8xf32>
    %239 = tpu.matmul %238, %226, %cst_104 {dimension_numbers = #tpu.dot_dimension_numbers<[1], [0], [0], [1], [0, 0, 1, 1], [], []>} : vector<20x20xf32>, vector<20x8xf32>, vector<20x8xf32> -> vector<20x8xf32>
    %240 = vector.extract_strided_slice %221 {offsets = [0, 8], sizes = [20, 8], strides = [1, 1]} : vector<20x32xf32> to vector<20x8xf32>
    %241 = vector.extract_strided_slice %222 {offsets = [0, 8], sizes = [20, 8], strides = [1, 1]} : vector<20x32xf32> to vector<20x8xf32>
    %242 = vector.extract_strided_slice %223 {offsets = [0, 8], sizes = [20, 8], strides = [1, 1]} : vector<20x32xf32> to vector<20x8xf32>
    %cst_105 = arith.constant dense<0.000000e+00> : vector<20x20xf32>
    %243 = tpu.matmul %240, %241, %cst_105 {dimension_numbers = #tpu.dot_dimension_numbers<[1], [1], [0], [0], [0, 0, 1, 0], [], []>} : vector<20x8xf32>, vector<20x8xf32>, vector<20x20xf32> -> vector<20x20xf32>
    %244 = arith.addf %243, %29 : vector<20x20xf32>
    %cst_106 = arith.constant dense<0xFF800000> : vector<20xf32>
    %245 = vector.multi_reduction <maximumf>, %244, %cst_106 [1] : vector<20x20xf32> to vector<20xf32>
    %246 = vector.shape_cast %245 : vector<20xf32> to vector<20x1xf32>
    %247 = vector.broadcast %246 : vector<20x1xf32> to vector<20x20xf32>
    %248 = arith.subf %244, %247 : vector<20x20xf32>
    %249 = math.exp %248 : vector<20x20xf32>
    %cst_107 = arith.constant dense<0.000000e+00> : vector<20xf32>
    %250 = vector.multi_reduction <add>, %249, %cst_107 [1] : vector<20x20xf32> to vector<20xf32>
    %251 = vector.shape_cast %250 : vector<20xf32> to vector<20x1xf32>
    %252 = tpu.reciprocal %251 {approx = true} : vector<20x1xf32> -> vector<20x1xf32>
    %253 = vector.broadcast %252 : vector<20x1xf32> to vector<20x20xf32>
    %254 = arith.mulf %249, %253 : vector<20x20xf32>
    %cst_108 = arith.constant dense<0.000000e+00> : vector<20x8xf32>
    %255 = tpu.matmul %254, %242, %cst_108 {dimension_numbers = #tpu.dot_dimension_numbers<[1], [0], [0], [1], [0, 0, 1, 1], [], []>} : vector<20x20xf32>, vector<20x8xf32>, vector<20x8xf32> -> vector<20x8xf32>
    %256 = vector.extract_strided_slice %221 {offsets = [0, 16], sizes = [20, 8], strides = [1, 1]} : vector<20x32xf32> to vector<20x8xf32>
    %257 = vector.extract_strided_slice %222 {offsets = [0, 16], sizes = [20, 8], strides = [1, 1]} : vector<20x32xf32> to vector<20x8xf32>
    %258 = vector.extract_strided_slice %223 {offsets = [0, 16], sizes = [20, 8], strides = [1, 1]} : vector<20x32xf32> to vector<20x8xf32>
    %cst_109 = arith.constant dense<0.000000e+00> : vector<20x20xf32>
    %259 = tpu.matmul %256, %257, %cst_109 {dimension_numbers = #tpu.dot_dimension_numbers<[1], [1], [0], [0], [0, 0, 1, 0], [], []>} : vector<20x8xf32>, vector<20x8xf32>, vector<20x20xf32> -> vector<20x20xf32>
    %260 = arith.addf %259, %29 : vector<20x20xf32>
    %cst_110 = arith.constant dense<0xFF800000> : vector<20xf32>
    %261 = vector.multi_reduction <maximumf>, %260, %cst_110 [1] : vector<20x20xf32> to vector<20xf32>
    %262 = vector.shape_cast %261 : vector<20xf32> to vector<20x1xf32>
    %263 = vector.broadcast %262 : vector<20x1xf32> to vector<20x20xf32>
    %264 = arith.subf %260, %263 : vector<20x20xf32>
    %265 = math.exp %264 : vector<20x20xf32>
    %cst_111 = arith.constant dense<0.000000e+00> : vector<20xf32>
    %266 = vector.multi_reduction <add>, %265, %cst_111 [1] : vector<20x20xf32> to vector<20xf32>
    %267 = vector.shape_cast %266 : vector<20xf32> to vector<20x1xf32>
    %268 = tpu.reciprocal %267 {approx = true} : vector<20x1xf32> -> vector<20x1xf32>
    %269 = vector.broadcast %268 : vector<20x1xf32> to vector<20x20xf32>
    %270 = arith.mulf %265, %269 : vector<20x20xf32>
    %cst_112 = arith.constant dense<0.000000e+00> : vector<20x8xf32>
    %271 = tpu.matmul %270, %258, %cst_112 {dimension_numbers = #tpu.dot_dimension_numbers<[1], [0], [0], [1], [0, 0, 1, 1], [], []>} : vector<20x20xf32>, vector<20x8xf32>, vector<20x8xf32> -> vector<20x8xf32>
    %272 = vector.extract_strided_slice %221 {offsets = [0, 24], sizes = [20, 8], strides = [1, 1]} : vector<20x32xf32> to vector<20x8xf32>
    %273 = vector.extract_strided_slice %222 {offsets = [0, 24], sizes = [20, 8], strides = [1, 1]} : vector<20x32xf32> to vector<20x8xf32>
    %274 = vector.extract_strided_slice %223 {offsets = [0, 24], sizes = [20, 8], strides = [1, 1]} : vector<20x32xf32> to vector<20x8xf32>
    %cst_113 = arith.constant dense<0.000000e+00> : vector<20x20xf32>
    %275 = tpu.matmul %272, %273, %cst_113 {dimension_numbers = #tpu.dot_dimension_numbers<[1], [1], [0], [0], [0, 0, 1, 0], [], []>} : vector<20x8xf32>, vector<20x8xf32>, vector<20x20xf32> -> vector<20x20xf32>
    %276 = arith.addf %275, %29 : vector<20x20xf32>
    %cst_114 = arith.constant dense<0xFF800000> : vector<20xf32>
    %277 = vector.multi_reduction <maximumf>, %276, %cst_114 [1] : vector<20x20xf32> to vector<20xf32>
    %278 = vector.shape_cast %277 : vector<20xf32> to vector<20x1xf32>
    %279 = vector.broadcast %278 : vector<20x1xf32> to vector<20x20xf32>
    %280 = arith.subf %276, %279 : vector<20x20xf32>
    %281 = math.exp %280 : vector<20x20xf32>
    %cst_115 = arith.constant dense<0.000000e+00> : vector<20xf32>
    %282 = vector.multi_reduction <add>, %281, %cst_115 [1] : vector<20x20xf32> to vector<20xf32>
    %283 = vector.shape_cast %282 : vector<20xf32> to vector<20x1xf32>
    %284 = tpu.reciprocal %283 {approx = true} : vector<20x1xf32> -> vector<20x1xf32>
    %285 = vector.broadcast %284 : vector<20x1xf32> to vector<20x20xf32>
    %286 = arith.mulf %281, %285 : vector<20x20xf32>
    %cst_116 = arith.constant dense<0.000000e+00> : vector<20x8xf32>
    %287 = tpu.matmul %286, %274, %cst_116 {dimension_numbers = #tpu.dot_dimension_numbers<[1], [0], [0], [1], [0, 0, 1, 1], [], []>} : vector<20x20xf32>, vector<20x8xf32>, vector<20x8xf32> -> vector<20x8xf32>
    %288 = tpu.concatenate %239, %255, %271, %287 in 1 : vector<20x8xf32>, vector<20x8xf32>, vector<20x8xf32>, vector<20x8xf32> -> vector<20x32xf32>
    %c1_117 = arith.constant 1 : index
    %c0_118 = arith.constant 0 : index
    %c0_119 = arith.constant 0 : index
    %289 = vector.load %arg11[%c1_117, %c0_118, %c0_119] : memref<2x32x32xf32, #tpu.memory_space<vmem>>, vector<1x32x32xf32>
    %290 = vector.shape_cast %289 : vector<1x32x32xf32> to vector<32x32xf32>
    %cst_120 = arith.constant dense<0.000000e+00> : vector<20x32xf32>
    %291 = tpu.matmul %288, %290, %cst_120 {dimension_numbers = #tpu.dot_dimension_numbers<[1], [0], [0], [1], [0, 0, 1, 1], [], []>} : vector<20x32xf32>, vector<32x32xf32>, vector<20x32xf32> -> vector<20x32xf32>
    %292 = arith.addf %187, %291 : vector<20x32xf32>
    %c1_121 = arith.constant 1 : index
    %c0_122 = arith.constant 0 : index
    %c0_123 = arith.constant 0 : index
    %293 = vector.load %arg12[%c1_121, %c0_122, %c0_123] : memref<2x1x32xf32, #tpu.memory_space<vmem>>, vector<1x1x32xf32>
    %294 = vector.shape_cast %293 : vector<1x1x32xf32> to vector<1x32xf32>
    %295 = vector.broadcast %294 : vector<1x32xf32> to vector<20x32xf32>
    %296 = arith.addf %292, %295 : vector<20x32xf32>
    %c1_124 = arith.constant 1 : index
    %c0_125 = arith.constant 0 : index
    %c0_126 = arith.constant 0 : index
    %297 = vector.load %arg13[%c1_124, %c0_125, %c0_126] : memref<2x1x32xf32, #tpu.memory_space<vmem>>, vector<1x1x32xf32>
    %298 = vector.shape_cast %297 : vector<1x1x32xf32> to vector<1x32xf32>
    %c1_127 = arith.constant 1 : index
    %c0_128 = arith.constant 0 : index
    %c0_129 = arith.constant 0 : index
    %299 = vector.load %arg14[%c1_127, %c0_128, %c0_129] : memref<2x1x32xf32, #tpu.memory_space<vmem>>, vector<1x1x32xf32>
    %300 = vector.shape_cast %299 : vector<1x1x32xf32> to vector<1x32xf32>
    %cst_130 = arith.constant dense<0.000000e+00> : vector<20xf32>
    %301 = vector.multi_reduction <add>, %296, %cst_130 [1] : vector<20x32xf32> to vector<20xf32>
    %302 = vector.shape_cast %301 : vector<20xf32> to vector<20x1xf32>
    %cst_131 = arith.constant 3.200000e+01 : f32
    %303 = vector.broadcast %cst_131 : f32 to vector<20x1xf32>
    %304 = arith.divf %302, %303 : vector<20x1xf32>
    %305 = vector.broadcast %304 : vector<20x1xf32> to vector<20x32xf32>
    %306 = arith.subf %296, %305 : vector<20x32xf32>
    %307 = arith.mulf %306, %306 : vector<20x32xf32>
    %cst_132 = arith.constant dense<0.000000e+00> : vector<20xf32>
    %308 = vector.multi_reduction <add>, %307, %cst_132 [1] : vector<20x32xf32> to vector<20xf32>
    %309 = vector.shape_cast %308 : vector<20xf32> to vector<20x1xf32>
    %cst_133 = arith.constant 3.200000e+01 : f32
    %310 = vector.broadcast %cst_133 : f32 to vector<20x1xf32>
    %311 = arith.divf %309, %310 : vector<20x1xf32>
    %312 = vector.broadcast %304 : vector<20x1xf32> to vector<20x32xf32>
    %313 = arith.subf %296, %312 : vector<20x32xf32>
    %cst_134 = arith.constant 9.99999974E-6 : f32
    %314 = vector.broadcast %cst_134 : f32 to vector<20x1xf32>
    %315 = arith.addf %311, %314 : vector<20x1xf32>
    %316 = math.rsqrt %315 : vector<20x1xf32>
    %317 = vector.broadcast %316 : vector<20x1xf32> to vector<20x32xf32>
    %318 = arith.mulf %313, %317 : vector<20x32xf32>
    %319 = vector.broadcast %298 : vector<1x32xf32> to vector<20x32xf32>
    %320 = arith.mulf %318, %319 : vector<20x32xf32>
    %321 = vector.broadcast %300 : vector<1x32xf32> to vector<20x32xf32>
    %322 = arith.addf %320, %321 : vector<20x32xf32>
    %c1_135 = arith.constant 1 : index
    %c0_136 = arith.constant 0 : index
    %c0_137 = arith.constant 0 : index
    %323 = vector.load %arg15[%c1_135, %c0_136, %c0_137] : memref<2x32x64xf32, #tpu.memory_space<vmem>>, vector<1x32x64xf32>
    %324 = vector.shape_cast %323 : vector<1x32x64xf32> to vector<32x64xf32>
    %cst_138 = arith.constant dense<0.000000e+00> : vector<20x64xf32>
    %325 = tpu.matmul %322, %324, %cst_138 {dimension_numbers = #tpu.dot_dimension_numbers<[1], [0], [0], [1], [0, 0, 1, 1], [], []>} : vector<20x32xf32>, vector<32x64xf32>, vector<20x64xf32> -> vector<20x64xf32>
    %c1_139 = arith.constant 1 : index
    %c0_140 = arith.constant 0 : index
    %c0_141 = arith.constant 0 : index
    %326 = vector.load %arg16[%c1_139, %c0_140, %c0_141] : memref<2x1x64xf32, #tpu.memory_space<vmem>>, vector<1x1x64xf32>
    %327 = vector.shape_cast %326 : vector<1x1x64xf32> to vector<1x64xf32>
    %328 = vector.broadcast %327 : vector<1x64xf32> to vector<20x64xf32>
    %329 = arith.addf %325, %328 : vector<20x64xf32>
    %cst_142 = arith.constant 1.702000e+00 : f32
    %330 = vector.broadcast %cst_142 : f32 to vector<20x64xf32>
    %331 = arith.mulf %330, %329 : vector<20x64xf32>
    %332 = arith.negf %331 : vector<20x64xf32>
    %333 = math.exp %332 : vector<20x64xf32>
    %cst_143 = arith.constant 1.000000e+00 : f32
    %334 = vector.broadcast %cst_143 : f32 to vector<20x64xf32>
    %335 = arith.addf %334, %333 : vector<20x64xf32>
    %336 = arith.divf %334, %335 : vector<20x64xf32>
    %337 = arith.mulf %329, %336 : vector<20x64xf32>
    %c1_144 = arith.constant 1 : index
    %c0_145 = arith.constant 0 : index
    %c0_146 = arith.constant 0 : index
    %338 = vector.load %arg17[%c1_144, %c0_145, %c0_146] : memref<2x64x32xf32, #tpu.memory_space<vmem>>, vector<1x64x32xf32>
    %339 = vector.shape_cast %338 : vector<1x64x32xf32> to vector<64x32xf32>
    %cst_147 = arith.constant dense<0.000000e+00> : vector<20x32xf32>
    %340 = tpu.matmul %337, %339, %cst_147 {dimension_numbers = #tpu.dot_dimension_numbers<[1], [0], [0], [1], [0, 0, 1, 1], [], []>} : vector<20x64xf32>, vector<64x32xf32>, vector<20x32xf32> -> vector<20x32xf32>
    %341 = arith.addf %296, %340 : vector<20x32xf32>
    %c1_148 = arith.constant 1 : index
    %c0_149 = arith.constant 0 : index
    %c0_150 = arith.constant 0 : index
    %342 = vector.load %arg18[%c1_148, %c0_149, %c0_150] : memref<2x1x32xf32, #tpu.memory_space<vmem>>, vector<1x1x32xf32>
    %343 = vector.shape_cast %342 : vector<1x1x32xf32> to vector<1x32xf32>
    %344 = vector.broadcast %343 : vector<1x32xf32> to vector<20x32xf32>
    %345 = arith.addf %341, %344 : vector<20x32xf32>
    %c0_151 = arith.constant 0 : index
    %c0_152 = arith.constant 0 : index
    %346 = vector.load %arg6[%c0_151, %c0_152] : memref<4x20xf32, #tpu.memory_space<vmem>>, vector<4x20xf32>
    %cst_153 = arith.constant dense<0.000000e+00> : vector<4x32xf32>
    %347 = tpu.matmul %346, %345, %cst_153 {dimension_numbers = #tpu.dot_dimension_numbers<[1], [0], [0], [1], [0, 0, 1, 1], [], []>} : vector<4x20xf32>, vector<20x32xf32>, vector<4x32xf32> -> vector<4x32xf32>
    %c0_154 = arith.constant 0 : index
    %c0_155 = arith.constant 0 : index
    %348 = vector.load %arg20[%c0_154, %c0_155] : memref<1x32xf32, #tpu.memory_space<vmem>>, vector<1x32xf32>
    %c0_156 = arith.constant 0 : index
    %c0_157 = arith.constant 0 : index
    %349 = vector.load %arg21[%c0_156, %c0_157] : memref<1x32xf32, #tpu.memory_space<vmem>>, vector<1x32xf32>
    %cst_158 = arith.constant dense<0.000000e+00> : vector<4xf32>
    %350 = vector.multi_reduction <add>, %347, %cst_158 [1] : vector<4x32xf32> to vector<4xf32>
    %351 = vector.shape_cast %350 : vector<4xf32> to vector<4x1xf32>
    %cst_159 = arith.constant 3.200000e+01 : f32
    %352 = vector.broadcast %cst_159 : f32 to vector<4x1xf32>
    %353 = arith.divf %351, %352 : vector<4x1xf32>
    %354 = vector.broadcast %353 : vector<4x1xf32> to vector<4x32xf32>
    %355 = arith.subf %347, %354 : vector<4x32xf32>
    %356 = arith.mulf %355, %355 : vector<4x32xf32>
    %cst_160 = arith.constant dense<0.000000e+00> : vector<4xf32>
    %357 = vector.multi_reduction <add>, %356, %cst_160 [1] : vector<4x32xf32> to vector<4xf32>
    %358 = vector.shape_cast %357 : vector<4xf32> to vector<4x1xf32>
    %cst_161 = arith.constant 3.200000e+01 : f32
    %359 = vector.broadcast %cst_161 : f32 to vector<4x1xf32>
    %360 = arith.divf %358, %359 : vector<4x1xf32>
    %361 = vector.broadcast %353 : vector<4x1xf32> to vector<4x32xf32>
    %362 = arith.subf %347, %361 : vector<4x32xf32>
    %cst_162 = arith.constant 9.99999974E-6 : f32
    %363 = vector.broadcast %cst_162 : f32 to vector<4x1xf32>
    %364 = arith.addf %360, %363 : vector<4x1xf32>
    %365 = math.rsqrt %364 : vector<4x1xf32>
    %366 = vector.broadcast %365 : vector<4x1xf32> to vector<4x32xf32>
    %367 = arith.mulf %362, %366 : vector<4x32xf32>
    %368 = vector.broadcast %348 : vector<1x32xf32> to vector<4x32xf32>
    %369 = arith.mulf %367, %368 : vector<4x32xf32>
    %370 = vector.broadcast %349 : vector<1x32xf32> to vector<4x32xf32>
    %371 = arith.addf %369, %370 : vector<4x32xf32>
    %c0_163 = arith.constant 0 : index
    %c0_164 = arith.constant 0 : index
    %372 = vector.load %arg22[%c0_163, %c0_164] : memref<32x16xf32, #tpu.memory_space<vmem>>, vector<32x16xf32>
    %cst_165 = arith.constant dense<0.000000e+00> : vector<4x16xf32>
    %373 = tpu.matmul %371, %372, %cst_165 {dimension_numbers = #tpu.dot_dimension_numbers<[1], [0], [0], [1], [0, 0, 1, 1], [], []>} : vector<4x32xf32>, vector<32x16xf32>, vector<4x16xf32> -> vector<4x16xf32>
    %c0_166 = arith.constant 0 : index
    %c0_167 = arith.constant 0 : index
    %374 = vector.load %arg23[%c0_166, %c0_167] : memref<4x16xf32, #tpu.memory_space<vmem>>, vector<4x16xf32>
    tpu.vector_store %arg23[%c0_166, %c0_167], %373 {strides = array<i32>} : memref<4x16xf32, #tpu.memory_space<vmem>>, vector<4x16xf32>,
    return
  }
  func.func @transform_0(%arg0: i32) -> (i32, i32) {
    %c0_i32 = arith.constant 0 : i32
    %c0_i32_0 = arith.constant 0 : i32
    %c0_i32_1 = arith.constant 0 : i32
    return %c0_i32, %c0_i32_0 : i32, i32
  }
  func.func @transform_1(%arg0: i32) -> (i32, i32) {
    %c0_i32 = arith.constant 0 : i32
    %c0_i32_0 = arith.constant 0 : i32
    %c0_i32_1 = arith.constant 0 : i32
    return %c0_i32, %c0_i32_0 : i32, i32
  }
  func.func @transform_2(%arg0: i32) -> (i32, i32) {
    %c0_i32 = arith.constant 0 : i32
    %c0_i32_0 = arith.constant 0 : i32
    %c0_i32_1 = arith.constant 0 : i32
    return %c0_i32, %c0_i32_0 : i32, i32
  }
  func.func @transform_3(%arg0: i32) -> (i32, i32) {
    %c0_i32 = arith.constant 0 : i32
    %c0_i32_0 = arith.constant 0 : i32
    %c0_i32_1 = arith.constant 0 : i32
    return %c0_i32, %c0_i32_0 : i32, i32
  }
  func.func @transform_4(%arg0: i32) -> (i32, i32) {
    %c0_i32 = arith.constant 0 : i32
    %c0_i32_0 = arith.constant 0 : i32
    %c0_i32_1 = arith.constant 0 : i32
    return %c0_i32, %c0_i32_0 : i32, i32
  }
  func.func @transform_5(%arg0: i32) -> (i32, i32) {
    %c0_i32 = arith.constant 0 : i32
    %c0_i32_0 = arith.constant 0 : i32
    %c0_i32_1 = arith.constant 0 : i32
    return %c0_i32, %c0_i32_0 : i32, i32
  }
  func.func @transform_6(%arg0: i32) -> (i32, i32, i32) {
    %c0_i32 = arith.constant 0 : i32
    %c0_i32_0 = arith.constant 0 : i32
    %c0_i32_1 = arith.constant 0 : i32
    %c0_i32_2 = arith.constant 0 : i32
    return %c0_i32, %c0_i32_0, %c0_i32_1 : i32, i32, i32
  }
  func.func @transform_7(%arg0: i32) -> (i32, i32, i32) {
    %c0_i32 = arith.constant 0 : i32
    %c0_i32_0 = arith.constant 0 : i32
    %c0_i32_1 = arith.constant 0 : i32
    %c0_i32_2 = arith.constant 0 : i32
    return %c0_i32, %c0_i32_0, %c0_i32_1 : i32, i32, i32
  }
  func.func @transform_8(%arg0: i32) -> (i32, i32, i32) {
    %c0_i32 = arith.constant 0 : i32
    %c0_i32_0 = arith.constant 0 : i32
    %c0_i32_1 = arith.constant 0 : i32
    %c0_i32_2 = arith.constant 0 : i32
    return %c0_i32, %c0_i32_0, %c0_i32_1 : i32, i32, i32
  }
  func.func @transform_9(%arg0: i32) -> (i32, i32, i32) {
    %c0_i32 = arith.constant 0 : i32
    %c0_i32_0 = arith.constant 0 : i32
    %c0_i32_1 = arith.constant 0 : i32
    %c0_i32_2 = arith.constant 0 : i32
    return %c0_i32, %c0_i32_0, %c0_i32_1 : i32, i32, i32
  }
  func.func @transform_10(%arg0: i32) -> (i32, i32, i32) {
    %c0_i32 = arith.constant 0 : i32
    %c0_i32_0 = arith.constant 0 : i32
    %c0_i32_1 = arith.constant 0 : i32
    %c0_i32_2 = arith.constant 0 : i32
    return %c0_i32, %c0_i32_0, %c0_i32_1 : i32, i32, i32
  }
  func.func @transform_11(%arg0: i32) -> (i32, i32, i32) {
    %c0_i32 = arith.constant 0 : i32
    %c0_i32_0 = arith.constant 0 : i32
    %c0_i32_1 = arith.constant 0 : i32
    %c0_i32_2 = arith.constant 0 : i32
    return %c0_i32, %c0_i32_0, %c0_i32_1 : i32, i32, i32
  }
  func.func @transform_12(%arg0: i32) -> (i32, i32, i32) {
    %c0_i32 = arith.constant 0 : i32
    %c0_i32_0 = arith.constant 0 : i32
    %c0_i32_1 = arith.constant 0 : i32
    %c0_i32_2 = arith.constant 0 : i32
    return %c0_i32, %c0_i32_0, %c0_i32_1 : i32, i32, i32
  }
  func.func @transform_13(%arg0: i32) -> (i32, i32, i32) {
    %c0_i32 = arith.constant 0 : i32
    %c0_i32_0 = arith.constant 0 : i32
    %c0_i32_1 = arith.constant 0 : i32
    %c0_i32_2 = arith.constant 0 : i32
    return %c0_i32, %c0_i32_0, %c0_i32_1 : i32, i32, i32
  }
  func.func @transform_14(%arg0: i32) -> (i32, i32, i32) {
    %c0_i32 = arith.constant 0 : i32
    %c0_i32_0 = arith.constant 0 : i32
    %c0_i32_1 = arith.constant 0 : i32
    %c0_i32_2 = arith.constant 0 : i32
    return %c0_i32, %c0_i32_0, %c0_i32_1 : i32, i32, i32
  }
  func.func @transform_15(%arg0: i32) -> (i32, i32, i32) {
    %c0_i32 = arith.constant 0 : i32
    %c0_i32_0 = arith.constant 0 : i32
    %c0_i32_1 = arith.constant 0 : i32
    %c0_i32_2 = arith.constant 0 : i32
    return %c0_i32, %c0_i32_0, %c0_i32_1 : i32, i32, i32
  }
  func.func @transform_16(%arg0: i32) -> (i32, i32, i32) {
    %c0_i32 = arith.constant 0 : i32
    %c0_i32_0 = arith.constant 0 : i32
    %c0_i32_1 = arith.constant 0 : i32
    %c0_i32_2 = arith.constant 0 : i32
    return %c0_i32, %c0_i32_0, %c0_i32_1 : i32, i32, i32
  }
  func.func @transform_17(%arg0: i32) -> (i32, i32, i32) {
    %c0_i32 = arith.constant 0 : i32
    %c0_i32_0 = arith.constant 0 : i32
    %c0_i32_1 = arith.constant 0 : i32
    %c0_i32_2 = arith.constant 0 : i32
    return %c0_i32, %c0_i32_0, %c0_i32_1 : i32, i32, i32
  }
  func.func @transform_18(%arg0: i32) -> (i32, i32) {
    %c0_i32 = arith.constant 0 : i32
    %c0_i32_0 = arith.constant 0 : i32
    %c0_i32_1 = arith.constant 0 : i32
    return %c0_i32, %c0_i32_0 : i32, i32
  }
  func.func @transform_19(%arg0: i32) -> (i32, i32) {
    %c0_i32 = arith.constant 0 : i32
    %c0_i32_0 = arith.constant 0 : i32
    %c0_i32_1 = arith.constant 0 : i32
    return %c0_i32, %c0_i32_0 : i32, i32
  }
  func.func @transform_20(%arg0: i32) -> (i32, i32) {
    %c0_i32 = arith.constant 0 : i32
    %c0_i32_0 = arith.constant 0 : i32
    %c0_i32_1 = arith.constant 0 : i32
    return %c0_i32, %c0_i32_0 : i32, i32
  }
  func.func @transform_21(%arg0: i32) -> (i32, i32) {
    %c0_i32 = arith.constant 0 : i32
    %c0_i32_0 = arith.constant 0 : i32
    %c0_i32_1 = arith.constant 0 : i32
    return %c0_i32, %c0_i32_0 : i32, i32
  }
  func.func @transform_22(%arg0: i32) -> (i32, i32) {
    %c0_i32 = arith.constant 0 : i32
    %c0_i32_0 = arith.constant 0 : i32
    %c0_i32_1 = arith.constant 0 : i32
    return %c0_i32, %c0_i32_0 : i32, i32
  }
}

</mosaic_0001>

<llo_original>
// kernel: tile.9
$region0: #{tile.9}
  %s0 = inlined_call_operand.vmem [shape: f32[4,5,32], index: 0, kind: input, shape index: {}]
  %s1 = inlined_call_operand.vmem [shape: f32[20,32], index: 1, kind: output, shape index: {}]
  %v2 = vld [vmem:[%s0] sm:$0x1f]
  %vm3 = vcmask 261120
  %4 = vst.msk [vmem:[%s1] sm:$0x1f] %vm3, %v2
  %s5 = scalar_lea.vmem %s0, 8
  %v6 = vld [vmem:[%s5] sm:$0x1f]
  %vm7 = vcmask 261120
  %s8 = scalar_lea.vmem %s1, 5
  %9 = vst.msk [vmem:[%s8] sm:$0x1f] %vm7, %v6
  %s10 = scalar_lea.vmem %s0, 16
  %v11 = vld [vmem:[%s10] sm:$0x1f]
  %vm12 = vcmask 261120
  %s13 = scalar_lea.vmem %s1, 10
  %14 = vst.msk [vmem:[%s13] sm:$0x1f] %vm12, %v11
  %s15 = scalar_lea.vmem %s0, 24
  %v16 = vld [vmem:[%s15] sm:$0x1f]
  %vm17 = vcmask 261120
  %s18 = scalar_lea.vmem %s1, 15
  %19 = vst.msk [vmem:[%s18] sm:$0x1f] %vm17, %v16

// kernel: feature_extractor_forward.1
$region0: #{feature_extractor_forward.1}
  #allocation0 [shape = 'u32[]', space=smem, size = 0x4, offset = 0x4, fixed_abs, tag = 'smem constant byte address 0x4 - core index']
  #allocation1 [shape = 'u32[144,128]{1,0:T(1,128)}', space=vmem, size = 0x12000, scoped, tag = 'internal scratch']
  %s0 = inlined_call_operand.vmem [shape: f32[20,192], index: 0, kind: input, shape index: {}]
  %s1 = inlined_call_operand.vmem [shape: f32[20,32], index: 1, kind: input, shape index: {}]
  %s2 = inlined_call_operand.vmem [shape: f32[1,32], index: 2, kind: input, shape index: {}]
  %s3 = inlined_call_operand.vmem [shape: f32[1,32], index: 3, kind: input, shape index: {}]
  %s4 = inlined_call_operand.vmem [shape: f32[20,20], index: 4, kind: input, shape index: {}]
  %s5 = inlined_call_operand.vmem [shape: f32[4,20], index: 5, kind: input, shape index: {}]
  %s6 = inlined_call_operand.vmem [shape: f32[2,1,32], index: 6, kind: input, shape index: {}]
  %s7 = inlined_call_operand.vmem [shape: f32[2,1,32], index: 7, kind: input, shape index: {}]
  %s8 = inlined_call_operand.vmem [shape: f32[2,32,96], index: 8, kind: input, shape index: {}]
  %s9 = inlined_call_operand.vmem [shape: f32[2,1,96], index: 9, kind: input, shape index: {}]
  %s10 = inlined_call_operand.vmem [shape: f32[2,32,32], index: 10, kind: input, shape index: {}]
  %s11 = inlined_call_operand.vmem [shape: f32[2,1,32], index: 11, kind: input, shape index: {}]
  %s12 = inlined_call_operand.vmem [shape: f32[2,1,32], index: 12, kind: input, shape index: {}]
  %s13 = inlined_call_operand.vmem [shape: f32[2,1,32], index: 13, kind: input, shape index: {}]
  %s14 = inlined_call_operand.vmem [shape: f32[2,32,64], index: 14, kind: input, shape index: {}]
  %s15 = inlined_call_operand.vmem [shape: f32[2,1,64], index: 15, kind: input, shape index: {}]
  %s16 = inlined_call_operand.vmem [shape: f32[2,64,32], index: 16, kind: input, shape index: {}]
  %s17 = inlined_call_operand.vmem [shape: f32[2,1,32], index: 17, kind: input, shape index: {}]
  %s18 = inlined_call_operand.vmem [shape: f32[192,32], index: 18, kind: input, shape index: {}]
  %s19 = inlined_call_operand.vmem [shape: f32[1,32], index: 19, kind: input, shape index: {}]
  %s20 = inlined_call_operand.vmem [shape: f32[1,32], index: 20, kind: input, shape index: {}]
  %s21 = inlined_call_operand.vmem [shape: f32[32,16], index: 21, kind: input, shape index: {}]
  %s22 = inlined_call_operand.hbm [shape: f32[4,16], index: 22, kind: output, shape index: {}]
  %s23 = sld [smem:[#allocation0]]
  $region98: #{feature_extractor_forward.1} parent=0
    _
  %s25 = ssub.s32 1, %s23
  %s26 = scalar_select 0, %s25, %s23
  $region1: #{feature_extractor_forward.1} parent=0
    #allocation2 [shape = 'u8[2048]{0}', space=vmem, size = 0x800, scoped, tag = 'output window, operand 0, single buffered']
    #allocation3 [shape = 's32[1]{0}', space=sflag, size = 0x4, scoped, tag = 'scoped memory for feature_extractor_forward.1']
    %27 = vsyncpa [#allocation3], 0
    // Predicated region
    $region2: #{feature_extractor_forward.1} parent=1 // pred_check
      _
    $region3: #{feature_extractor_forward.1} parent=1 // pred_check_branch
      %29 = sbr.rel (0) target = $region5
    $region4: #{feature_extractor_forward.1} parent=1 // pred_region
      _
    $region5: #{feature_extractor_forward.1} parent=1 // pred_fallthru
      _
    // Predicated region
    $region6: #{feature_extractor_forward.1} parent=1 // pred_check
      _
    $region7: #{feature_extractor_forward.1} parent=1 // pred_check_branch
      %31 = sbr.rel (0) target = $region9
    $region8: #{feature_extractor_forward.1} parent=1 // pred_region
      _
    $region9: #{feature_extractor_forward.1} parent=1 // pred_fallthru
      _
    // Predicated region
    $region10: #{feature_extractor_forward.1} parent=1 // pred_check
      _
    $region11: #{feature_extractor_forward.1} parent=1 // pred_check_branch
      %33 = sbr.rel (0) target = $region13
    $region12: #{feature_extractor_forward.1} parent=1 // pred_region
      _
    $region13: #{feature_extractor_forward.1} parent=1 // pred_fallthru
      _
    // Predicated region
    $region14: #{feature_extractor_forward.1} parent=1 // pred_check
      _
    $region15: #{feature_extractor_forward.1} parent=1 // pred_check_branch
      %35 = sbr.rel (0) target = $region17
    $region16: #{feature_extractor_forward.1} parent=1 // pred_region
      _
    $region17: #{feature_extractor_forward.1} parent=1 // pred_fallthru
      _
    // Predicated region
    $region18: #{feature_extractor_forward.1} parent=1 // pred_check
      _
    $region19: #{feature_extractor_forward.1} parent=1 // pred_check_branch
      %37 = sbr.rel (0) target = $region21
    $region20: #{feature_extractor_forward.1} parent=1 // pred_region
      _
    $region21: #{feature_extractor_forward.1} parent=1 // pred_fallthru
      _
    // Predicated region
    $region22: #{feature_extractor_forward.1} parent=1 // pred_check
      _
    $region23: #{feature_extractor_forward.1} parent=1 // pred_check_branch
      %39 = sbr.rel (0) target = $region25
    $region24: #{feature_extractor_forward.1} parent=1 // pred_region
      _
    $region25: #{feature_extractor_forward.1} parent=1 // pred_fallthru
      _
    // Predicated region
    $region26: #{feature_extractor_forward.1} parent=1 // pred_check
      _
    $region27: #{feature_extractor_forward.1} parent=1 // pred_check_branch
      %41 = sbr.rel (0) target = $region29
    $region28: #{feature_extractor_forward.1} parent=1 // pred_region
      _
    $region29: #{feature_extractor_forward.1} parent=1 // pred_fallthru
      _
    // Predicated region
    $region30: #{feature_extractor_forward.1} parent=1 // pred_check
      _
    $region31: #{feature_extractor_forward.1} parent=1 // pred_check_branch
      %43 = sbr.rel (0) target = $region33
    $region32: #{feature_extractor_forward.1} parent=1 // pred_region
      _
    $region33: #{feature_extractor_forward.1} parent=1 // pred_fallthru
      _
    // Predicated region
    $region34: #{feature_extractor_forward.1} parent=1 // pred_check
      _
    $region35: #{feature_extractor_forward.1} parent=1 // pred_check_branch
      %45 = sbr.rel (0) target = $region37
    $region36: #{feature_extractor_forward.1} parent=1 // pred_region
      _
    $region37: #{feature_extractor_forward.1} parent=1 // pred_fallthru
      _
    // Predicated region
    $region38: #{feature_extractor_forward.1} parent=1 // pred_check
      _
    $region39: #{feature_extractor_forward.1} parent=1 // pred_check_branch
      %47 = sbr.rel (0) target = $region41
    $region40: #{feature_extractor_forward.1} parent=1 // pred_region
      _
    $region41: #{feature_extractor_forward.1} parent=1 // pred_fallthru
      _
    // Predicated region
    $region42: #{feature_extractor_forward.1} parent=1 // pred_check
      _
    $region43: #{feature_extractor_forward.1} parent=1 // pred_check_branch
      %49 = sbr.rel (0) target = $region45
    $region44: #{feature_extractor_forward.1} parent=1 // pred_region
      _
    $region45: #{feature_extractor_forward.1} parent=1 // pred_fallthru
      _
    // Predicated region
    $region46: #{feature_extractor_forward.1} parent=1 // pred_check
      _
    $region47: #{feature_extractor_forward.1} parent=1 // pred_check_branch
      %51 = sbr.rel (0) target = $region49
    $region48: #{feature_extractor_forward.1} parent=1 // pred_region
      _
    $region49: #{feature_extractor_forward.1} parent=1 // pred_fallthru
      _
    // Predicated region
    $region50: #{feature_extractor_forward.1} parent=1 // pred_check
      _
    $region51: #{feature_extractor_forward.1} parent=1 // pred_check_branch
      %53 = sbr.rel (0) target = $region53
    $region52: #{feature_extractor_forward.1} parent=1 // pred_region
      _
    $region53: #{feature_extractor_forward.1} parent=1 // pred_fallthru
      _
    // Predicated region
    $region54: #{feature_extractor_forward.1} parent=1 // pred_check
      _
    $region55: #{feature_extractor_forward.1} parent=1 // pred_check_branch
      %55 = sbr.rel (0) target = $region57
    $region56: #{feature_extractor_forward.1} parent=1 // pred_region
      _
    $region57: #{feature_extractor_forward.1} parent=1 // pred_fallthru
      _
    // Predicated region
    $region58: #{feature_extractor_forward.1} parent=1 // pred_check
      _
    $region59: #{feature_extractor_forward.1} parent=1 // pred_check_branch
      %57 = sbr.rel (0) target = $region61
    $region60: #{feature_extractor_forward.1} parent=1 // pred_region
      _
    $region61: #{feature_extractor_forward.1} parent=1 // pred_fallthru
      _
    // Predicated region
    $region62: #{feature_extractor_forward.1} parent=1 // pred_check
      _
    $region63: #{feature_extractor_forward.1} parent=1 // pred_check_branch
      %59 = sbr.rel (0) target = $region65
    $region64: #{feature_extractor_forward.1} parent=1 // pred_region
      _
    $region65: #{feature_extractor_forward.1} parent=1 // pred_fallthru
      _
    // Predicated region
    $region66: #{feature_extractor_forward.1} parent=1 // pred_check
      _
    $region67: #{feature_extractor_forward.1} parent=1 // pred_check_branch
      %61 = sbr.rel (0) target = $region69
    $region68: #{feature_extractor_forward.1} parent=1 // pred_region
      _
    $region69: #{feature_extractor_forward.1} parent=1 // pred_fallthru
      _
    // Predicated region
    $region70: #{feature_extractor_forward.1} parent=1 // pred_check
      _
    $region71: #{feature_extractor_forward.1} parent=1 // pred_check_branch
      %63 = sbr.rel (0) target = $region73
    $region72: #{feature_extractor_forward.1} parent=1 // pred_region
      _
    $region73: #{feature_extractor_forward.1} parent=1 // pred_fallthru
      _
    // Predicated region
    $region74: #{feature_extractor_forward.1} parent=1 // pred_check
      _
    $region75: #{feature_extractor_forward.1} parent=1 // pred_check_branch
      %65 = sbr.rel (0) target = $region77
    $region76: #{feature_extractor_forward.1} parent=1 // pred_region
      _
    $region77: #{feature_extractor_forward.1} parent=1 // pred_fallthru
      _
    // Predicated region
    $region78: #{feature_extractor_forward.1} parent=1 // pred_check
      _
    $region79: #{feature_extractor_forward.1} parent=1 // pred_check_branch
      %67 = sbr.rel (0) target = $region81
    $region80: #{feature_extractor_forward.1} parent=1 // pred_region
      _
    $region81: #{feature_extractor_forward.1} parent=1 // pred_fallthru
      _
    // Predicated region
    $region82: #{feature_extractor_forward.1} parent=1 // pred_check
      _
    $region83: #{feature_extractor_forward.1} parent=1 // pred_check_branch
      %69 = sbr.rel (0) target = $region85
    $region84: #{feature_extractor_forward.1} parent=1 // pred_region
      _
    $region85: #{feature_extractor_forward.1} parent=1 // pred_fallthru
      _
    // Predicated region
    $region86: #{feature_extractor_forward.1} parent=1 // pred_check
      _
    $region87: #{feature_extractor_forward.1} parent=1 // pred_check_branch
      %71 = sbr.rel (0) target = $region89
    $region88: #{feature_extractor_forward.1} parent=1 // pred_region
      _
    $region89: #{feature_extractor_forward.1} parent=1 // pred_fallthru
      _
    %v72 = vld [vmem:[%s0] sm:$0xff]
    %v73 = vld [vmem:[%s0 + $0x8] sm:$0xff]
    %v74 = vld [vmem:[%s0 + $0x10] sm:$0xff]
    %v75 = vld [vmem:[%s0 + $0x18] sm:$0xff]
    %v76 = vld [vmem:[%s0 + $0x20] sm:$0xf]
    %v77 = vld [vmem:[%s0 + $0x28] sm:$0xf]
    %v78 = vld [vmem:[%s18] sm:$0xff]
    %v79 = vld [vmem:[%s18 + $0x8] sm:$0xff]
    %v80 = vld [vmem:[%s18 + $0x10] sm:$0xff]
    %v81 = vld [vmem:[%s18 + $0x18] sm:$0xff]
    %v82 = vld [vmem:[%s18 + $0x20] sm:$0xff]
    %v83 = vld [vmem:[%s18 + $0x28] sm:$0xff]
    %v84 = vld [vmem:[%s18 + $0x30] sm:$0xff]
    %v85 = vld [vmem:[%s18 + $0x38] sm:$0xff]
    %v86 = vld [vmem:[%s18 + $0x40] sm:$0xff]
    %v87 = vld [vmem:[%s18 + $0x48] sm:$0xff]
    %v88 = vld [vmem:[%s18 + $0x50] sm:$0xff]
    %v89 = vld [vmem:[%s18 + $0x58] sm:$0xff]
    %v90 = vld [vmem:[%s18 + $0x60] sm:$0xff]
    %v91 = vld [vmem:[%s18 + $0x68] sm:$0xff]
    %v92 = vld [vmem:[%s18 + $0x70] sm:$0xff]
    %v93 = vld [vmem:[%s18 + $0x78] sm:$0xff]
    %v94 = vld [vmem:[%s18 + $0x80] sm:$0xff]
    %v95 = vld [vmem:[%s18 + $0x88] sm:$0xff]
    %v96 = vld [vmem:[%s18 + $0x90] sm:$0xff]
    %v97 = vld [vmem:[%s18 + $0x98] sm:$0xff]
    %v98 = vld [vmem:[%s18 + $0xa0] sm:$0xff]
    %v99 = vld [vmem:[%s18 + $0xa8] sm:$0xff]
    %v100 = vld [vmem:[%s18 + $0xb0] sm:$0xff]
    %v101 = vld [vmem:[%s18 + $0xb8] sm:$0xff]
    %v102 = vld [vmem:[%s1] sm:$0xff]
    %v103 = vld [vmem:[%s1 + $0x8] sm:$0xff]
    %v104 = vld [vmem:[%s1 + $0x10] sm:$0xf]
    %vm105 = vcmask 523264
    %v107 = vsel %vm105, %v73, 0
    %v110 = vsel %vm105, %v75, 0
    %v113 = vsel %vm105, %v77, 0
    %115 = vmatprep.subr.mxu0 0.0
    %116 = vmatpush1.msra.mxu0 %v78
    %117 = vmatprep.subr.mxu0 0.0
    %118 = vmatpush1.msra.mxu0 %v79
    %119 = vmatprep.subr.mxu0 0.0
    %120 = vmatpush1.msra.mxu0 %v80
    %121 = vmatprep.subr.mxu0 0.0
    %122 = vmatpush1.msra.mxu0 %v81
    %123 = vmatprep.subr.mxu0 0.0
    %124 = vmatpush1.msra.mxu0 %v82
    %125 = vmatprep.subr.mxu0 0.0
    %126 = vmatpush1.msra.mxu0 %v83
    %127 = vmatprep.subr.mxu0 0.0
    %128 = vmatpush1.msra.mxu0 %v84
    %129 = vmatprep.subr.mxu0 0.0
    %130 = vmatpush1.msra.mxu0 %v85
    %131 = vmatprep.subr.mxu0 0.0
    %132 = vmatpush1.msra.mxu0 %v86
    %133 = vmatprep.subr.mxu0 0.0
    %134 = vmatpush1.msra.mxu0 %v87
    %135 = vmatprep.subr.mxu0 0.0
    %136 = vmatpush1.msra.mxu0 %v88
    %137 = vmatprep.subr.mxu0 0.0
    %138 = vmatpush1.msra.mxu0 %v89
    %139 = vmatprep.subr.mxu0 0.0
    %140 = vmatpush1.msra.mxu0 %v90
    %141 = vmatprep.subr.mxu0 0.0
    %142 = vmatpush1.msra.mxu0 %v91
    %143 = vmatprep.subr.mxu0 0.0
    %144 = vmatpush1.msra.mxu0 %v92
    %145 = vmatprep.subr.mxu0 0.0
    %146 = vmatpush1.msra.mxu0 %v93
    %147 = vmatprep.subr.mxu0 0.0
    %148 = vmatpush1.msra.mxu0 %v94
    %149 = vmatprep.subr.mxu0 0.0
    %150 = vmatpush1.msra.mxu0 %v95
    %151 = vmatprep.subr.mxu0 0.0
    %152 = vmatpush1.msra.mxu0 %v96
    %153 = vmatprep.subr.mxu0 0.0
    %154 = vmatpush1.msra.mxu0 %v97
    %155 = vmatprep.subr.mxu0 0.0
    %156 = vmatpush1.msra.mxu0 %v98
    %157 = vmatprep.subr.mxu0 0.0
    %158 = vmatpush1.msra.mxu0 %v99
    %159 = vmatprep.subr.mxu0 0.0
    %160 = vmatpush1.msra.mxu0 %v100
    %161 = vmatprep.subr.mxu0 0.0
    %162 = vmatpush1.msra.mxu0 %v101
    %163 = vmatprep.subr.mxu0 0.0
    %164 = vmatpush1.msra.mxu0 0.0
    %165 = vmatprep.subr.mxu0 0.0
    %166 = vmatpush1.msra.mxu0 0.0
    %167 = vmatprep.subr.mxu0 0.0
    %168 = vmatpush1.msra.mxu0 0.0
    %169 = vmatprep.subr.mxu0 0.0
    %170 = vmatpush1.msra.mxu0 0.0
    %171 = vmatprep.subr.mxu0 0.0
    %172 = vmatpush1.msra.mxu0 0.0
    %173 = vmatprep.subr.mxu0 0.0
    %174 = vmatpush1.msra.mxu0 0.0
    %175 = vmatprep.subr.mxu0 0.0
    %176 = vmatpush1.msra.mxu0 0.0
    %177 = vmatprep.subr.mxu0 0.0
    %178 = vmatpush1.msra.mxu0 0.0
    %179 = vmatprep.mubr.f32.mxu0 %v107
    %180 = vmatmul.mubr.f32.gmra.mrb[0].mxu0 %v72
    %v181 = vpop.f32.mrb[0].mxu0
    %v182 = vadd.f32 %v102, %v181
    %v183 = vpop.f32.mrb[0].mxu0
    %184 = vmatprep.mubr.f32.mxu0 %v110
    %185 = vmatmul.mubr.f32.gmra.mrb[0].mxu0 %v74
    %v186 = vpop.f32.mrb[0].mxu0
    %v187 = vadd.f32 %v103, %v186
    %v188 = vpop.f32.mrb[0].mxu0
    %189 = vmatprep.mubr.f32.mxu0 %v113
    %190 = vmatmul.mubr.f32.gmra.mrb[0].mxu0 %v76
    %v191 = vpop.f32.mrb[0].mxu0
    %v192 = vadd.f32 %v104, %v191
    %v193 = vpop.f32.mrb[0].mxu0
    %194 = vdwg.mxu0
    %v195 = vld [vmem:[%s2] sm:$0x1]
    %v196 = vld [vmem:[%s3] sm:$0x1]
    %vm197 = vcmask 261120
    %v198 = vsel %vm197, %v182, 0.0
    %199 = vadd.xlane.f32.xlu0 %v198
    %v200 = vpop.xlane.xlu0 %199
    %v201 = vsel %vm197, %v187, 0.0
    %202 = vadd.xlane.f32.xlu0 %v201
    %v203 = vpop.xlane.xlu0 %202
    %vm204 = vcmask 257024
    %v205 = vsel %vm204, %v192, 0.0
    %206 = vadd.xlane.f32.xlu0 %v205
    %v207 = vpop.xlane.xlu0 %206
    %v208 = vrcp.pop 32.0
    %v209 = vmul.f32 %v200, %v208
    %v210 = vmul.f32 %v203, %v208
    %v211 = vmul.f32 %v207, %v208
    %v212 = vsub.f32 %v182, %v209
    %v213 = vsub.f32 %v187, %v210
    %v214 = vsub.f32 %v192, %v211
    %v215 = vmul.f32 %v212, %v212
    %v216 = vmul.f32 %v213, %v213
    %v217 = vmul.f32 %v214, %v214
    %v218 = vsel %vm197, %v215, 0.0
    %219 = vadd.xlane.f32.xlu0 %v218
    %v220 = vpop.xlane.xlu0 %219
    %v221 = vsel %vm197, %v216, 0.0
    %222 = vadd.xlane.f32.xlu0 %v221
    %v223 = vpop.xlane.xlu0 %222
    %v224 = vsel %vm204, %v217, 0.0
    %225 = vadd.xlane.f32.xlu0 %v224
    %v226 = vpop.xlane.xlu0 %225
    %v227 = vmul.f32 %v220, %v208
    %v228 = vmul.f32 %v223, %v208
    %v229 = vmul.f32 %v226, %v208
    %v230 = vadd.f32 %v227, 1e-05
    %v231 = vadd.f32 %v228, 1e-05
    %v232 = vadd.f32 %v229, 1e-05
    %v233 = vrsqrt.pop %v230
    %v234 = vrsqrt.pop %v231
    %v235 = vrsqrt.pop %v232
    %v236 = vmul.f32 %v212, %v233
    %v237 = vmul.f32 %v213, %v234
    %v238 = vmul.f32 %v214, %v235
    %v240 = vlaneseq
    %v241 = vshrl.u32 %v240, 7
    %v242 = vsub.s32 0, %v241
    %v243 = vrot.slane %v195, %v242
    %v245 = vmul.f32 %v236, %v243
    %v246 = vmul.f32 %v237, %v243
    %v247 = vmul.f32 %v238, %v243
    %v249 = vlaneseq
    %v250 = vshrl.u32 %v249, 7
    %v251 = vsub.s32 0, %v250
    %v252 = vrot.slane %v196, %v251
    %v254 = vadd.f32 %v245, %v252
    %v255 = vadd.f32 %v246, %v252
    %v256 = vadd.f32 %v247, %v252
    %v257 = vld [vmem:[%s4] sm:$0xff]
    %v258 = vld [vmem:[%s4 + $0x8] sm:$0xff]
    %v259 = vld [vmem:[%s4 + $0x10] sm:$0xf]
    %v260 = vld [vmem:[%s6] sm:$0x1]
    %v261 = vld [vmem:[%s7] sm:$0x1]
    %v262 = vsel %vm197, %v254, 0.0
    %263 = vadd.xlane.f32.xlu0 %v262
    %v264 = vpop.xlane.xlu0 %263
    %v265 = vsel %vm197, %v255, 0.0
    %266 = vadd.xlane.f32.xlu0 %v265
    %v267 = vpop.xlane.xlu0 %266
    %v268 = vsel %vm204, %v256, 0.0
    %269 = vadd.xlane.f32.xlu0 %v268
    %v270 = vpop.xlane.xlu0 %269
    %v271 = vmul.f32 %v264, %v208
    %v272 = vmul.f32 %v267, %v208
    %v273 = vmul.f32 %v270, %v208
    %v274 = vsub.f32 %v254, %v271
    %v275 = vsub.f32 %v255, %v272
    %v276 = vsub.f32 %v256, %v273
    %v277 = vmul.f32 %v274, %v274
    %v278 = vmul.f32 %v275, %v275
    %v279 = vmul.f32 %v276, %v276
    %v280 = vsel %vm197, %v277, 0.0
    %281 = vadd.xlane.f32.xlu0 %v280
    %v282 = vpop.xlane.xlu0 %281
    %v283 = vsel %vm197, %v278, 0.0
    %284 = vadd.xlane.f32.xlu0 %v283
    %v285 = vpop.xlane.xlu0 %284
    %v286 = vsel %vm204, %v279, 0.0
    %287 = vadd.xlane.f32.xlu0 %v286
    %v288 = vpop.xlane.xlu0 %287
    %v289 = vmul.f32 %v282, %v208
    %v290 = vmul.f32 %v285, %v208
    %v291 = vmul.f32 %v288, %v208
    %v292 = vadd.f32 %v289, 1e-05
    %v293 = vadd.f32 %v290, 1e-05
    %v294 = vadd.f32 %v291, 1e-05
    %v295 = vrsqrt.pop %v292
    %v296 = vrsqrt.pop %v293
    %v297 = vrsqrt.pop %v294
    %v298 = vmul.f32 %v274, %v295
    %v299 = vmul.f32 %v275, %v296
    %v300 = vmul.f32 %v276, %v297
    %v302 = vlaneseq
    %v303 = vshrl.u32 %v302, 7
    %v304 = vsub.s32 0, %v303
    %v305 = vrot.slane %v260, %v304
    %v307 = vmul.f32 %v298, %v305
    %v308 = vmul.f32 %v299, %v305
    %v309 = vmul.f32 %v300, %v305
    %v311 = vlaneseq
    %v312 = vshrl.u32 %v311, 7
    %v313 = vsub.s32 0, %v312
    %v314 = vrot.slane %v261, %v313
    %v316 = vadd.f32 %v307, %v314
    %v317 = vadd.f32 %v308, %v314
    %v318 = vadd.f32 %v309, %v314
    %v319 = vld [vmem:[%s8] sm:$0xff]
    %v320 = vld [vmem:[%s8 + $0x8] sm:$0xff]
    %v321 = vld [vmem:[%s8 + $0x10] sm:$0xff]
    %v322 = vld [vmem:[%s8 + $0x18] sm:$0xff]
    %v323 = vld [vmem:[%s9] sm:$0x1]
    %v325 = vlaneseq
    %v326 = vshrl.u32 %v325, 7
    %v327 = vsub.s32 0, %v326
    %v328 = vrot.slane %v323, %v327
    %v331 = vsel %vm197, %v316, 0
    %v334 = vsel %vm197, %v317, 0
    %v337 = vsel %vm197, %v318, 0
    %339 = vmatprep.subr.mxu0 0.0
    %340 = vmatpush1.msra.mxu0 %v319
    %341 = vmatprep.subr.mxu0 0.0
    %342 = vmatpush1.msra.mxu0 %v320
    %343 = vmatprep.subr.mxu0 0.0
    %344 = vmatpush1.msra.mxu0 %v321
    %345 = vmatprep.subr.mxu0 0.0
    %346 = vmatpush1.msra.mxu0 %v322
    %347 = vmatprep.subr.mxu0 0.0
    %348 = vmatpush1.msra.mxu0 0.0
    %349 = vmatprep.subr.mxu0 0.0
    %350 = vmatpush1.msra.mxu0 0.0
    %351 = vmatprep.subr.mxu0 0.0
    %352 = vmatpush1.msra.mxu0 0.0
    %353 = vmatprep.subr.mxu0 0.0
    %354 = vmatpush1.msra.mxu0 0.0
    %355 = vmatprep.subr.mxu0 0.0
    %356 = vmatpush1.msra.mxu0 0.0
    %357 = vmatprep.subr.mxu0 0.0
    %358 = vmatpush1.msra.mxu0 0.0
    %359 = vmatprep.subr.mxu0 0.0
    %360 = vmatpush1.msra.mxu0 0.0
    %361 = vmatprep.subr.mxu0 0.0
    %362 = vmatpush1.msra.mxu0 0.0
    %363 = vmatprep.subr.mxu0 0.0
    %364 = vmatpush1.msra.mxu0 0.0
    %365 = vmatprep.subr.mxu0 0.0
    %366 = vmatpush1.msra.mxu0 0.0
    %367 = vmatprep.subr.mxu0 0.0
    %368 = vmatpush1.msra.mxu0 0.0
    %369 = vmatprep.subr.mxu0 0.0
    %370 = vmatpush1.msra.mxu0 0.0
    %371 = vmatprep.subr.mxu0 0.0
    %372 = vmatpush1.msra.mxu0 0.0
    %373 = vmatprep.subr.mxu0 0.0
    %374 = vmatpush1.msra.mxu0 0.0
    %375 = vmatprep.subr.mxu0 0.0
    %376 = vmatpush1.msra.mxu0 0.0
    %377 = vmatprep.subr.mxu0 0.0
    %378 = vmatpush1.msra.mxu0 0.0
    %379 = vmatprep.subr.mxu0 0.0
    %380 = vmatpush1.msra.mxu0 0.0
    %381 = vmatprep.subr.mxu0 0.0
    %382 = vmatpush1.msra.mxu0 0.0
    %383 = vmatprep.subr.mxu0 0.0
    %384 = vmatpush1.msra.mxu0 0.0
    %385 = vmatprep.subr.mxu0 0.0
    %386 = vmatpush1.msra.mxu0 0.0
    %387 = vmatprep.subr.mxu0 0.0
    %388 = vmatpush1.msra.mxu0 0.0
    %389 = vmatprep.subr.mxu0 0.0
    %390 = vmatpush1.msra.mxu0 0.0
    %391 = vmatprep.subr.mxu0 0.0
    %392 = vmatpush1.msra.mxu0 0.0
    %393 = vmatprep.subr.mxu0 0.0
    %394 = vmatpush1.msra.mxu0 0.0
    %395 = vmatprep.subr.mxu0 0.0
    %396 = vmatpush1.msra.mxu0 0.0
    %397 = vmatprep.subr.mxu0 0.0
    %398 = vmatpush1.msra.mxu0 0.0
    %399 = vmatprep.subr.mxu0 0.0
    %400 = vmatpush1.msra.mxu0 0.0
    %401 = vmatprep.subr.mxu0 0.0
    %402 = vmatpush1.msra.mxu0 0.0
    %403 = vmatprep.mubr.f32.mxu0 0.0
    %404 = vmatmul.mubr.f32.gmra.mrb[0].mxu0 %v331
    %v405 = vpop.f32.mrb[0].mxu0
    %v406 = vadd.f32 %v328, %v405
    %v407 = vpop.f32.mrb[0].mxu0
    %408 = vmatprep.mubr.f32.mxu0 0.0
    %409 = vmatmul.mubr.f32.gmra.mrb[0].mxu0 %v334
    %v410 = vpop.f32.mrb[0].mxu0
    %v411 = vadd.f32 %v328, %v410
    %v412 = vpop.f32.mrb[0].mxu0
    %413 = vmatprep.mubr.f32.mxu0 0.0
    %414 = vmatmul.mubr.f32.gmra.mrb[0].mxu0 %v337
    %v415 = vpop.f32.mrb[0].mxu0
    %v416 = vadd.f32 %v328, %v415
    %v417 = vpop.f32.mrb[0].mxu0
    %418 = vdwg.mxu0
    %422 = vrot.lane.b32.xlu0 %v406, 96
    %v423 = vpop.permute.xlu0 %422
    %424 = vrot.lane.b32.xlu0 %v411, 96
    %v425 = vpop.permute.xlu0 %424
    %426 = vrot.lane.b32.xlu0 %v416, 96
    %v427 = vpop.permute.xlu0 %426
    %vm428 = vcmask 64512
    %v429 = vsel %vm428, %v406, 0
    %v431 = vsel %vm428, %v411, 0
    %v433 = vsel %vm428, %v416, 0
    %v435 = vsel %vm428, %v423, 0
    %v437 = vsel %vm428, %v425, 0
    %v439 = vsel %vm428, %v427, 0
    %441 = vmatprep.subr.mxu0 0.0
    %442 = vmatpush1.xpose.msra.mxu0 %v435
    %443 = vmatprep.subr.mxu0 0.0
    %444 = vmatpush1.xpose.msra.mxu0 %v437
    %445 = vmatprep.subr.mxu0 0.0
    %446 = vmatpush1.xpose.msra.mxu0 %v439
    %447 = vmatprep.subr.mxu0 0.0
    %448 = vmatpush1.xpose.msra.mxu0 0.0
    %449 = vmatprep.subr.mxu0 0.0
    %450 = vmatpush1.xpose.msra.mxu0 0.0
    %451 = vmatprep.subr.mxu0 0.0
    %452 = vmatpush1.xpose.msra.mxu0 0.0
    %453 = vmatprep.subr.mxu0 0.0
    %454 = vmatpush1.xpose.msra.mxu0 0.0
    %455 = vmatprep.subr.mxu0 0.0
    %456 = vmatpush1.xpose.msra.mxu0 0.0
    %457 = vmatprep.subr.mxu0 0.0
    %458 = vmatpush1.xpose.msra.mxu0 0.0
    %459 = vmatprep.subr.mxu0 0.0
    %460 = vmatpush1.xpose.msra.mxu0 0.0
    %461 = vmatprep.subr.mxu0 0.0
    %462 = vmatpush1.xpose.msra.mxu0 0.0
    %463 = vmatprep.subr.mxu0 0.0
    %464 = vmatpush1.xpose.msra.mxu0 0.0
    %465 = vmatprep.subr.mxu0 0.0
    %466 = vmatpush1.xpose.msra.mxu0 0.0
    %467 = vmatprep.subr.mxu0 0.0
    %468 = vmatpush1.xpose.msra.mxu0 0.0
    %469 = vmatprep.subr.mxu0 0.0
    %470 = vmatpush1.xpose.msra.mxu0 0.0
    %471 = vmatprep.subr.mxu0 0.0
    %472 = vmatpush1.xpose.msra.mxu0 0.0
    %473 = vmatprep.subr.mxu0 0.0
    %474 = vmatpush1.xpose.msra.mxu0 0.0
    %475 = vmatprep.subr.mxu0 0.0
    %476 = vmatpush1.xpose.msra.mxu0 0.0
    %477 = vmatprep.subr.mxu0 0.0
    %478 = vmatpush1.xpose.msra.mxu0 0.0
    %479 = vmatprep.subr.mxu0 0.0
    %480 = vmatpush1.xpose.msra.mxu0 0.0
    %481 = vmatprep.subr.mxu0 0.0
    %482 = vmatpush1.xpose.msra.mxu0 0.0
    %483 = vmatprep.subr.mxu0 0.0
    %484 = vmatpush1.xpose.msra.mxu0 0.0
    %485 = vmatprep.subr.mxu0 0.0
    %486 = vmatpush1.xpose.msra.mxu0 0.0
    %487 = vmatprep.subr.mxu0 0.0
    %488 = vmatpush1.xpose.msra.mxu0 0.0
    %489 = vmatprep.subr.mxu0 0.0
    %490 = vmatpush1.xpose.msra.mxu0 0.0
    %491 = vmatprep.subr.mxu0 0.0
    %492 = vmatpush1.xpose.msra.mxu0 0.0
    %493 = vmatprep.subr.mxu0 0.0
    %494 = vmatpush1.xpose.msra.mxu0 0.0
    %495 = vmatprep.subr.mxu0 0.0
    %496 = vmatpush1.xpose.msra.mxu0 0.0
    %497 = vmatprep.subr.mxu0 0.0
    %498 = vmatpush1.xpose.msra.mxu0 0.0
    %499 = vmatprep.subr.mxu0 0.0
    %500 = vmatpush1.xpose.msra.mxu0 0.0
    %501 = vmatprep.subr.mxu0 0.0
    %502 = vmatpush1.xpose.msra.mxu0 0.0
    %503 = vmatprep.subr.mxu0 0.0
    %504 = vmatpush1.xpose.msra.mxu0 0.0
    %505 = vmatprep.mubr.f32.mxu0 0.0
    %506 = vmatmul.mubr.f32.gmra.mrb[0].mxu0 %v429
    %v507 = vpop.f32.mrb[0].mxu0
    %v508 = vadd.f32 %v257, %v507
    %v509 = vpop.f32.mrb[0].mxu0
    %510 = vmatprep.mubr.f32.mxu0 0.0
    %511 = vmatmul.mubr.f32.gmra.mrb[0].mxu0 %v431
    %v512 = vpop.f32.mrb[0].mxu0
    %v513 = vadd.f32 %v258, %v512
    %v514 = vpop.f32.mrb[0].mxu0
    %515 = vmatprep.mubr.f32.mxu0 0.0
    %516 = vmatmul.mubr.f32.gmra.mrb[0].mxu0 %v433
    %v517 = vpop.f32.mrb[0].mxu0
    %v518 = vadd.f32 %v259, %v517
    %v519 = vpop.f32.mrb[0].mxu0
    %520 = vdwg.mxu0
    %vm521 = vcmask 162816
    %v522 = vsel %vm521, %v508, -inf
    %523 = vmax.xlane.f32.xlu0 %v522
    %v524 = vpop.xlane.xlu0 %523
    %v525 = vsel %vm521, %v513, -inf
    %526 = vmax.xlane.f32.xlu0 %v525
    %v527 = vpop.xlane.xlu0 %526
    %vm528 = vcmask 158720
    %v529 = vsel %vm528, %v518, -inf
    %530 = vmax.xlane.f32.xlu0 %v529
    %v531 = vpop.xlane.xlu0 %530
    %v532 = vsub.f32 %v508, %v524
    %v533 = vsub.f32 %v513, %v527
    %v534 = vsub.f32 %v518, %v531
    %v535 = vmul.f32 %v532, 1.442695
    %v536 = vpow.pop %v535
    %v537 = vmul.f32 %v533, 1.442695
    %v538 = vpow.pop %v537
    %v539 = vmul.f32 %v534, 1.442695
    %v540 = vpow.pop %v539
    %v541 = vsel %vm521, %v536, 0.0
    %542 = vadd.xlane.f32.xlu0 %v541
    %v543 = vpop.xlane.xlu0 %542
    %v544 = vsel %vm521, %v538, 0.0
    %545 = vadd.xlane.f32.xlu0 %v544
    %v546 = vpop.xlane.xlu0 %545
    %v547 = vsel %vm528, %v540, 0.0
    %548 = vadd.xlane.f32.xlu0 %v547
    %v549 = vpop.xlane.xlu0 %548
    %v550 = vrcp.pop %v543
    %v551 = vrcp.pop %v546
    %v552 = vrcp.pop %v549
    %v553 = vmul.f32 %v536, %v550
    %v554 = vmul.f32 %v538, %v551
    %v555 = vmul.f32 %v540, %v552
    %556 = vrot.lane.b32.xlu0 %v406, 64
    %v557 = vpop.permute.xlu0 %556
    %558 = vrot.lane.b32.xlu0 %v411, 64
    %v559 = vpop.permute.xlu0 %558
    %560 = vrot.lane.b32.xlu0 %v416, 64
    %v561 = vpop.permute.xlu0 %560
    %v565 = vsel %vm521, %v553, 0
    %v568 = vsel %vm521, %v554, 0
    %v571 = vsel %vm521, %v555, 0
    %vm573 = vcmask 1043456
    %v574 = vsel %vm573, %v561, 0
    %576 = vmatprep.subr.mxu0 0.0
    %577 = vmatpush1.msra.mxu0 %v557
    %578 = vmatprep.subr.mxu0 0.0
    %579 = vmatpush1.msra.mxu0 %v559
    %580 = vmatprep.subr.mxu0 0.0
    %581 = vmatpush1.msra.mxu0 %v574
    %582 = vmatprep.subr.mxu0 0.0
    %583 = vmatpush1.msra.mxu0 0.0
    %584 = vmatprep.subr.mxu0 0.0
    %585 = vmatpush1.msra.mxu0 0.0
    %586 = vmatprep.subr.mxu0 0.0
    %587 = vmatpush1.msra.mxu0 0.0
    %588 = vmatprep.subr.mxu0 0.0
    %589 = vmatpush1.msra.mxu0 0.0
    %590 = vmatprep.subr.mxu0 0.0
    %591 = vmatpush1.msra.mxu0 0.0
    %592 = vmatprep.subr.mxu0 0.0
    %593 = vmatpush1.msra.mxu0 0.0
    %594 = vmatprep.subr.mxu0 0.0
    %595 = vmatpush1.msra.mxu0 0.0
    %596 = vmatprep.subr.mxu0 0.0
    %597 = vmatpush1.msra.mxu0 0.0
    %598 = vmatprep.subr.mxu0 0.0
    %599 = vmatpush1.msra.mxu0 0.0
    %600 = vmatprep.subr.mxu0 0.0
    %601 = vmatpush1.msra.mxu0 0.0
    %602 = vmatprep.subr.mxu0 0.0
    %603 = vmatpush1.msra.mxu0 0.0
    %604 = vmatprep.subr.mxu0 0.0
    %605 = vmatpush1.msra.mxu0 0.0
    %606 = vmatprep.subr.mxu0 0.0
    %607 = vmatpush1.msra.mxu0 0.0
    %608 = vmatprep.subr.mxu0 0.0
    %609 = vmatpush1.msra.mxu0 0.0
    %610 = vmatprep.subr.mxu0 0.0
    %611 = vmatpush1.msra.mxu0 0.0
    %612 = vmatprep.subr.mxu0 0.0
    %613 = vmatpush1.msra.mxu0 0.0
    %614 = vmatprep.subr.mxu0 0.0
    %615 = vmatpush1.msra.mxu0 0.0
    %616 = vmatprep.subr.mxu0 0.0
    %617 = vmatpush1.msra.mxu0 0.0
    %618 = vmatprep.subr.mxu0 0.0
    %619 = vmatpush1.msra.mxu0 0.0
    %620 = vmatprep.subr.mxu0 0.0
    %621 = vmatpush1.msra.mxu0 0.0
    %622 = vmatprep.subr.mxu0 0.0
    %623 = vmatpush1.msra.mxu0 0.0
    %624 = vmatprep.subr.mxu0 0.0
    %625 = vmatpush1.msra.mxu0 0.0
    %626 = vmatprep.subr.mxu0 0.0
    %627 = vmatpush1.msra.mxu0 0.0
    %628 = vmatprep.subr.mxu0 0.0
    %629 = vmatpush1.msra.mxu0 0.0
    %630 = vmatprep.subr.mxu0 0.0
    %631 = vmatpush1.msra.mxu0 0.0
    %632 = vmatprep.subr.mxu0 0.0
    %633 = vmatpush1.msra.mxu0 0.0
    %634 = vmatprep.subr.mxu0 0.0
    %635 = vmatpush1.msra.mxu0 0.0
    %636 = vmatprep.subr.mxu0 0.0
    %637 = vmatpush1.msra.mxu0 0.0
    %638 = vmatprep.subr.mxu0 0.0
    %639 = vmatpush1.msra.mxu0 0.0
    %640 = vmatprep.mubr.f32.mxu0 0.0
    %641 = vmatmul.mubr.f32.gmra.mrb[0].mxu0 %v565
    %v642 = vpop.f32.mrb[0].mxu0
    %v643 = vadd.f32 0.0, %v642
    %v644 = vpop.f32.mrb[0].mxu0
    %645 = vmatprep.mubr.f32.mxu0 0.0
    %646 = vmatmul.mubr.f32.gmra.mrb[0].mxu0 %v568
    %v647 = vpop.f32.mrb[0].mxu0
    %v648 = vadd.f32 0.0, %v647
    %v649 = vpop.f32.mrb[0].mxu0
    %650 = vmatprep.mubr.f32.mxu0 0.0
    %651 = vmatmul.mubr.f32.gmra.mrb[0].mxu0 %v571
    %v652 = vpop.f32.mrb[0].mxu0
    %v653 = vadd.f32 0.0, %v652
    %v654 = vpop.f32.mrb[0].mxu0
    %655 = vdwg.mxu0
    %656 = vrot.lane.b32.xlu0 %v406, 120
    %v657 = vpop.permute.xlu0 %656
    %658 = vrot.lane.b32.xlu0 %v411, 120
    %v659 = vpop.permute.xlu0 %658
    %660 = vrot.lane.b32.xlu0 %v416, 120
    %v661 = vpop.permute.xlu0 %660
    %662 = vrot.lane.b32.xlu0 %v406, 88
    %v663 = vpop.permute.xlu0 %662
    %664 = vrot.lane.b32.xlu0 %v411, 88
    %v665 = vpop.permute.xlu0 %664
    %666 = vrot.lane.b32.xlu0 %v416, 88
    %v667 = vpop.permute.xlu0 %666
    %v668 = vsel %vm428, %v657, 0
    %v670 = vsel %vm428, %v659, 0
    %v672 = vsel %vm428, %v661, 0
    %v674 = vsel %vm428, %v663, 0
    %v676 = vsel %vm428, %v665, 0
    %v678 = vsel %vm428, %v667, 0
    %680 = vmatprep.subr.mxu0 0.0
    %681 = vmatpush1.xpose.msra.mxu0 %v674
    %682 = vmatprep.subr.mxu0 0.0
    %683 = vmatpush1.xpose.msra.mxu0 %v676
    %684 = vmatprep.subr.mxu0 0.0
    %685 = vmatpush1.xpose.msra.mxu0 %v678
    %686 = vmatprep.subr.mxu0 0.0
    %687 = vmatpush1.xpose.msra.mxu0 0.0
    %688 = vmatprep.subr.mxu0 0.0
    %689 = vmatpush1.xpose.msra.mxu0 0.0
    %690 = vmatprep.subr.mxu0 0.0
    %691 = vmatpush1.xpose.msra.mxu0 0.0
    %692 = vmatprep.subr.mxu0 0.0
    %693 = vmatpush1.xpose.msra.mxu0 0.0
    %694 = vmatprep.subr.mxu0 0.0
    %695 = vmatpush1.xpose.msra.mxu0 0.0
    %696 = vmatprep.subr.mxu0 0.0
    %697 = vmatpush1.xpose.msra.mxu0 0.0
    %698 = vmatprep.subr.mxu0 0.0
    %699 = vmatpush1.xpose.msra.mxu0 0.0
    %700 = vmatprep.subr.mxu0 0.0
    %701 = vmatpush1.xpose.msra.mxu0 0.0
    %702 = vmatprep.subr.mxu0 0.0
    %703 = vmatpush1.xpose.msra.mxu0 0.0
    %704 = vmatprep.subr.mxu0 0.0
    %705 = vmatpush1.xpose.msra.mxu0 0.0
    %706 = vmatprep.subr.mxu0 0.0
    %707 = vmatpush1.xpose.msra.mxu0 0.0
    %708 = vmatprep.subr.mxu0 0.0
    %709 = vmatpush1.xpose.msra.mxu0 0.0
    %710 = vmatprep.subr.mxu0 0.0
    %711 = vmatpush1.xpose.msra.mxu0 0.0
    %712 = vmatprep.subr.mxu0 0.0
    %713 = vmatpush1.xpose.msra.mxu0 0.0
    %714 = vmatprep.subr.mxu0 0.0
    %715 = vmatpush1.xpose.msra.mxu0 0.0
    %716 = vmatprep.subr.mxu0 0.0
    %717 = vmatpush1.xpose.msra.mxu0 0.0
    %718 = vmatprep.subr.mxu0 0.0
    %719 = vmatpush1.xpose.msra.mxu0 0.0
    %720 = vmatprep.subr.mxu0 0.0
    %721 = vmatpush1.xpose.msra.mxu0 0.0
    %722 = vmatprep.subr.mxu0 0.0
    %723 = vmatpush1.xpose.msra.mxu0 0.0
    %724 = vmatprep.subr.mxu0 0.0
    %725 = vmatpush1.xpose.msra.mxu0 0.0
    %726 = vmatprep.subr.mxu0 0.0
    %727 = vmatpush1.xpose.msra.mxu0 0.0
    %728 = vmatprep.subr.mxu0 0.0
    %729 = vmatpush1.xpose.msra.mxu0 0.0
    %730 = vmatprep.subr.mxu0 0.0
    %731 = vmatpush1.xpose.msra.mxu0 0.0
    %732 = vmatprep.subr.mxu0 0.0
    %733 = vmatpush1.xpose.msra.mxu0 0.0
    %734 = vmatprep.subr.mxu0 0.0
    %735 = vmatpush1.xpose.msra.mxu0 0.0
    %736 = vmatprep.subr.mxu0 0.0
    %737 = vmatpush1.xpose.msra.mxu0 0.0
    %738 = vmatprep.subr.mxu0 0.0
    %739 = vmatpush1.xpose.msra.mxu0 0.0
    %740 = vmatprep.subr.mxu0 0.0
    %741 = vmatpush1.xpose.msra.mxu0 0.0
    %742 = vmatprep.subr.mxu0 0.0
    %743 = vmatpush1.xpose.msra.mxu0 0.0
    %744 = vmatprep.mubr.f32.mxu0 0.0
    %745 = vmatmul.mubr.f32.gmra.mrb[0].mxu0 %v668
    %v746 = vpop.f32.mrb[0].mxu0
    %v747 = vadd.f32 %v257, %v746
    %v748 = vpop.f32.mrb[0].mxu0
    %749 = vmatprep.mubr.f32.mxu0 0.0
    %750 = vmatmul.mubr.f32.gmra.mrb[0].mxu0 %v670
    %v751 = vpop.f32.mrb[0].mxu0
    %v752 = vadd.f32 %v258, %v751
    %v753 = vpop.f32.mrb[0].mxu0
    %754 = vmatprep.mubr.f32.mxu0 0.0
    %755 = vmatmul.mubr.f32.gmra.mrb[0].mxu0 %v672
    %v756 = vpop.f32.mrb[0].mxu0
    %v757 = vadd.f32 %v259, %v756
    %v758 = vpop.f32.mrb[0].mxu0
    %759 = vdwg.mxu0
    %v760 = vsel %vm521, %v747, -inf
    %761 = vmax.xlane.f32.xlu0 %v760
    %v762 = vpop.xlane.xlu0 %761
    %v763 = vsel %vm521, %v752, -inf
    %764 = vmax.xlane.f32.xlu0 %v763
    %v765 = vpop.xlane.xlu0 %764
    %v766 = vsel %vm528, %v757, -inf
    %767 = vmax.xlane.f32.xlu0 %v766
    %v768 = vpop.xlane.xlu0 %767
    %v769 = vsub.f32 %v747, %v762
    %v770 = vsub.f32 %v752, %v765
    %v771 = vsub.f32 %v757, %v768
    %v772 = vmul.f32 %v769, 1.442695
    %v773 = vpow.pop %v772
    %v774 = vmul.f32 %v770, 1.442695
    %v775 = vpow.pop %v774
    %v776 = vmul.f32 %v771, 1.442695
    %v777 = vpow.pop %v776
    %v778 = vsel %vm521, %v773, 0.0
    %779 = vadd.xlane.f32.xlu0 %v778
    %v780 = vpop.xlane.xlu0 %779
    %v781 = vsel %vm521, %v775, 0.0
    %782 = vadd.xlane.f32.xlu0 %v781
    %v783 = vpop.xlane.xlu0 %782
    %v784 = vsel %vm528, %v777, 0.0
    %785 = vadd.xlane.f32.xlu0 %v784
    %v786 = vpop.xlane.xlu0 %785
    %v787 = vrcp.pop %v780
    %v788 = vrcp.pop %v783
    %v789 = vrcp.pop %v786
    %v790 = vmul.f32 %v773, %v787
    %v791 = vmul.f32 %v775, %v788
    %v792 = vmul.f32 %v777, %v789
    %793 = vrot.lane.b32.xlu0 %v406, 56
    %v794 = vpop.permute.xlu0 %793
    %795 = vrot.lane.b32.xlu0 %v411, 56
    %v796 = vpop.permute.xlu0 %795
    %797 = vrot.lane.b32.xlu0 %v416, 56
    %v798 = vpop.permute.xlu0 %797
    %v802 = vsel %vm521, %v790, 0
    %v805 = vsel %vm521, %v791, 0
    %v808 = vsel %vm521, %v792, 0
    %v810 = vsel %vm573, %v798, 0
    %812 = vmatprep.subr.mxu0 0.0
    %813 = vmatpush1.msra.mxu0 %v794
    %814 = vmatprep.subr.mxu0 0.0
    %815 = vmatpush1.msra.mxu0 %v796
    %816 = vmatprep.subr.mxu0 0.0
    %817 = vmatpush1.msra.mxu0 %v810
    %818 = vmatprep.subr.mxu0 0.0
    %819 = vmatpush1.msra.mxu0 0.0
    %820 = vmatprep.subr.mxu0 0.0
    %821 = vmatpush1.msra.mxu0 0.0
    %822 = vmatprep.subr.mxu0 0.0
    %823 = vmatpush1.msra.mxu0 0.0
    %824 = vmatprep.subr.mxu0 0.0
    %825 = vmatpush1.msra.mxu0 0.0
    %826 = vmatprep.subr.mxu0 0.0
    %827 = vmatpush1.msra.mxu0 0.0
    %828 = vmatprep.subr.mxu0 0.0
    %829 = vmatpush1.msra.mxu0 0.0
    %830 = vmatprep.subr.mxu0 0.0
    %831 = vmatpush1.msra.mxu0 0.0
    %832 = vmatprep.subr.mxu0 0.0
    %833 = vmatpush1.msra.mxu0 0.0
    %834 = vmatprep.subr.mxu0 0.0
    %835 = vmatpush1.msra.mxu0 0.0
    %836 = vmatprep.subr.mxu0 0.0
    %837 = vmatpush1.msra.mxu0 0.0
    %838 = vmatprep.subr.mxu0 0.0
    %839 = vmatpush1.msra.mxu0 0.0
    %840 = vmatprep.subr.mxu0 0.0
    %841 = vmatpush1.msra.mxu0 0.0
    %842 = vmatprep.subr.mxu0 0.0
    %843 = vmatpush1.msra.mxu0 0.0
    %844 = vmatprep.subr.mxu0 0.0
    %845 = vmatpush1.msra.mxu0 0.0
    %846 = vmatprep.subr.mxu0 0.0
    %847 = vmatpush1.msra.mxu0 0.0
    %848 = vmatprep.subr.mxu0 0.0
    %849 = vmatpush1.msra.mxu0 0.0
    %850 = vmatprep.subr.mxu0 0.0
    %851 = vmatpush1.msra.mxu0 0.0
    %852 = vmatprep.subr.mxu0 0.0
    %853 = vmatpush1.msra.mxu0 0.0
    %854 = vmatprep.subr.mxu0 0.0
    %855 = vmatpush1.msra.mxu0 0.0
    %856 = vmatprep.subr.mxu0 0.0
    %857 = vmatpush1.msra.mxu0 0.0
    %858 = vmatprep.subr.mxu0 0.0
    %859 = vmatpush1.msra.mxu0 0.0
    %860 = vmatprep.subr.mxu0 0.0
    %861 = vmatpush1.msra.mxu0 0.0
    %862 = vmatprep.subr.mxu0 0.0
    %863 = vmatpush1.msra.mxu0 0.0
    %864 = vmatprep.subr.mxu0 0.0
    %865 = vmatpush1.msra.mxu0 0.0
    %866 = vmatprep.subr.mxu0 0.0
    %867 = vmatpush1.msra.mxu0 0.0
    %868 = vmatprep.subr.mxu0 0.0
    %869 = vmatpush1.msra.mxu0 0.0
    %870 = vmatprep.subr.mxu0 0.0
    %871 = vmatpush1.msra.mxu0 0.0
    %872 = vmatprep.subr.mxu0 0.0
    %873 = vmatpush1.msra.mxu0 0.0
    %874 = vmatprep.subr.mxu0 0.0
    %875 = vmatpush1.msra.mxu0 0.0
    %876 = vmatprep.mubr.f32.mxu0 0.0
    %877 = vmatmul.mubr.f32.gmra.mrb[0].mxu0 %v802
    %v878 = vpop.f32.mrb[0].mxu0
    %v879 = vadd.f32 0.0, %v878
    %v880 = vpop.f32.mrb[0].mxu0
    %881 = vmatprep.mubr.f32.mxu0 0.0
    %882 = vmatmul.mubr.f32.gmra.mrb[0].mxu0 %v805
    %v883 = vpop.f32.mrb[0].mxu0
    %v884 = vadd.f32 0.0, %v883
    %v885 = vpop.f32.mrb[0].mxu0
    %886 = vmatprep.mubr.f32.mxu0 0.0
    %887 = vmatmul.mubr.f32.gmra.mrb[0].mxu0 %v808
    %v888 = vpop.f32.mrb[0].mxu0
    %v889 = vadd.f32 0.0, %v888
    %v890 = vpop.f32.mrb[0].mxu0
    %891 = vdwg.mxu0
    %892 = vrot.lane.b32.xlu0 %v406, 112
    %v893 = vpop.permute.xlu0 %892
    %894 = vrot.lane.b32.xlu0 %v411, 112
    %v895 = vpop.permute.xlu0 %894
    %896 = vrot.lane.b32.xlu0 %v416, 112
    %v897 = vpop.permute.xlu0 %896
    %898 = vrot.lane.b32.xlu0 %v406, 80
    %v899 = vpop.permute.xlu0 %898
    %900 = vrot.lane.b32.xlu0 %v411, 80
    %v901 = vpop.permute.xlu0 %900
    %902 = vrot.lane.b32.xlu0 %v416, 80
    %v903 = vpop.permute.xlu0 %902
    %v904 = vsel %vm428, %v893, 0
    %v906 = vsel %vm428, %v895, 0
    %v908 = vsel %vm428, %v897, 0
    %v910 = vsel %vm428, %v899, 0
    %v912 = vsel %vm428, %v901, 0
    %v914 = vsel %vm428, %v903, 0
    %916 = vmatprep.subr.mxu0 0.0
    %917 = vmatpush1.xpose.msra.mxu0 %v910
    %918 = vmatprep.subr.mxu0 0.0
    %919 = vmatpush1.xpose.msra.mxu0 %v912
    %920 = vmatprep.subr.mxu0 0.0
    %921 = vmatpush1.xpose.msra.mxu0 %v914
    %922 = vmatprep.subr.mxu0 0.0
    %923 = vmatpush1.xpose.msra.mxu0 0.0
    %924 = vmatprep.subr.mxu0 0.0
    %925 = vmatpush1.xpose.msra.mxu0 0.0
    %926 = vmatprep.subr.mxu0 0.0
    %927 = vmatpush1.xpose.msra.mxu0 0.0
    %928 = vmatprep.subr.mxu0 0.0
    %929 = vmatpush1.xpose.msra.mxu0 0.0
    %930 = vmatprep.subr.mxu0 0.0
    %931 = vmatpush1.xpose.msra.mxu0 0.0
    %932 = vmatprep.subr.mxu0 0.0
    %933 = vmatpush1.xpose.msra.mxu0 0.0
    %934 = vmatprep.subr.mxu0 0.0
    %935 = vmatpush1.xpose.msra.mxu0 0.0
    %936 = vmatprep.subr.mxu0 0.0
    %937 = vmatpush1.xpose.msra.mxu0 0.0
    %938 = vmatprep.subr.mxu0 0.0
    %939 = vmatpush1.xpose.msra.mxu0 0.0
    %940 = vmatprep.subr.mxu0 0.0
    %941 = vmatpush1.xpose.msra.mxu0 0.0
    %942 = vmatprep.subr.mxu0 0.0
    %943 = vmatpush1.xpose.msra.mxu0 0.0
    %944 = vmatprep.subr.mxu0 0.0
    %945 = vmatpush1.xpose.msra.mxu0 0.0
    %946 = vmatprep.subr.mxu0 0.0
    %947 = vmatpush1.xpose.msra.mxu0 0.0
    %948 = vmatprep.subr.mxu0 0.0
    %949 = vmatpush1.xpose.msra.mxu0 0.0
    %950 = vmatprep.subr.mxu0 0.0
    %951 = vmatpush1.xpose.msra.mxu0 0.0
    %952 = vmatprep.subr.mxu0 0.0
    %953 = vmatpush1.xpose.msra.mxu0 0.0
    %954 = vmatprep.subr.mxu0 0.0
    %955 = vmatpush1.xpose.msra.mxu0 0.0
    %956 = vmatprep.subr.mxu0 0.0
    %957 = vmatpush1.xpose.msra.mxu0 0.0
    %958 = vmatprep.subr.mxu0 0.0
    %959 = vmatpush1.xpose.msra.mxu0 0.0
    %960 = vmatprep.subr.mxu0 0.0
    %961 = vmatpush1.xpose.msra.mxu0 0.0
    %962 = vmatprep.subr.mxu0 0.0
    %963 = vmatpush1.xpose.msra.mxu0 0.0
    %964 = vmatprep.subr.mxu0 0.0
    %965 = vmatpush1.xpose.msra.mxu0 0.0
    %966 = vmatprep.subr.mxu0 0.0
    %967 = vmatpush1.xpose.msra.mxu0 0.0
    %968 = vmatprep.subr.mxu0 0.0
    %969 = vmatpush1.xpose.msra.mxu0 0.0
    %970 = vmatprep.subr.mxu0 0.0
    %971 = vmatpush1.xpose.msra.mxu0 0.0
    %972 = vmatprep.subr.mxu0 0.0
    %973 = vmatpush1.xpose.msra.mxu0 0.0
    %974 = vmatprep.subr.mxu0 0.0
    %975 = vmatpush1.xpose.msra.mxu0 0.0
    %976 = vmatprep.subr.mxu0 0.0
    %977 = vmatpush1.xpose.msra.mxu0 0.0
    %978 = vmatprep.subr.mxu0 0.0
    %979 = vmatpush1.xpose.msra.mxu0 0.0
    %980 = vmatprep.mubr.f32.mxu0 0.0
    %981 = vmatmul.mubr.f32.gmra.mrb[0].mxu0 %v904
    %v982 = vpop.f32.mrb[0].mxu0
    %v983 = vadd.f32 %v257, %v982
    %v984 = vpop.f32.mrb[0].mxu0
    %985 = vmatprep.mubr.f32.mxu0 0.0
    %986 = vmatmul.mubr.f32.gmra.mrb[0].mxu0 %v906
    %v987 = vpop.f32.mrb[0].mxu0
    %v988 = vadd.f32 %v258, %v987
    %v989 = vpop.f32.mrb[0].mxu0
    %990 = vmatprep.mubr.f32.mxu0 0.0
    %991 = vmatmul.mubr.f32.gmra.mrb[0].mxu0 %v908
    %v992 = vpop.f32.mrb[0].mxu0
    %v993 = vadd.f32 %v259, %v992
    %v994 = vpop.f32.mrb[0].mxu0
    %995 = vdwg.mxu0
    %v996 = vsel %vm521, %v983, -inf
    %997 = vmax.xlane.f32.xlu0 %v996
    %v998 = vpop.xlane.xlu0 %997
    %v999 = vsel %vm521, %v988, -inf
    %1000 = vmax.xlane.f32.xlu0 %v999
    %v1001 = vpop.xlane.xlu0 %1000
    %v1002 = vsel %vm528, %v993, -inf
    %1003 = vmax.xlane.f32.xlu0 %v1002
    %v1004 = vpop.xlane.xlu0 %1003
    %v1005 = vsub.f32 %v983, %v998
    %v1006 = vsub.f32 %v988, %v1001
    %v1007 = vsub.f32 %v993, %v1004
    %v1008 = vmul.f32 %v1005, 1.442695
    %v1009 = vpow.pop %v1008
    %v1010 = vmul.f32 %v1006, 1.442695
    %v1011 = vpow.pop %v1010
    %v1012 = vmul.f32 %v1007, 1.442695
    %v1013 = vpow.pop %v1012
    %v1014 = vsel %vm521, %v1009, 0.0
    %1015 = vadd.xlane.f32.xlu0 %v1014
    %v1016 = vpop.xlane.xlu0 %1015
    %v1017 = vsel %vm521, %v1011, 0.0
    %1018 = vadd.xlane.f32.xlu0 %v1017
    %v1019 = vpop.xlane.xlu0 %1018
    %v1020 = vsel %vm528, %v1013, 0.0
    %1021 = vadd.xlane.f32.xlu0 %v1020
    %v1022 = vpop.xlane.xlu0 %1021
    %v1023 = vrcp.pop %v1016
    %v1024 = vrcp.pop %v1019
    %v1025 = vrcp.pop %v1022
    %v1026 = vmul.f32 %v1009, %v1023
    %v1027 = vmul.f32 %v1011, %v1024
    %v1028 = vmul.f32 %v1013, %v1025
    %1029 = vrot.lane.b32.xlu0 %v406, 48
    %v1030 = vpop.permute.xlu0 %1029
    %1031 = vrot.lane.b32.xlu0 %v411, 48
    %v1032 = vpop.permute.xlu0 %1031
    %1033 = vrot.lane.b32.xlu0 %v416, 48
    %v1034 = vpop.permute.xlu0 %1033
    %v1038 = vsel %vm521, %v1026, 0
    %v1041 = vsel %vm521, %v1027, 0
    %v1044 = vsel %vm521, %v1028, 0
    %v1046 = vsel %vm573, %v1034, 0
    %1048 = vmatprep.subr.mxu0 0.0
    %1049 = vmatpush1.msra.mxu0 %v1030
    %1050 = vmatprep.subr.mxu0 0.0
    %1051 = vmatpush1.msra.mxu0 %v1032
    %1052 = vmatprep.subr.mxu0 0.0
    %1053 = vmatpush1.msra.mxu0 %v1046
    %1054 = vmatprep.subr.mxu0 0.0
    %1055 = vmatpush1.msra.mxu0 0.0
    %1056 = vmatprep.subr.mxu0 0.0
    %1057 = vmatpush1.msra.mxu0 0.0
    %1058 = vmatprep.subr.mxu0 0.0
    %1059 = vmatpush1.msra.mxu0 0.0
    %1060 = vmatprep.subr.mxu0 0.0
    %1061 = vmatpush1.msra.mxu0 0.0
    %1062 = vmatprep.subr.mxu0 0.0
    %1063 = vmatpush1.msra.mxu0 0.0
    %1064 = vmatprep.subr.mxu0 0.0
    %1065 = vmatpush1.msra.mxu0 0.0
    %1066 = vmatprep.subr.mxu0 0.0
    %1067 = vmatpush1.msra.mxu0 0.0
    %1068 = vmatprep.subr.mxu0 0.0
    %1069 = vmatpush1.msra.mxu0 0.0
    %1070 = vmatprep.subr.mxu0 0.0
    %1071 = vmatpush1.msra.mxu0 0.0
    %1072 = vmatprep.subr.mxu0 0.0
    %1073 = vmatpush1.msra.mxu0 0.0
    %1074 = vmatprep.subr.mxu0 0.0
    %1075 = vmatpush1.msra.mxu0 0.0
    %1076 = vmatprep.subr.mxu0 0.0
    %1077 = vmatpush1.msra.mxu0 0.0
    %1078 = vmatprep.subr.mxu0 0.0
    %1079 = vmatpush1.msra.mxu0 0.0
    %1080 = vmatprep.subr.mxu0 0.0
    %1081 = vmatpush1.msra.mxu0 0.0
    %1082 = vmatprep.subr.mxu0 0.0
    %1083 = vmatpush1.msra.mxu0 0.0
    %1084 = vmatprep.subr.mxu0 0.0
    %1085 = vmatpush1.msra.mxu0 0.0
    %1086 = vmatprep.subr.mxu0 0.0
    %1087 = vmatpush1.msra.mxu0 0.0
    %1088 = vmatprep.subr.mxu0 0.0
    %1089 = vmatpush1.msra.mxu0 0.0
    %1090 = vmatprep.subr.mxu0 0.0
    %1091 = vmatpush1.msra.mxu0 0.0
    %1092 = vmatprep.subr.mxu0 0.0
    %1093 = vmatpush1.msra.mxu0 0.0
    %1094 = vmatprep.subr.mxu0 0.0
    %1095 = vmatpush1.msra.mxu0 0.0
    %1096 = vmatprep.subr.mxu0 0.0
    %1097 = vmatpush1.msra.mxu0 0.0
    %1098 = vmatprep.subr.mxu0 0.0
    %1099 = vmatpush1.msra.mxu0 0.0
    %1100 = vmatprep.subr.mxu0 0.0
    %1101 = vmatpush1.msra.mxu0 0.0
    %1102 = vmatprep.subr.mxu0 0.0
    %1103 = vmatpush1.msra.mxu0 0.0
    %1104 = vmatprep.subr.mxu0 0.0
    %1105 = vmatpush1.msra.mxu0 0.0
    %1106 = vmatprep.subr.mxu0 0.0
    %1107 = vmatpush1.msra.mxu0 0.0
    %1108 = vmatprep.subr.mxu0 0.0
    %1109 = vmatpush1.msra.mxu0 0.0
    %1110 = vmatprep.subr.mxu0 0.0
    %1111 = vmatpush1.msra.mxu0 0.0
    %1112 = vmatprep.mubr.f32.mxu0 0.0
    %1113 = vmatmul.mubr.f32.gmra.mrb[0].mxu0 %v1038
    %v1114 = vpop.f32.mrb[0].mxu0
    %v1115 = vadd.f32 0.0, %v1114
    %v1116 = vpop.f32.mrb[0].mxu0
    %1117 = vmatprep.mubr.f32.mxu0 0.0
    %1118 = vmatmul.mubr.f32.gmra.mrb[0].mxu0 %v1041
    %v1119 = vpop.f32.mrb[0].mxu0
    %v1120 = vadd.f32 0.0, %v1119
    %v1121 = vpop.f32.mrb[0].mxu0
    %1122 = vmatprep.mubr.f32.mxu0 0.0
    %1123 = vmatmul.mubr.f32.gmra.mrb[0].mxu0 %v1044
    %v1124 = vpop.f32.mrb[0].mxu0
    %v1125 = vadd.f32 0.0, %v1124
    %v1126 = vpop.f32.mrb[0].mxu0
    %1127 = vdwg.mxu0
    %1128 = vrot.lane.b32.xlu0 %v406, 104
    %v1129 = vpop.permute.xlu0 %1128
    %1130 = vrot.lane.b32.xlu0 %v411, 104
    %v1131 = vpop.permute.xlu0 %1130
    %1132 = vrot.lane.b32.xlu0 %v416, 104
    %v1133 = vpop.permute.xlu0 %1132
    %1134 = vrot.lane.b32.xlu0 %v406, 72
    %v1135 = vpop.permute.xlu0 %1134
    %1136 = vrot.lane.b32.xlu0 %v411, 72
    %v1137 = vpop.permute.xlu0 %1136
    %1138 = vrot.lane.b32.xlu0 %v416, 72
    %v1139 = vpop.permute.xlu0 %1138
    %v1140 = vsel %vm428, %v1129, 0
    %v1142 = vsel %vm428, %v1131, 0
    %v1144 = vsel %vm428, %v1133, 0
    %v1146 = vsel %vm428, %v1135, 0
    %v1148 = vsel %vm428, %v1137, 0
    %v1150 = vsel %vm428, %v1139, 0
    %1152 = vmatprep.subr.mxu0 0.0
    %1153 = vmatpush1.xpose.msra.mxu0 %v1146
    %1154 = vmatprep.subr.mxu0 0.0
    %1155 = vmatpush1.xpose.msra.mxu0 %v1148
    %1156 = vmatprep.subr.mxu0 0.0
    %1157 = vmatpush1.xpose.msra.mxu0 %v1150
    %1158 = vmatprep.subr.mxu0 0.0
    %1159 = vmatpush1.xpose.msra.mxu0 0.0
    %1160 = vmatprep.subr.mxu0 0.0
    %1161 = vmatpush1.xpose.msra.mxu0 0.0
    %1162 = vmatprep.subr.mxu0 0.0
    %1163 = vmatpush1.xpose.msra.mxu0 0.0
    %1164 = vmatprep.subr.mxu0 0.0
    %1165 = vmatpush1.xpose.msra.mxu0 0.0
    %1166 = vmatprep.subr.mxu0 0.0
    %1167 = vmatpush1.xpose.msra.mxu0 0.0
    %1168 = vmatprep.subr.mxu0 0.0
    %1169 = vmatpush1.xpose.msra.mxu0 0.0
    %1170 = vmatprep.subr.mxu0 0.0
    %1171 = vmatpush1.xpose.msra.mxu0 0.0
    %1172 = vmatprep.subr.mxu0 0.0
    %1173 = vmatpush1.xpose.msra.mxu0 0.0
    %1174 = vmatprep.subr.mxu0 0.0
    %1175 = vmatpush1.xpose.msra.mxu0 0.0
    %1176 = vmatprep.subr.mxu0 0.0
    %1177 = vmatpush1.xpose.msra.mxu0 0.0
    %1178 = vmatprep.subr.mxu0 0.0
    %1179 = vmatpush1.xpose.msra.mxu0 0.0
    %1180 = vmatprep.subr.mxu0 0.0
    %1181 = vmatpush1.xpose.msra.mxu0 0.0
    %1182 = vmatprep.subr.mxu0 0.0
    %1183 = vmatpush1.xpose.msra.mxu0 0.0
    %1184 = vmatprep.subr.mxu0 0.0
    %1185 = vmatpush1.xpose.msra.mxu0 0.0
    %1186 = vmatprep.subr.mxu0 0.0
    %1187 = vmatpush1.xpose.msra.mxu0 0.0
    %1188 = vmatprep.subr.mxu0 0.0
    %1189 = vmatpush1.xpose.msra.mxu0 0.0
    %1190 = vmatprep.subr.mxu0 0.0
    %1191 = vmatpush1.xpose.msra.mxu0 0.0
    %1192 = vmatprep.subr.mxu0 0.0
    %1193 = vmatpush1.xpose.msra.mxu0 0.0
    %1194 = vmatprep.subr.mxu0 0.0
    %1195 = vmatpush1.xpose.msra.mxu0 0.0
    %1196 = vmatprep.subr.mxu0 0.0
    %1197 = vmatpush1.xpose.msra.mxu0 0.0
    %1198 = vmatprep.subr.mxu0 0.0
    %1199 = vmatpush1.xpose.msra.mxu0 0.0
    %1200 = vmatprep.subr.mxu0 0.0
    %1201 = vmatpush1.xpose.msra.mxu0 0.0
    %1202 = vmatprep.subr.mxu0 0.0
    %1203 = vmatpush1.xpose.msra.mxu0 0.0
    %1204 = vmatprep.subr.mxu0 0.0
    %1205 = vmatpush1.xpose.msra.mxu0 0.0
    %1206 = vmatprep.subr.mxu0 0.0
    %1207 = vmatpush1.xpose.msra.mxu0 0.0
    %1208 = vmatprep.subr.mxu0 0.0
    %1209 = vmatpush1.xpose.msra.mxu0 0.0
    %1210 = vmatprep.subr.mxu0 0.0
    %1211 = vmatpush1.xpose.msra.mxu0 0.0
    %1212 = vmatprep.subr.mxu0 0.0
    %1213 = vmatpush1.xpose.msra.mxu0 0.0
    %1214 = vmatprep.subr.mxu0 0.0
    %1215 = vmatpush1.xpose.msra.mxu0 0.0
    %1216 = vmatprep.mubr.f32.mxu0 0.0
    %1217 = vmatmul.mubr.f32.gmra.mrb[0].mxu0 %v1140
    %v1218 = vpop.f32.mrb[0].mxu0
    %v1219 = vadd.f32 %v257, %v1218
    %v1220 = vpop.f32.mrb[0].mxu0
    %1221 = vmatprep.mubr.f32.mxu0 0.0
    %1222 = vmatmul.mubr.f32.gmra.mrb[0].mxu0 %v1142
    %v1223 = vpop.f32.mrb[0].mxu0
    %v1224 = vadd.f32 %v258, %v1223
    %v1225 = vpop.f32.mrb[0].mxu0
    %1226 = vmatprep.mubr.f32.mxu0 0.0
    %1227 = vmatmul.mubr.f32.gmra.mrb[0].mxu0 %v1144
    %v1228 = vpop.f32.mrb[0].mxu0
    %v1229 = vadd.f32 %v259, %v1228
    %v1230 = vpop.f32.mrb[0].mxu0
    %1231 = vdwg.mxu0
    %v1232 = vsel %vm521, %v1219, -inf
    %1233 = vmax.xlane.f32.xlu0 %v1232
    %v1234 = vpop.xlane.xlu0 %1233
    %v1235 = vsel %vm521, %v1224, -inf
    %1236 = vmax.xlane.f32.xlu0 %v1235
    %v1237 = vpop.xlane.xlu0 %1236
    %v1238 = vsel %vm528, %v1229, -inf
    %1239 = vmax.xlane.f32.xlu0 %v1238
    %v1240 = vpop.xlane.xlu0 %1239
    %v1241 = vsub.f32 %v1219, %v1234
    %v1242 = vsub.f32 %v1224, %v1237
    %v1243 = vsub.f32 %v1229, %v1240
    %v1244 = vmul.f32 %v1241, 1.442695
    %v1245 = vpow.pop %v1244
    %v1246 = vmul.f32 %v1242, 1.442695
    %v1247 = vpow.pop %v1246
    %v1248 = vmul.f32 %v1243, 1.442695
    %v1249 = vpow.pop %v1248
    %v1250 = vsel %vm521, %v1245, 0.0
    %1251 = vadd.xlane.f32.xlu0 %v1250
    %v1252 = vpop.xlane.xlu0 %1251
    %v1253 = vsel %vm521, %v1247, 0.0
    %1254 = vadd.xlane.f32.xlu0 %v1253
    %v1255 = vpop.xlane.xlu0 %1254
    %v1256 = vsel %vm528, %v1249, 0.0
    %1257 = vadd.xlane.f32.xlu0 %v1256
    %v1258 = vpop.xlane.xlu0 %1257
    %v1259 = vrcp.pop %v1252
    %v1260 = vrcp.pop %v1255
    %v1261 = vrcp.pop %v1258
    %v1262 = vmul.f32 %v1245, %v1259
    %v1263 = vmul.f32 %v1247, %v1260
    %v1264 = vmul.f32 %v1249, %v1261
    %1265 = vrot.lane.b32.xlu0 %v406, 40
    %v1266 = vpop.permute.xlu0 %1265
    %1267 = vrot.lane.b32.xlu0 %v411, 40
    %v1268 = vpop.permute.xlu0 %1267
    %1269 = vrot.lane.b32.xlu0 %v416, 40
    %v1270 = vpop.permute.xlu0 %1269
    %v1274 = vsel %vm521, %v1262, 0
    %v1277 = vsel %vm521, %v1263, 0
    %v1280 = vsel %vm521, %v1264, 0
    %v1282 = vsel %vm573, %v1270, 0
    %1284 = vmatprep.subr.mxu0 0.0
    %1285 = vmatpush1.msra.mxu0 %v1266
    %1286 = vmatprep.subr.mxu0 0.0
    %1287 = vmatpush1.msra.mxu0 %v1268
    %1288 = vmatprep.subr.mxu0 0.0
    %1289 = vmatpush1.msra.mxu0 %v1282
    %1290 = vmatprep.subr.mxu0 0.0
    %1291 = vmatpush1.msra.mxu0 0.0
    %1292 = vmatprep.subr.mxu0 0.0
    %1293 = vmatpush1.msra.mxu0 0.0
    %1294 = vmatprep.subr.mxu0 0.0
    %1295 = vmatpush1.msra.mxu0 0.0
    %1296 = vmatprep.subr.mxu0 0.0
    %1297 = vmatpush1.msra.mxu0 0.0
    %1298 = vmatprep.subr.mxu0 0.0
    %1299 = vmatpush1.msra.mxu0 0.0
    %1300 = vmatprep.subr.mxu0 0.0
    %1301 = vmatpush1.msra.mxu0 0.0
    %1302 = vmatprep.subr.mxu0 0.0
    %1303 = vmatpush1.msra.mxu0 0.0
    %1304 = vmatprep.subr.mxu0 0.0
    %1305 = vmatpush1.msra.mxu0 0.0
    %1306 = vmatprep.subr.mxu0 0.0
    %1307 = vmatpush1.msra.mxu0 0.0
    %1308 = vmatprep.subr.mxu0 0.0
    %1309 = vmatpush1.msra.mxu0 0.0
    %1310 = vmatprep.subr.mxu0 0.0
    %1311 = vmatpush1.msra.mxu0 0.0
    %1312 = vmatprep.subr.mxu0 0.0
    %1313 = vmatpush1.msra.mxu0 0.0
    %1314 = vmatprep.subr.mxu0 0.0
    %1315 = vmatpush1.msra.mxu0 0.0
    %1316 = vmatprep.subr.mxu0 0.0
    %1317 = vmatpush1.msra.mxu0 0.0
    %1318 = vmatprep.subr.mxu0 0.0
    %1319 = vmatpush1.msra.mxu0 0.0
    %1320 = vmatprep.subr.mxu0 0.0
    %1321 = vmatpush1.msra.mxu0 0.0
    %1322 = vmatprep.subr.mxu0 0.0
    %1323 = vmatpush1.msra.mxu0 0.0
    %1324 = vmatprep.subr.mxu0 0.0
    %1325 = vmatpush1.msra.mxu0 0.0
    %1326 = vmatprep.subr.mxu0 0.0
    %1327 = vmatpush1.msra.mxu0 0.0
    %1328 = vmatprep.subr.mxu0 0.0
    %1329 = vmatpush1.msra.mxu0 0.0
    %1330 = vmatprep.subr.mxu0 0.0
    %1331 = vmatpush1.msra.mxu0 0.0
    %1332 = vmatprep.subr.mxu0 0.0
    %1333 = vmatpush1.msra.mxu0 0.0
    %1334 = vmatprep.subr.mxu0 0.0
    %1335 = vmatpush1.msra.mxu0 0.0
    %1336 = vmatprep.subr.mxu0 0.0
    %1337 = vmatpush1.msra.mxu0 0.0
    %1338 = vmatprep.subr.mxu0 0.0
    %1339 = vmatpush1.msra.mxu0 0.0
    %1340 = vmatprep.subr.mxu0 0.0
    %1341 = vmatpush1.msra.mxu0 0.0
    %1342 = vmatprep.subr.mxu0 0.0
    %1343 = vmatpush1.msra.mxu0 0.0
    %1344 = vmatprep.subr.mxu0 0.0
    %1345 = vmatpush1.msra.mxu0 0.0
    %1346 = vmatprep.subr.mxu0 0.0
    %1347 = vmatpush1.msra.mxu0 0.0
    %1348 = vmatprep.mubr.f32.mxu0 0.0
    %1349 = vmatmul.mubr.f32.gmra.mrb[0].mxu0 %v1274
    %v1350 = vpop.f32.mrb[0].mxu0
    %v1351 = vadd.f32 0.0, %v1350
    %v1352 = vpop.f32.mrb[0].mxu0
    %1353 = vmatprep.mubr.f32.mxu0 0.0
    %1354 = vmatmul.mubr.f32.gmra.mrb[0].mxu0 %v1277
    %v1355 = vpop.f32.mrb[0].mxu0
    %v1356 = vadd.f32 0.0, %v1355
    %v1357 = vpop.f32.mrb[0].mxu0
    %1358 = vmatprep.mubr.f32.mxu0 0.0
    %1359 = vmatmul.mubr.f32.gmra.mrb[0].mxu0 %v1280
    %v1360 = vpop.f32.mrb[0].mxu0
    %v1361 = vadd.f32 0.0, %v1360
    %v1362 = vpop.f32.mrb[0].mxu0
    %1363 = vdwg.mxu0
    %1367 = vrot.lane.b32.xlu0 %v879, 8
    %v1368 = vpop.permute.xlu0 %1367
    %1369 = vrot.lane.b32.xlu0 %v884, 8
    %v1370 = vpop.permute.xlu0 %1369
    %1371 = vrot.lane.b32.xlu0 %v889, 8
    %v1372 = vpop.permute.xlu0 %1371
    %1379 = vrot.lane.b32.xlu0 %v1115, 16
    %v1380 = vpop.permute.xlu0 %1379
    %1381 = vrot.lane.b32.xlu0 %v1120, 16
    %v1382 = vpop.permute.xlu0 %1381
    %1383 = vrot.lane.b32.xlu0 %v1125, 16
    %v1384 = vpop.permute.xlu0 %1383
    %1391 = vrot.lane.b32.xlu0 %v1351, 24
    %v1392 = vpop.permute.xlu0 %1391
    %1393 = vrot.lane.b32.xlu0 %v1356, 24
    %v1394 = vpop.permute.xlu0 %1393
    %1395 = vrot.lane.b32.xlu0 %v1361, 24
    %v1396 = vpop.permute.xlu0 %1395
    %v1400 = vsel %vm428, %v643, %v1368
    %v1401 = vsel %vm428, %v648, %v1370
    %v1402 = vsel %vm428, %v653, %v1372
    %vm1403 = vcmask 130048
    %v1404 = vsel %vm1403, %v1400, %v1380
    %v1405 = vsel %vm1403, %v1401, %v1382
    %v1406 = vsel %vm1403, %v1402, %v1384
    %vm1407 = vcmask 195584
    %v1408 = vsel %vm1407, %v1404, %v1392
    %v1409 = vsel %vm1407, %v1405, %v1394
    %v1410 = vsel %vm1407, %v1406, %v1396
    %v1411 = vld [vmem:[%s10] sm:$0xff]
    %v1412 = vld [vmem:[%s10 + $0x8] sm:$0xff]
    %v1413 = vld [vmem:[%s10 + $0x10] sm:$0xff]
    %v1414 = vld [vmem:[%s10 + $0x18] sm:$0xff]
    %v1416 = vsel %vm197, %v1408, 0
    %v1419 = vsel %vm197, %v1409, 0
    %v1422 = vsel %vm197, %v1410, 0
    %1424 = vmatprep.subr.mxu0 0.0
    %1425 = vmatpush1.msra.mxu0 %v1411
    %1426 = vmatprep.subr.mxu0 0.0
    %1427 = vmatpush1.msra.mxu0 %v1412
    %1428 = vmatprep.subr.mxu0 0.0
    %1429 = vmatpush1.msra.mxu0 %v1413
    %1430 = vmatprep.subr.mxu0 0.0
    %1431 = vmatpush1.msra.mxu0 %v1414
    %1432 = vmatprep.subr.mxu0 0.0
    %1433 = vmatpush1.msra.mxu0 0.0
    %1434 = vmatprep.subr.mxu0 0.0
    %1435 = vmatpush1.msra.mxu0 0.0
    %1436 = vmatprep.subr.mxu0 0.0
    %1437 = vmatpush1.msra.mxu0 0.0
    %1438 = vmatprep.subr.mxu0 0.0
    %1439 = vmatpush1.msra.mxu0 0.0
    %1440 = vmatprep.subr.mxu0 0.0
    %1441 = vmatpush1.msra.mxu0 0.0
    %1442 = vmatprep.subr.mxu0 0.0
    %1443 = vmatpush1.msra.mxu0 0.0
    %1444 = vmatprep.subr.mxu0 0.0
    %1445 = vmatpush1.msra.mxu0 0.0
    %1446 = vmatprep.subr.mxu0 0.0
    %1447 = vmatpush1.msra.mxu0 0.0
    %1448 = vmatprep.subr.mxu0 0.0
    %1449 = vmatpush1.msra.mxu0 0.0
    %1450 = vmatprep.subr.mxu0 0.0
    %1451 = vmatpush1.msra.mxu0 0.0
    %1452 = vmatprep.subr.mxu0 0.0
    %1453 = vmatpush1.msra.mxu0 0.0
    %1454 = vmatprep.subr.mxu0 0.0
    %1455 = vmatpush1.msra.mxu0 0.0
    %1456 = vmatprep.subr.mxu0 0.0
    %1457 = vmatpush1.msra.mxu0 0.0
    %1458 = vmatprep.subr.mxu0 0.0
    %1459 = vmatpush1.msra.mxu0 0.0
    %1460 = vmatprep.subr.mxu0 0.0
    %1461 = vmatpush1.msra.mxu0 0.0
    %1462 = vmatprep.subr.mxu0 0.0
    %1463 = vmatpush1.msra.mxu0 0.0
    %1464 = vmatprep.subr.mxu0 0.0
    %1465 = vmatpush1.msra.mxu0 0.0
    %1466 = vmatprep.subr.mxu0 0.0
    %1467 = vmatpush1.msra.mxu0 0.0
    %1468 = vmatprep.subr.mxu0 0.0
    %1469 = vmatpush1.msra.mxu0 0.0
    %1470 = vmatprep.subr.mxu0 0.0
    %1471 = vmatpush1.msra.mxu0 0.0
    %1472 = vmatprep.subr.mxu0 0.0
    %1473 = vmatpush1.msra.mxu0 0.0
    %1474 = vmatprep.subr.mxu0 0.0
    %1475 = vmatpush1.msra.mxu0 0.0
    %1476 = vmatprep.subr.mxu0 0.0
    %1477 = vmatpush1.msra.mxu0 0.0
    %1478 = vmatprep.subr.mxu0 0.0
    %1479 = vmatpush1.msra.mxu0 0.0
    %1480 = vmatprep.subr.mxu0 0.0
    %1481 = vmatpush1.msra.mxu0 0.0
    %1482 = vmatprep.subr.mxu0 0.0
    %1483 = vmatpush1.msra.mxu0 0.0
    %1484 = vmatprep.subr.mxu0 0.0
    %1485 = vmatpush1.msra.mxu0 0.0
    %1486 = vmatprep.subr.mxu0 0.0
    %1487 = vmatpush1.msra.mxu0 0.0
    %1488 = vmatprep.mubr.f32.mxu0 0.0
    %1489 = vmatmul.mubr.f32.gmra.mrb[0].mxu0 %v1416
    %v1490 = vpop.f32.mrb[0].mxu0
    %v1491 = vadd.f32 0.0, %v1490
    %v1492 = vpop.f32.mrb[0].mxu0
    %1493 = vmatprep.mubr.f32.mxu0 0.0
    %1494 = vmatmul.mubr.f32.gmra.mrb[0].mxu0 %v1419
    %v1495 = vpop.f32.mrb[0].mxu0
    %v1496 = vadd.f32 0.0, %v1495
    %v1497 = vpop.f32.mrb[0].mxu0
    %1498 = vmatprep.mubr.f32.mxu0 0.0
    %1499 = vmatmul.mubr.f32.gmra.mrb[0].mxu0 %v1422
    %v1500 = vpop.f32.mrb[0].mxu0
    %v1501 = vadd.f32 0.0, %v1500
    %v1502 = vpop.f32.mrb[0].mxu0
    %1503 = vdwg.mxu0
    %v1504 = vadd.f32 %v254, %v1491
    %v1505 = vadd.f32 %v255, %v1496
    %v1506 = vadd.f32 %v256, %v1501
    %v1507 = vld [vmem:[%s11] sm:$0x1]
    %v1509 = vlaneseq
    %v1510 = vshrl.u32 %v1509, 7
    %v1511 = vsub.s32 0, %v1510
    %v1512 = vrot.slane %v1507, %v1511
    %v1514 = vadd.f32 %v1504, %v1512
    %v1515 = vadd.f32 %v1505, %v1512
    %v1516 = vadd.f32 %v1506, %v1512
    %v1517 = vld [vmem:[%s12] sm:$0x1]
    %v1518 = vld [vmem:[%s13] sm:$0x1]
    %v1519 = vsel %vm197, %v1514, 0.0
    %1520 = vadd.xlane.f32.xlu0 %v1519
    %v1521 = vpop.xlane.xlu0 %1520
    %v1522 = vsel %vm197, %v1515, 0.0
    %1523 = vadd.xlane.f32.xlu0 %v1522
    %v1524 = vpop.xlane.xlu0 %1523
    %v1525 = vsel %vm204, %v1516, 0.0
    %1526 = vadd.xlane.f32.xlu0 %v1525
    %v1527 = vpop.xlane.xlu0 %1526
    %v1528 = vmul.f32 %v1521, %v208
    %v1529 = vmul.f32 %v1524, %v208
    %v1530 = vmul.f32 %v1527, %v208
    %v1531 = vsub.f32 %v1514, %v1528
    %v1532 = vsub.f32 %v1515, %v1529
    %v1533 = vsub.f32 %v1516, %v1530
    %v1534 = vmul.f32 %v1531, %v1531
    %v1535 = vmul.f32 %v1532, %v1532
    %v1536 = vmul.f32 %v1533, %v1533
    %v1537 = vsel %vm197, %v1534, 0.0
    %1538 = vadd.xlane.f32.xlu0 %v1537
    %v1539 = vpop.xlane.xlu0 %1538
    %v1540 = vsel %vm197, %v1535, 0.0
    %1541 = vadd.xlane.f32.xlu0 %v1540
    %v1542 = vpop.xlane.xlu0 %1541
    %v1543 = vsel %vm204, %v1536, 0.0
    %1544 = vadd.xlane.f32.xlu0 %v1543
    %v1545 = vpop.xlane.xlu0 %1544
    %v1546 = vmul.f32 %v1539, %v208
    %v1547 = vmul.f32 %v1542, %v208
    %v1548 = vmul.f32 %v1545, %v208
    %v1549 = vadd.f32 %v1546, 1e-05
    %v1550 = vadd.f32 %v1547, 1e-05
    %v1551 = vadd.f32 %v1548, 1e-05
    %v1552 = vrsqrt.pop %v1549
    %v1553 = vrsqrt.pop %v1550
    %v1554 = vrsqrt.pop %v1551
    %v1555 = vmul.f32 %v1531, %v1552
    %v1556 = vmul.f32 %v1532, %v1553
    %v1557 = vmul.f32 %v1533, %v1554
    %v1559 = vlaneseq
    %v1560 = vshrl.u32 %v1559, 7
    %v1561 = vsub.s32 0, %v1560
    %v1562 = vrot.slane %v1517, %v1561
    %v1564 = vmul.f32 %v1555, %v1562
    %v1565 = vmul.f32 %v1556, %v1562
    %v1566 = vmul.f32 %v1557, %v1562
    %v1568 = vlaneseq
    %v1569 = vshrl.u32 %v1568, 7
    %v1570 = vsub.s32 0, %v1569
    %v1571 = vrot.slane %v1518, %v1570
    %v1573 = vadd.f32 %v1564, %v1571
    %v1574 = vadd.f32 %v1565, %v1571
    %v1575 = vadd.f32 %v1566, %v1571
    %v1576 = vld [vmem:[%s14] sm:$0xff]
    %v1577 = vld [vmem:[%s14 + $0x8] sm:$0xff]
    %v1578 = vld [vmem:[%s14 + $0x10] sm:$0xff]
    %v1579 = vld [vmem:[%s14 + $0x18] sm:$0xff]
    %v1580 = vld [vmem:[%s15] sm:$0x1]
    %v1582 = vlaneseq
    %v1583 = vshrl.u32 %v1582, 7
    %v1584 = vsub.s32 0, %v1583
    %v1585 = vrot.slane %v1580, %v1584
    %v1588 = vsel %vm197, %v1573, 0
    %v1591 = vsel %vm197, %v1574, 0
    %v1594 = vsel %vm197, %v1575, 0
    %1596 = vmatprep.subr.mxu0 0.0
    %1597 = vmatpush1.msra.mxu0 %v1576
    %1598 = vmatprep.subr.mxu0 0.0
    %1599 = vmatpush1.msra.mxu0 %v1577
    %1600 = vmatprep.subr.mxu0 0.0
    %1601 = vmatpush1.msra.mxu0 %v1578
    %1602 = vmatprep.subr.mxu0 0.0
    %1603 = vmatpush1.msra.mxu0 %v1579
    %1604 = vmatprep.subr.mxu0 0.0
    %1605 = vmatpush1.msra.mxu0 0.0
    %1606 = vmatprep.subr.mxu0 0.0
    %1607 = vmatpush1.msra.mxu0 0.0
    %1608 = vmatprep.subr.mxu0 0.0
    %1609 = vmatpush1.msra.mxu0 0.0
    %1610 = vmatprep.subr.mxu0 0.0
    %1611 = vmatpush1.msra.mxu0 0.0
    %1612 = vmatprep.subr.mxu0 0.0
    %1613 = vmatpush1.msra.mxu0 0.0
    %1614 = vmatprep.subr.mxu0 0.0
    %1615 = vmatpush1.msra.mxu0 0.0
    %1616 = vmatprep.subr.mxu0 0.0
    %1617 = vmatpush1.msra.mxu0 0.0
    %1618 = vmatprep.subr.mxu0 0.0
    %1619 = vmatpush1.msra.mxu0 0.0
    %1620 = vmatprep.subr.mxu0 0.0
    %1621 = vmatpush1.msra.mxu0 0.0
    %1622 = vmatprep.subr.mxu0 0.0
    %1623 = vmatpush1.msra.mxu0 0.0
    %1624 = vmatprep.subr.mxu0 0.0
    %1625 = vmatpush1.msra.mxu0 0.0
    %1626 = vmatprep.subr.mxu0 0.0
    %1627 = vmatpush1.msra.mxu0 0.0
    %1628 = vmatprep.subr.mxu0 0.0
    %1629 = vmatpush1.msra.mxu0 0.0
    %1630 = vmatprep.subr.mxu0 0.0
    %1631 = vmatpush1.msra.mxu0 0.0
    %1632 = vmatprep.subr.mxu0 0.0
    %1633 = vmatpush1.msra.mxu0 0.0
    %1634 = vmatprep.subr.mxu0 0.0
    %1635 = vmatpush1.msra.mxu0 0.0
    %1636 = vmatprep.subr.mxu0 0.0
    %1637 = vmatpush1.msra.mxu0 0.0
    %1638 = vmatprep.subr.mxu0 0.0
    %1639 = vmatpush1.msra.mxu0 0.0
    %1640 = vmatprep.subr.mxu0 0.0
    %1641 = vmatpush1.msra.mxu0 0.0
    %1642 = vmatprep.subr.mxu0 0.0
    %1643 = vmatpush1.msra.mxu0 0.0
    %1644 = vmatprep.subr.mxu0 0.0
    %1645 = vmatpush1.msra.mxu0 0.0
    %1646 = vmatprep.subr.mxu0 0.0
    %1647 = vmatpush1.msra.mxu0 0.0
    %1648 = vmatprep.subr.mxu0 0.0
    %1649 = vmatpush1.msra.mxu0 0.0
    %1650 = vmatprep.subr.mxu0 0.0
    %1651 = vmatpush1.msra.mxu0 0.0
    %1652 = vmatprep.subr.mxu0 0.0
    %1653 = vmatpush1.msra.mxu0 0.0
    %1654 = vmatprep.subr.mxu0 0.0
    %1655 = vmatpush1.msra.mxu0 0.0
    %1656 = vmatprep.subr.mxu0 0.0
    %1657 = vmatpush1.msra.mxu0 0.0
    %1658 = vmatprep.subr.mxu0 0.0
    %1659 = vmatpush1.msra.mxu0 0.0
    %1660 = vmatprep.mubr.f32.mxu0 0.0
    %1661 = vmatmul.mubr.f32.gmra.mrb[0].mxu0 %v1588
    %v1662 = vpop.f32.mrb[0].mxu0
    %v1663 = vadd.f32 %v1585, %v1662
    %v1664 = vpop.f32.mrb[0].mxu0
    %1665 = vmatprep.mubr.f32.mxu0 0.0
    %1666 = vmatmul.mubr.f32.gmra.mrb[0].mxu0 %v1591
    %v1667 = vpop.f32.mrb[0].mxu0
    %v1668 = vadd.f32 %v1585, %v1667
    %v1669 = vpop.f32.mrb[0].mxu0
    %1670 = vmatprep.mubr.f32.mxu0 0.0
    %1671 = vmatmul.mubr.f32.gmra.mrb[0].mxu0 %v1594
    %v1672 = vpop.f32.mrb[0].mxu0
    %v1673 = vadd.f32 %v1585, %v1672
    %v1674 = vpop.f32.mrb[0].mxu0
    %1675 = vdwg.mxu0
    %v1676 = vmul.f32 %v1663, 1.702
    %v1677 = vmul.f32 %v1668, 1.702
    %v1678 = vmul.f32 %v1673, 1.702
    %v1679 = vxor.u32 %v1676, 2147483648
    %v1680 = vxor.u32 %v1677, 2147483648
    %v1681 = vxor.u32 %v1678, 2147483648
    %v1682 = vmul.f32 %v1679, 1.442695
    %v1683 = vpow.pop %v1682
    %v1684 = vmul.f32 %v1680, 1.442695
    %v1685 = vpow.pop %v1684
    %v1686 = vmul.f32 %v1681, 1.442695
    %v1687 = vpow.pop %v1686
    %v1688 = vadd.f32 %v1683, 1.0
    %v1689 = vadd.f32 %v1685, 1.0
    %v1690 = vadd.f32 %v1687, 1.0
    %v1691 = vrcp.pop %v1688
    %v1692 = vmul.f32 1.0, %v1691
    %v1693 = vrcp.pop %v1689
    %v1694 = vmul.f32 1.0, %v1693
    %v1695 = vrcp.pop %v1690
    %v1696 = vmul.f32 1.0, %v1695
    %v1697 = vmul.f32 %v1663, %v1692
    %v1698 = vmul.f32 %v1668, %v1694
    %v1699 = vmul.f32 %v1673, %v1696
    %v1700 = vld [vmem:[%s16] sm:$0xff]
    %v1701 = vld [vmem:[%s16 + $0x8] sm:$0xff]
    %v1702 = vld [vmem:[%s16 + $0x10] sm:$0xff]
    %v1703 = vld [vmem:[%s16 + $0x18] sm:$0xff]
    %v1704 = vld [vmem:[%s16 + $0x20] sm:$0xff]
    %v1705 = vld [vmem:[%s16 + $0x28] sm:$0xff]
    %v1706 = vld [vmem:[%s16 + $0x30] sm:$0xff]
    %v1707 = vld [vmem:[%s16 + $0x38] sm:$0xff]
    %v1709 = vsel %vm105, %v1697, 0
    %v1712 = vsel %vm105, %v1698, 0
    %v1715 = vsel %vm105, %v1699, 0
    %1717 = vmatprep.subr.mxu0 0.0
    %1718 = vmatpush1.msra.mxu0 %v1700
    %1719 = vmatprep.subr.mxu0 0.0
    %1720 = vmatpush1.msra.mxu0 %v1701
    %1721 = vmatprep.subr.mxu0 0.0
    %1722 = vmatpush1.msra.mxu0 %v1702
    %1723 = vmatprep.subr.mxu0 0.0
    %1724 = vmatpush1.msra.mxu0 %v1703
    %1725 = vmatprep.subr.mxu0 0.0
    %1726 = vmatpush1.msra.mxu0 %v1704
    %1727 = vmatprep.subr.mxu0 0.0
    %1728 = vmatpush1.msra.mxu0 %v1705
    %1729 = vmatprep.subr.mxu0 0.0
    %1730 = vmatpush1.msra.mxu0 %v1706
    %1731 = vmatprep.subr.mxu0 0.0
    %1732 = vmatpush1.msra.mxu0 %v1707
    %1733 = vmatprep.subr.mxu0 0.0
    %1734 = vmatpush1.msra.mxu0 0.0
    %1735 = vmatprep.subr.mxu0 0.0
    %1736 = vmatpush1.msra.mxu0 0.0
    %1737 = vmatprep.subr.mxu0 0.0
    %1738 = vmatpush1.msra.mxu0 0.0
    %1739 = vmatprep.subr.mxu0 0.0
    %1740 = vmatpush1.msra.mxu0 0.0
    %1741 = vmatprep.subr.mxu0 0.0
    %1742 = vmatpush1.msra.mxu0 0.0
    %1743 = vmatprep.subr.mxu0 0.0
    %1744 = vmatpush1.msra.mxu0 0.0
    %1745 = vmatprep.subr.mxu0 0.0
    %1746 = vmatpush1.msra.mxu0 0.0
    %1747 = vmatprep.subr.mxu0 0.0
    %1748 = vmatpush1.msra.mxu0 0.0
    %1749 = vmatprep.subr.mxu0 0.0
    %1750 = vmatpush1.msra.mxu0 0.0
    %1751 = vmatprep.subr.mxu0 0.0
    %1752 = vmatpush1.msra.mxu0 0.0
    %1753 = vmatprep.subr.mxu0 0.0
    %1754 = vmatpush1.msra.mxu0 0.0
    %1755 = vmatprep.subr.mxu0 0.0
    %1756 = vmatpush1.msra.mxu0 0.0
    %1757 = vmatprep.subr.mxu0 0.0
    %1758 = vmatpush1.msra.mxu0 0.0
    %1759 = vmatprep.subr.mxu0 0.0
    %1760 = vmatpush1.msra.mxu0 0.0
    %1761 = vmatprep.subr.mxu0 0.0
    %1762 = vmatpush1.msra.mxu0 0.0
    %1763 = vmatprep.subr.mxu0 0.0
    %1764 = vmatpush1.msra.mxu0 0.0
    %1765 = vmatprep.subr.mxu0 0.0
    %1766 = vmatpush1.msra.mxu0 0.0
    %1767 = vmatprep.subr.mxu0 0.0
    %1768 = vmatpush1.msra.mxu0 0.0
    %1769 = vmatprep.subr.mxu0 0.0
    %1770 = vmatpush1.msra.mxu0 0.0
    %1771 = vmatprep.subr.mxu0 0.0
    %1772 = vmatpush1.msra.mxu0 0.0
    %1773 = vmatprep.subr.mxu0 0.0
    %1774 = vmatpush1.msra.mxu0 0.0
    %1775 = vmatprep.subr.mxu0 0.0
    %1776 = vmatpush1.msra.mxu0 0.0
    %1777 = vmatprep.subr.mxu0 0.0
    %1778 = vmatpush1.msra.mxu0 0.0
    %1779 = vmatprep.subr.mxu0 0.0
    %1780 = vmatpush1.msra.mxu0 0.0
    %1781 = vmatprep.mubr.f32.mxu0 0.0
    %1782 = vmatmul.mubr.f32.gmra.mrb[0].mxu0 %v1709
    %v1783 = vpop.f32.mrb[0].mxu0
    %v1784 = vadd.f32 0.0, %v1783
    %v1785 = vpop.f32.mrb[0].mxu0
    %1786 = vmatprep.mubr.f32.mxu0 0.0
    %1787 = vmatmul.mubr.f32.gmra.mrb[0].mxu0 %v1712
    %v1788 = vpop.f32.mrb[0].mxu0
    %v1789 = vadd.f32 0.0, %v1788
    %v1790 = vpop.f32.mrb[0].mxu0
    %1791 = vmatprep.mubr.f32.mxu0 0.0
    %1792 = vmatmul.mubr.f32.gmra.mrb[0].mxu0 %v1715
    %v1793 = vpop.f32.mrb[0].mxu0
    %v1794 = vadd.f32 0.0, %v1793
    %v1795 = vpop.f32.mrb[0].mxu0
    %1796 = vdwg.mxu0
    %v1797 = vadd.f32 %v1514, %v1784
    %v1798 = vadd.f32 %v1515, %v1789
    %v1799 = vadd.f32 %v1516, %v1794
    %v1800 = vld [vmem:[%s17] sm:$0x1]
    %v1802 = vlaneseq
    %v1803 = vshrl.u32 %v1802, 7
    %v1804 = vsub.s32 0, %v1803
    %v1805 = vrot.slane %v1800, %v1804
    %v1807 = vadd.f32 %v1797, %v1805
    %v1808 = vadd.f32 %v1798, %v1805
    %v1809 = vadd.f32 %v1799, %v1805
    %s1810 = scalar_lea.vmem %s6, 1
    %v1811 = vld [vmem:[%s1810] sm:$0x1]
    %s1812 = scalar_lea.vmem %s7, 1
    %v1813 = vld [vmem:[%s1812] sm:$0x1]
    %v1814 = vsel %vm197, %v1807, 0.0
    %1815 = vadd.xlane.f32.xlu0 %v1814
    %v1816 = vpop.xlane.xlu0 %1815
    %v1817 = vsel %vm197, %v1808, 0.0
    %1818 = vadd.xlane.f32.xlu0 %v1817
    %v1819 = vpop.xlane.xlu0 %1818
    %v1820 = vsel %vm204, %v1809, 0.0
    %1821 = vadd.xlane.f32.xlu0 %v1820
    %v1822 = vpop.xlane.xlu0 %1821
    %v1823 = vmul.f32 %v1816, %v208
    %v1824 = vmul.f32 %v1819, %v208
    %v1825 = vmul.f32 %v1822, %v208
    %v1826 = vsub.f32 %v1807, %v1823
    %v1827 = vsub.f32 %v1808, %v1824
    %v1828 = vsub.f32 %v1809, %v1825
    %v1829 = vmul.f32 %v1826, %v1826
    %v1830 = vmul.f32 %v1827, %v1827
    %v1831 = vmul.f32 %v1828, %v1828
    %v1832 = vsel %vm197, %v1829, 0.0
    %1833 = vadd.xlane.f32.xlu0 %v1832
    %v1834 = vpop.xlane.xlu0 %1833
    %v1835 = vsel %vm197, %v1830, 0.0
    %1836 = vadd.xlane.f32.xlu0 %v1835
    %v1837 = vpop.xlane.xlu0 %1836
    %v1838 = vsel %vm204, %v1831, 0.0
    %1839 = vadd.xlane.f32.xlu0 %v1838
    %v1840 = vpop.xlane.xlu0 %1839
    %v1841 = vmul.f32 %v1834, %v208
    %v1842 = vmul.f32 %v1837, %v208
    %v1843 = vmul.f32 %v1840, %v208
    %v1844 = vadd.f32 %v1841, 1e-05
    %v1845 = vadd.f32 %v1842, 1e-05
    %v1846 = vadd.f32 %v1843, 1e-05
    %v1847 = vrsqrt.pop %v1844
    %v1848 = vrsqrt.pop %v1845
    %v1849 = vrsqrt.pop %v1846
    %v1850 = vmul.f32 %v1826, %v1847
    %v1851 = vmul.f32 %v1827, %v1848
    %v1852 = vmul.f32 %v1828, %v1849
    %v1854 = vlaneseq
    %v1855 = vshrl.u32 %v1854, 7
    %v1856 = vsub.s32 0, %v1855
    %v1857 = vrot.slane %v1811, %v1856
    %v1859 = vmul.f32 %v1850, %v1857
    %v1860 = vmul.f32 %v1851, %v1857
    %v1861 = vmul.f32 %v1852, %v1857
    %v1863 = vlaneseq
    %v1864 = vshrl.u32 %v1863, 7
    %v1865 = vsub.s32 0, %v1864
    %v1866 = vrot.slane %v1813, %v1865
    %v1868 = vadd.f32 %v1859, %v1866
    %v1869 = vadd.f32 %v1860, %v1866
    %v1870 = vadd.f32 %v1861, %v1866
    %s1871 = scalar_lea.vmem %s8, 32
    %v1872 = vld [vmem:[%s1871] sm:$0xff]
    %v1873 = vld [vmem:[%s1871 + $0x8] sm:$0xff]
    %v1874 = vld [vmem:[%s1871 + $0x10] sm:$0xff]
    %v1875 = vld [vmem:[%s1871 + $0x18] sm:$0xff]
    %s1876 = scalar_lea.vmem %s9, 1
    %v1877 = vld [vmem:[%s1876] sm:$0x1]
    %v1879 = vlaneseq
    %v1880 = vshrl.u32 %v1879, 7
    %v1881 = vsub.s32 0, %v1880
    %v1882 = vrot.slane %v1877, %v1881
    %v1885 = vsel %vm197, %v1868, 0
    %v1888 = vsel %vm197, %v1869, 0
    %v1891 = vsel %vm197, %v1870, 0
    %1893 = vmatprep.subr.mxu0 0.0
    %1894 = vmatpush1.msra.mxu0 %v1872
    %1895 = vmatprep.subr.mxu0 0.0
    %1896 = vmatpush1.msra.mxu0 %v1873
    %1897 = vmatprep.subr.mxu0 0.0
    %1898 = vmatpush1.msra.mxu0 %v1874
    %1899 = vmatprep.subr.mxu0 0.0
    %1900 = vmatpush1.msra.mxu0 %v1875
    %1901 = vmatprep.subr.mxu0 0.0
    %1902 = vmatpush1.msra.mxu0 0.0
    %1903 = vmatprep.subr.mxu0 0.0
    %1904 = vmatpush1.msra.mxu0 0.0
    %1905 = vmatprep.subr.mxu0 0.0
    %1906 = vmatpush1.msra.mxu0 0.0
    %1907 = vmatprep.subr.mxu0 0.0
    %1908 = vmatpush1.msra.mxu0 0.0
    %1909 = vmatprep.subr.mxu0 0.0
    %1910 = vmatpush1.msra.mxu0 0.0
    %1911 = vmatprep.subr.mxu0 0.0
    %1912 = vmatpush1.msra.mxu0 0.0
    %1913 = vmatprep.subr.mxu0 0.0
    %1914 = vmatpush1.msra.mxu0 0.0
    %1915 = vmatprep.subr.mxu0 0.0
    %1916 = vmatpush1.msra.mxu0 0.0
    %1917 = vmatprep.subr.mxu0 0.0
    %1918 = vmatpush1.msra.mxu0 0.0
    %1919 = vmatprep.subr.mxu0 0.0
    %1920 = vmatpush1.msra.mxu0 0.0
    %1921 = vmatprep.subr.mxu0 0.0
    %1922 = vmatpush1.msra.mxu0 0.0
    %1923 = vmatprep.subr.mxu0 0.0
    %1924 = vmatpush1.msra.mxu0 0.0
    %1925 = vmatprep.subr.mxu0 0.0
    %1926 = vmatpush1.msra.mxu0 0.0
    %1927 = vmatprep.subr.mxu0 0.0
    %1928 = vmatpush1.msra.mxu0 0.0
    %1929 = vmatprep.subr.mxu0 0.0
    %1930 = vmatpush1.msra.mxu0 0.0
    %1931 = vmatprep.subr.mxu0 0.0
    %1932 = vmatpush1.msra.mxu0 0.0
    %1933 = vmatprep.subr.mxu0 0.0
    %1934 = vmatpush1.msra.mxu0 0.0
    %1935 = vmatprep.subr.mxu0 0.0
    %1936 = vmatpush1.msra.mxu0 0.0
    %1937 = vmatprep.subr.mxu0 0.0
    %1938 = vmatpush1.msra.mxu0 0.0
    %1939 = vmatprep.subr.mxu0 0.0
    %1940 = vmatpush1.msra.mxu0 0.0
    %1941 = vmatprep.subr.mxu0 0.0
    %1942 = vmatpush1.msra.mxu0 0.0
    %1943 = vmatprep.subr.mxu0 0.0
    %1944 = vmatpush1.msra.mxu0 0.0
    %1945 = vmatprep.subr.mxu0 0.0
    %1946 = vmatpush1.msra.mxu0 0.0
    %1947 = vmatprep.subr.mxu0 0.0
    %1948 = vmatpush1.msra.mxu0 0.0
    %1949 = vmatprep.subr.mxu0 0.0
    %1950 = vmatpush1.msra.mxu0 0.0
    %1951 = vmatprep.subr.mxu0 0.0
    %1952 = vmatpush1.msra.mxu0 0.0
    %1953 = vmatprep.subr.mxu0 0.0
    %1954 = vmatpush1.msra.mxu0 0.0
    %1955 = vmatprep.subr.mxu0 0.0
    %1956 = vmatpush1.msra.mxu0 0.0
    %1957 = vmatprep.mubr.f32.mxu0 0.0
    %1958 = vmatmul.mubr.f32.gmra.mrb[0].mxu0 %v1885
    %v1959 = vpop.f32.mrb[0].mxu0
    %v1960 = vadd.f32 %v1882, %v1959
    %v1961 = vpop.f32.mrb[0].mxu0
    %1962 = vmatprep.mubr.f32.mxu0 0.0
    %1963 = vmatmul.mubr.f32.gmra.mrb[0].mxu0 %v1888
    %v1964 = vpop.f32.mrb[0].mxu0
    %v1965 = vadd.f32 %v1882, %v1964
    %v1966 = vpop.f32.mrb[0].mxu0
    %1967 = vmatprep.mubr.f32.mxu0 0.0
    %1968 = vmatmul.mubr.f32.gmra.mrb[0].mxu0 %v1891
    %v1969 = vpop.f32.mrb[0].mxu0
    %v1970 = vadd.f32 %v1882, %v1969
    %v1971 = vpop.f32.mrb[0].mxu0
    %1972 = vdwg.mxu0
    %1976 = vrot.lane.b32.xlu0 %v1960, 96
    %v1977 = vpop.permute.xlu0 %1976
    %1978 = vrot.lane.b32.xlu0 %v1965, 96
    %v1979 = vpop.permute.xlu0 %1978
    %1980 = vrot.lane.b32.xlu0 %v1970, 96
    %v1981 = vpop.permute.xlu0 %1980
    %v1982 = vsel %vm428, %v1960, 0
    %v1984 = vsel %vm428, %v1965, 0
    %v1986 = vsel %vm428, %v1970, 0
    %v1988 = vsel %vm428, %v1977, 0
    %v1990 = vsel %vm428, %v1979, 0
    %v1992 = vsel %vm428, %v1981, 0
    %1994 = vmatprep.subr.mxu0 0.0
    %1995 = vmatpush1.xpose.msra.mxu0 %v1988
    %1996 = vmatprep.subr.mxu0 0.0
    %1997 = vmatpush1.xpose.msra.mxu0 %v1990
    %1998 = vmatprep.subr.mxu0 0.0
    %1999 = vmatpush1.xpose.msra.mxu0 %v1992
    %2000 = vmatprep.subr.mxu0 0.0
    %2001 = vmatpush1.xpose.msra.mxu0 0.0
    %2002 = vmatprep.subr.mxu0 0.0
    %2003 = vmatpush1.xpose.msra.mxu0 0.0
    %2004 = vmatprep.subr.mxu0 0.0
    %2005 = vmatpush1.xpose.msra.mxu0 0.0
    %2006 = vmatprep.subr.mxu0 0.0
    %2007 = vmatpush1.xpose.msra.mxu0 0.0
    %2008 = vmatprep.subr.mxu0 0.0
    %2009 = vmatpush1.xpose.msra.mxu0 0.0
    %2010 = vmatprep.subr.mxu0 0.0
    %2011 = vmatpush1.xpose.msra.mxu0 0.0
    %2012 = vmatprep.subr.mxu0 0.0
    %2013 = vmatpush1.xpose.msra.mxu0 0.0
    %2014 = vmatprep.subr.mxu0 0.0
    %2015 = vmatpush1.xpose.msra.mxu0 0.0
    %2016 = vmatprep.subr.mxu0 0.0
    %2017 = vmatpush1.xpose.msra.mxu0 0.0
    %2018 = vmatprep.subr.mxu0 0.0
    %2019 = vmatpush1.xpose.msra.mxu0 0.0
    %2020 = vmatprep.subr.mxu0 0.0
    %2021 = vmatpush1.xpose.msra.mxu0 0.0
    %2022 = vmatprep.subr.mxu0 0.0
    %2023 = vmatpush1.xpose.msra.mxu0 0.0
    %2024 = vmatprep.subr.mxu0 0.0
    %2025 = vmatpush1.xpose.msra.mxu0 0.0
    %2026 = vmatprep.subr.mxu0 0.0
    %2027 = vmatpush1.xpose.msra.mxu0 0.0
    %2028 = vmatprep.subr.mxu0 0.0
    %2029 = vmatpush1.xpose.msra.mxu0 0.0
    %2030 = vmatprep.subr.mxu0 0.0
    %2031 = vmatpush1.xpose.msra.mxu0 0.0
    %2032 = vmatprep.subr.mxu0 0.0
    %2033 = vmatpush1.xpose.msra.mxu0 0.0
    %2034 = vmatprep.subr.mxu0 0.0
    %2035 = vmatpush1.xpose.msra.mxu0 0.0
    %2036 = vmatprep.subr.mxu0 0.0
    %2037 = vmatpush1.xpose.msra.mxu0 0.0
    %2038 = vmatprep.subr.mxu0 0.0
    %2039 = vmatpush1.xpose.msra.mxu0 0.0
    %2040 = vmatprep.subr.mxu0 0.0
    %2041 = vmatpush1.xpose.msra.mxu0 0.0
    %2042 = vmatprep.subr.mxu0 0.0
    %2043 = vmatpush1.xpose.msra.mxu0 0.0
    %2044 = vmatprep.subr.mxu0 0.0
    %2045 = vmatpush1.xpose.msra.mxu0 0.0
    %2046 = vmatprep.subr.mxu0 0.0
    %2047 = vmatpush1.xpose.msra.mxu0 0.0
    %2048 = vmatprep.subr.mxu0 0.0
    %2049 = vmatpush1.xpose.msra.mxu0 0.0
    %2050 = vmatprep.subr.mxu0 0.0
    %2051 = vmatpush1.xpose.msra.mxu0 0.0
    %2052 = vmatprep.subr.mxu0 0.0
    %2053 = vmatpush1.xpose.msra.mxu0 0.0
    %2054 = vmatprep.subr.mxu0 0.0
    %2055 = vmatpush1.xpose.msra.mxu0 0.0
    %2056 = vmatprep.subr.mxu0 0.0
    %2057 = vmatpush1.xpose.msra.mxu0 0.0
    %2058 = vmatprep.mubr.f32.mxu0 0.0
    %2059 = vmatmul.mubr.f32.gmra.mrb[0].mxu0 %v1982
    %v2060 = vpop.f32.mrb[0].mxu0
    %v2061 = vadd.f32 %v257, %v2060
    %v2062 = vpop.f32.mrb[0].mxu0
    %2063 = vmatprep.mubr.f32.mxu0 0.0
    %2064 = vmatmul.mubr.f32.gmra.mrb[0].mxu0 %v1984
    %v2065 = vpop.f32.mrb[0].mxu0
    %v2066 = vadd.f32 %v258, %v2065
    %v2067 = vpop.f32.mrb[0].mxu0
    %2068 = vmatprep.mubr.f32.mxu0 0.0
    %2069 = vmatmul.mubr.f32.gmra.mrb[0].mxu0 %v1986
    %v2070 = vpop.f32.mrb[0].mxu0
    %v2071 = vadd.f32 %v259, %v2070
    %v2072 = vpop.f32.mrb[0].mxu0
    %2073 = vdwg.mxu0
    %v2074 = vsel %vm521, %v2061, -inf
    %2075 = vmax.xlane.f32.xlu0 %v2074
    %v2076 = vpop.xlane.xlu0 %2075
    %v2077 = vsel %vm521, %v2066, -inf
    %2078 = vmax.xlane.f32.xlu0 %v2077
    %v2079 = vpop.xlane.xlu0 %2078
    %v2080 = vsel %vm528, %v2071, -inf
    %2081 = vmax.xlane.f32.xlu0 %v2080
    %v2082 = vpop.xlane.xlu0 %2081
    %v2083 = vsub.f32 %v2061, %v2076
    %v2084 = vsub.f32 %v2066, %v2079
    %v2085 = vsub.f32 %v2071, %v2082
    %v2086 = vmul.f32 %v2083, 1.442695
    %v2087 = vpow.pop %v2086
    %v2088 = vmul.f32 %v2084, 1.442695
    %v2089 = vpow.pop %v2088
    %v2090 = vmul.f32 %v2085, 1.442695
    %v2091 = vpow.pop %v2090
    %v2092 = vsel %vm521, %v2087, 0.0
    %2093 = vadd.xlane.f32.xlu0 %v2092
    %v2094 = vpop.xlane.xlu0 %2093
    %v2095 = vsel %vm521, %v2089, 0.0
    %2096 = vadd.xlane.f32.xlu0 %v2095
    %v2097 = vpop.xlane.xlu0 %2096
    %v2098 = vsel %vm528, %v2091, 0.0
    %2099 = vadd.xlane.f32.xlu0 %v2098
    %v2100 = vpop.xlane.xlu0 %2099
    %v2101 = vrcp.pop %v2094
    %v2102 = vrcp.pop %v2097
    %v2103 = vrcp.pop %v2100
    %v2104 = vmul.f32 %v2087, %v2101
    %v2105 = vmul.f32 %v2089, %v2102
    %v2106 = vmul.f32 %v2091, %v2103
    %2107 = vrot.lane.b32.xlu0 %v1960, 64
    %v2108 = vpop.permute.xlu0 %2107
    %2109 = vrot.lane.b32.xlu0 %v1965, 64
    %v2110 = vpop.permute.xlu0 %2109
    %2111 = vrot.lane.b32.xlu0 %v1970, 64
    %v2112 = vpop.permute.xlu0 %2111
    %v2116 = vsel %vm521, %v2104, 0
    %v2119 = vsel %vm521, %v2105, 0
    %v2122 = vsel %vm521, %v2106, 0
    %v2124 = vsel %vm573, %v2112, 0
    %2126 = vmatprep.subr.mxu0 0.0
    %2127 = vmatpush1.msra.mxu0 %v2108
    %2128 = vmatprep.subr.mxu0 0.0
    %2129 = vmatpush1.msra.mxu0 %v2110
    %2130 = vmatprep.subr.mxu0 0.0
    %2131 = vmatpush1.msra.mxu0 %v2124
    %2132 = vmatprep.subr.mxu0 0.0
    %2133 = vmatpush1.msra.mxu0 0.0
    %2134 = vmatprep.subr.mxu0 0.0
    %2135 = vmatpush1.msra.mxu0 0.0
    %2136 = vmatprep.subr.mxu0 0.0
    %2137 = vmatpush1.msra.mxu0 0.0
    %2138 = vmatprep.subr.mxu0 0.0
    %2139 = vmatpush1.msra.mxu0 0.0
    %2140 = vmatprep.subr.mxu0 0.0
    %2141 = vmatpush1.msra.mxu0 0.0
    %2142 = vmatprep.subr.mxu0 0.0
    %2143 = vmatpush1.msra.mxu0 0.0
    %2144 = vmatprep.subr.mxu0 0.0
    %2145 = vmatpush1.msra.mxu0 0.0
    %2146 = vmatprep.subr.mxu0 0.0
    %2147 = vmatpush1.msra.mxu0 0.0
    %2148 = vmatprep.subr.mxu0 0.0
    %2149 = vmatpush1.msra.mxu0 0.0
    %2150 = vmatprep.subr.mxu0 0.0
    %2151 = vmatpush1.msra.mxu0 0.0
    %2152 = vmatprep.subr.mxu0 0.0
    %2153 = vmatpush1.msra.mxu0 0.0
    %2154 = vmatprep.subr.mxu0 0.0
    %2155 = vmatpush1.msra.mxu0 0.0
    %2156 = vmatprep.subr.mxu0 0.0
    %2157 = vmatpush1.msra.mxu0 0.0
    %2158 = vmatprep.subr.mxu0 0.0
    %2159 = vmatpush1.msra.mxu0 0.0
    %2160 = vmatprep.subr.mxu0 0.0
    %2161 = vmatpush1.msra.mxu0 0.0
    %2162 = vmatprep.subr.mxu0 0.0
    %2163 = vmatpush1.msra.mxu0 0.0
    %2164 = vmatprep.subr.mxu0 0.0
    %2165 = vmatpush1.msra.mxu0 0.0
    %2166 = vmatprep.subr.mxu0 0.0
    %2167 = vmatpush1.msra.mxu0 0.0
    %2168 = vmatprep.subr.mxu0 0.0
    %2169 = vmatpush1.msra.mxu0 0.0
    %2170 = vmatprep.subr.mxu0 0.0
    %2171 = vmatpush1.msra.mxu0 0.0
    %2172 = vmatprep.subr.mxu0 0.0
    %2173 = vmatpush1.msra.mxu0 0.0
    %2174 = vmatprep.subr.mxu0 0.0
    %2175 = vmatpush1.msra.mxu0 0.0
    %2176 = vmatprep.subr.mxu0 0.0
    %2177 = vmatpush1.msra.mxu0 0.0
    %2178 = vmatprep.subr.mxu0 0.0
    %2179 = vmatpush1.msra.mxu0 0.0
    %2180 = vmatprep.subr.mxu0 0.0
    %2181 = vmatpush1.msra.mxu0 0.0
    %2182 = vmatprep.subr.mxu0 0.0
    %2183 = vmatpush1.msra.mxu0 0.0
    %2184 = vmatprep.subr.mxu0 0.0
    %2185 = vmatpush1.msra.mxu0 0.0
    %2186 = vmatprep.subr.mxu0 0.0
    %2187 = vmatpush1.msra.mxu0 0.0
    %2188 = vmatprep.subr.mxu0 0.0
    %2189 = vmatpush1.msra.mxu0 0.0
    %2190 = vmatprep.mubr.f32.mxu0 0.0
    %2191 = vmatmul.mubr.f32.gmra.mrb[0].mxu0 %v2116
    %v2192 = vpop.f32.mrb[0].mxu0
    %v2193 = vadd.f32 0.0, %v2192
    %v2194 = vpop.f32.mrb[0].mxu0
    %2195 = vmatprep.mubr.f32.mxu0 0.0
    %2196 = vmatmul.mubr.f32.gmra.mrb[0].mxu0 %v2119
    %v2197 = vpop.f32.mrb[0].mxu0
    %v2198 = vadd.f32 0.0, %v2197
    %v2199 = vpop.f32.mrb[0].mxu0
    %2200 = vmatprep.mubr.f32.mxu0 0.0
    %2201 = vmatmul.mubr.f32.gmra.mrb[0].mxu0 %v2122
    %v2202 = vpop.f32.mrb[0].mxu0
    %v2203 = vadd.f32 0.0, %v2202
    %v2204 = vpop.f32.mrb[0].mxu0
    %2205 = vdwg.mxu0
    %2206 = vrot.lane.b32.xlu0 %v1960, 120
    %v2207 = vpop.permute.xlu0 %2206
    %2208 = vrot.lane.b32.xlu0 %v1965, 120
    %v2209 = vpop.permute.xlu0 %2208
    %2210 = vrot.lane.b32.xlu0 %v1970, 120
    %v2211 = vpop.permute.xlu0 %2210
    %2212 = vrot.lane.b32.xlu0 %v1960, 88
    %v2213 = vpop.permute.xlu0 %2212
    %2214 = vrot.lane.b32.xlu0 %v1965, 88
    %v2215 = vpop.permute.xlu0 %2214
    %2216 = vrot.lane.b32.xlu0 %v1970, 88
    %v2217 = vpop.permute.xlu0 %2216
    %v2218 = vsel %vm428, %v2207, 0
    %v2220 = vsel %vm428, %v2209, 0
    %v2222 = vsel %vm428, %v2211, 0
    %v2224 = vsel %vm428, %v2213, 0
    %v2226 = vsel %vm428, %v2215, 0
    %v2228 = vsel %vm428, %v2217, 0
    %2230 = vmatprep.subr.mxu0 0.0
    %2231 = vmatpush1.xpose.msra.mxu0 %v2224
    %2232 = vmatprep.subr.mxu0 0.0
    %2233 = vmatpush1.xpose.msra.mxu0 %v2226
    %2234 = vmatprep.subr.mxu0 0.0
    %2235 = vmatpush1.xpose.msra.mxu0 %v2228
    %2236 = vmatprep.subr.mxu0 0.0
    %2237 = vmatpush1.xpose.msra.mxu0 0.0
    %2238 = vmatprep.subr.mxu0 0.0
    %2239 = vmatpush1.xpose.msra.mxu0 0.0
    %2240 = vmatprep.subr.mxu0 0.0
    %2241 = vmatpush1.xpose.msra.mxu0 0.0
    %2242 = vmatprep.subr.mxu0 0.0
    %2243 = vmatpush1.xpose.msra.mxu0 0.0
    %2244 = vmatprep.subr.mxu0 0.0
    %2245 = vmatpush1.xpose.msra.mxu0 0.0
    %2246 = vmatprep.subr.mxu0 0.0
    %2247 = vmatpush1.xpose.msra.mxu0 0.0
    %2248 = vmatprep.subr.mxu0 0.0
    %2249 = vmatpush1.xpose.msra.mxu0 0.0
    %2250 = vmatprep.subr.mxu0 0.0
    %2251 = vmatpush1.xpose.msra.mxu0 0.0
    %2252 = vmatprep.subr.mxu0 0.0
    %2253 = vmatpush1.xpose.msra.mxu0 0.0
    %2254 = vmatprep.subr.mxu0 0.0
    %2255 = vmatpush1.xpose.msra.mxu0 0.0
    %2256 = vmatprep.subr.mxu0 0.0
    %2257 = vmatpush1.xpose.msra.mxu0 0.0
    %2258 = vmatprep.subr.mxu0 0.0
    %2259 = vmatpush1.xpose.msra.mxu0 0.0
    %2260 = vmatprep.subr.mxu0 0.0
    %2261 = vmatpush1.xpose.msra.mxu0 0.0
    %2262 = vmatprep.subr.mxu0 0.0
    %2263 = vmatpush1.xpose.msra.mxu0 0.0
    %2264 = vmatprep.subr.mxu0 0.0
    %2265 = vmatpush1.xpose.msra.mxu0 0.0
    %2266 = vmatprep.subr.mxu0 0.0
    %2267 = vmatpush1.xpose.msra.mxu0 0.0
    %2268 = vmatprep.subr.mxu0 0.0
    %2269 = vmatpush1.xpose.msra.mxu0 0.0
    %2270 = vmatprep.subr.mxu0 0.0
    %2271 = vmatpush1.xpose.msra.mxu0 0.0
    %2272 = vmatprep.subr.mxu0 0.0
    %2273 = vmatpush1.xpose.msra.mxu0 0.0
    %2274 = vmatprep.subr.mxu0 0.0
    %2275 = vmatpush1.xpose.msra.mxu0 0.0
    %2276 = vmatprep.subr.mxu0 0.0
    %2277 = vmatpush1.xpose.msra.mxu0 0.0
    %2278 = vmatprep.subr.mxu0 0.0
    %2279 = vmatpush1.xpose.msra.mxu0 0.0
    %2280 = vmatprep.subr.mxu0 0.0
    %2281 = vmatpush1.xpose.msra.mxu0 0.0
    %2282 = vmatprep.subr.mxu0 0.0
    %2283 = vmatpush1.xpose.msra.mxu0 0.0
    %2284 = vmatprep.subr.mxu0 0.0
    %2285 = vmatpush1.xpose.msra.mxu0 0.0
    %2286 = vmatprep.subr.mxu0 0.0
    %2287 = vmatpush1.xpose.msra.mxu0 0.0
    %2288 = vmatprep.subr.mxu0 0.0
    %2289 = vmatpush1.xpose.msra.mxu0 0.0
    %2290 = vmatprep.subr.mxu0 0.0
    %2291 = vmatpush1.xpose.msra.mxu0 0.0
    %2292 = vmatprep.subr.mxu0 0.0
    %2293 = vmatpush1.xpose.msra.mxu0 0.0
    %2294 = vmatprep.mubr.f32.mxu0 0.0
    %2295 = vmatmul.mubr.f32.gmra.mrb[0].mxu0 %v2218
    %v2296 = vpop.f32.mrb[0].mxu0
    %v2297 = vadd.f32 %v257, %v2296
    %v2298 = vpop.f32.mrb[0].mxu0
    %2299 = vmatprep.mubr.f32.mxu0 0.0
    %2300 = vmatmul.mubr.f32.gmra.mrb[0].mxu0 %v2220
    %v2301 = vpop.f32.mrb[0].mxu0
    %v2302 = vadd.f32 %v258, %v2301
    %v2303 = vpop.f32.mrb[0].mxu0
    %2304 = vmatprep.mubr.f32.mxu0 0.0
    %2305 = vmatmul.mubr.f32.gmra.mrb[0].mxu0 %v2222
    %v2306 = vpop.f32.mrb[0].mxu0
    %v2307 = vadd.f32 %v259, %v2306
    %v2308 = vpop.f32.mrb[0].mxu0
    %2309 = vdwg.mxu0
    %v2310 = vsel %vm521, %v2297, -inf
    %2311 = vmax.xlane.f32.xlu0 %v2310
    %v2312 = vpop.xlane.xlu0 %2311
    %v2313 = vsel %vm521, %v2302, -inf
    %2314 = vmax.xlane.f32.xlu0 %v2313
    %v2315 = vpop.xlane.xlu0 %2314
    %v2316 = vsel %vm528, %v2307, -inf
    %2317 = vmax.xlane.f32.xlu0 %v2316
    %v2318 = vpop.xlane.xlu0 %2317
    %v2319 = vsub.f32 %v2297, %v2312
    %v2320 = vsub.f32 %v2302, %v2315
    %v2321 = vsub.f32 %v2307, %v2318
    %v2322 = vmul.f32 %v2319, 1.442695
    %v2323 = vpow.pop %v2322
    %v2324 = vmul.f32 %v2320, 1.442695
    %v2325 = vpow.pop %v2324
    %v2326 = vmul.f32 %v2321, 1.442695
    %v2327 = vpow.pop %v2326
    %v2328 = vsel %vm521, %v2323, 0.0
    %2329 = vadd.xlane.f32.xlu0 %v2328
    %v2330 = vpop.xlane.xlu0 %2329
    %v2331 = vsel %vm521, %v2325, 0.0
    %2332 = vadd.xlane.f32.xlu0 %v2331
    %v2333 = vpop.xlane.xlu0 %2332
    %v2334 = vsel %vm528, %v2327, 0.0
    %2335 = vadd.xlane.f32.xlu0 %v2334
    %v2336 = vpop.xlane.xlu0 %2335
    %v2337 = vrcp.pop %v2330
    %v2338 = vrcp.pop %v2333
    %v2339 = vrcp.pop %v2336
    %v2340 = vmul.f32 %v2323, %v2337
    %v2341 = vmul.f32 %v2325, %v2338
    %v2342 = vmul.f32 %v2327, %v2339
    %2343 = vrot.lane.b32.xlu0 %v1960, 56
    %v2344 = vpop.permute.xlu0 %2343
    %2345 = vrot.lane.b32.xlu0 %v1965, 56
    %v2346 = vpop.permute.xlu0 %2345
    %2347 = vrot.lane.b32.xlu0 %v1970, 56
    %v2348 = vpop.permute.xlu0 %2347
    %v2352 = vsel %vm521, %v2340, 0
    %v2355 = vsel %vm521, %v2341, 0
    %v2358 = vsel %vm521, %v2342, 0
    %v2360 = vsel %vm573, %v2348, 0
    %2362 = vmatprep.subr.mxu0 0.0
    %2363 = vmatpush1.msra.mxu0 %v2344
    %2364 = vmatprep.subr.mxu0 0.0
    %2365 = vmatpush1.msra.mxu0 %v2346
    %2366 = vmatprep.subr.mxu0 0.0
    %2367 = vmatpush1.msra.mxu0 %v2360
    %2368 = vmatprep.subr.mxu0 0.0
    %2369 = vmatpush1.msra.mxu0 0.0
    %2370 = vmatprep.subr.mxu0 0.0
    %2371 = vmatpush1.msra.mxu0 0.0
    %2372 = vmatprep.subr.mxu0 0.0
    %2373 = vmatpush1.msra.mxu0 0.0
    %2374 = vmatprep.subr.mxu0 0.0
    %2375 = vmatpush1.msra.mxu0 0.0
    %2376 = vmatprep.subr.mxu0 0.0
    %2377 = vmatpush1.msra.mxu0 0.0
    %2378 = vmatprep.subr.mxu0 0.0
    %2379 = vmatpush1.msra.mxu0 0.0
    %2380 = vmatprep.subr.mxu0 0.0
    %2381 = vmatpush1.msra.mxu0 0.0
    %2382 = vmatprep.subr.mxu0 0.0
    %2383 = vmatpush1.msra.mxu0 0.0
    %2384 = vmatprep.subr.mxu0 0.0
    %2385 = vmatpush1.msra.mxu0 0.0
    %2386 = vmatprep.subr.mxu0 0.0
    %2387 = vmatpush1.msra.mxu0 0.0
    %2388 = vmatprep.subr.mxu0 0.0
    %2389 = vmatpush1.msra.mxu0 0.0
    %2390 = vmatprep.subr.mxu0 0.0
    %2391 = vmatpush1.msra.mxu0 0.0
    %2392 = vmatprep.subr.mxu0 0.0
    %2393 = vmatpush1.msra.mxu0 0.0
    %2394 = vmatprep.subr.mxu0 0.0
    %2395 = vmatpush1.msra.mxu0 0.0
    %2396 = vmatprep.subr.mxu0 0.0
    %2397 = vmatpush1.msra.mxu0 0.0
    %2398 = vmatprep.subr.mxu0 0.0
    %2399 = vmatpush1.msra.mxu0 0.0
    %2400 = vmatprep.subr.mxu0 0.0
    %2401 = vmatpush1.msra.mxu0 0.0
    %2402 = vmatprep.subr.mxu0 0.0
    %2403 = vmatpush1.msra.mxu0 0.0
    %2404 = vmatprep.subr.mxu0 0.0
    %2405 = vmatpush1.msra.mxu0 0.0
    %2406 = vmatprep.subr.mxu0 0.0
    %2407 = vmatpush1.msra.mxu0 0.0
    %2408 = vmatprep.subr.mxu0 0.0
    %2409 = vmatpush1.msra.mxu0 0.0
    %2410 = vmatprep.subr.mxu0 0.0
    %2411 = vmatpush1.msra.mxu0 0.0
    %2412 = vmatprep.subr.mxu0 0.0
    %2413 = vmatpush1.msra.mxu0 0.0
    %2414 = vmatprep.subr.mxu0 0.0
    %2415 = vmatpush1.msra.mxu0 0.0
    %2416 = vmatprep.subr.mxu0 0.0
    %2417 = vmatpush1.msra.mxu0 0.0
    %2418 = vmatprep.subr.mxu0 0.0
    %2419 = vmatpush1.msra.mxu0 0.0
    %2420 = vmatprep.subr.mxu0 0.0
    %2421 = vmatpush1.msra.mxu0 0.0
    %2422 = vmatprep.subr.mxu0 0.0
    %2423 = vmatpush1.msra.mxu0 0.0
    %2424 = vmatprep.subr.mxu0 0.0
    %2425 = vmatpush1.msra.mxu0 0.0
    %2426 = vmatprep.mubr.f32.mxu0 0.0
    %2427 = vmatmul.mubr.f32.gmra.mrb[0].mxu0 %v2352
    %v2428 = vpop.f32.mrb[0].mxu0
    %v2429 = vadd.f32 0.0, %v2428
    %v2430 = vpop.f32.mrb[0].mxu0
    %2431 = vmatprep.mubr.f32.mxu0 0.0
    %2432 = vmatmul.mubr.f32.gmra.mrb[0].mxu0 %v2355
    %v2433 = vpop.f32.mrb[0].mxu0
    %v2434 = vadd.f32 0.0, %v2433
    %v2435 = vpop.f32.mrb[0].mxu0
    %2436 = vmatprep.mubr.f32.mxu0 0.0
    %2437 = vmatmul.mubr.f32.gmra.mrb[0].mxu0 %v2358
    %v2438 = vpop.f32.mrb[0].mxu0
    %v2439 = vadd.f32 0.0, %v2438
    %v2440 = vpop.f32.mrb[0].mxu0
    %2441 = vdwg.mxu0
    %2442 = vrot.lane.b32.xlu0 %v1960, 112
    %v2443 = vpop.permute.xlu0 %2442
    %2444 = vrot.lane.b32.xlu0 %v1965, 112
    %v2445 = vpop.permute.xlu0 %2444
    %2446 = vrot.lane.b32.xlu0 %v1970, 112
    %v2447 = vpop.permute.xlu0 %2446
    %2448 = vrot.lane.b32.xlu0 %v1960, 80
    %v2449 = vpop.permute.xlu0 %2448
    %2450 = vrot.lane.b32.xlu0 %v1965, 80
    %v2451 = vpop.permute.xlu0 %2450
    %2452 = vrot.lane.b32.xlu0 %v1970, 80
    %v2453 = vpop.permute.xlu0 %2452
    %v2454 = vsel %vm428, %v2443, 0
    %v2456 = vsel %vm428, %v2445, 0
    %v2458 = vsel %vm428, %v2447, 0
    %v2460 = vsel %vm428, %v2449, 0
    %v2462 = vsel %vm428, %v2451, 0
    %v2464 = vsel %vm428, %v2453, 0
    %2466 = vmatprep.subr.mxu0 0.0
    %2467 = vmatpush1.xpose.msra.mxu0 %v2460
    %2468 = vmatprep.subr.mxu0 0.0
    %2469 = vmatpush1.xpose.msra.mxu0 %v2462
    %2470 = vmatprep.subr.mxu0 0.0
    %2471 = vmatpush1.xpose.msra.mxu0 %v2464
    %2472 = vmatprep.subr.mxu0 0.0
    %2473 = vmatpush1.xpose.msra.mxu0 0.0
    %2474 = vmatprep.subr.mxu0 0.0
    %2475 = vmatpush1.xpose.msra.mxu0 0.0
    %2476 = vmatprep.subr.mxu0 0.0
    %2477 = vmatpush1.xpose.msra.mxu0 0.0
    %2478 = vmatprep.subr.mxu0 0.0
    %2479 = vmatpush1.xpose.msra.mxu0 0.0
    %2480 = vmatprep.subr.mxu0 0.0
    %2481 = vmatpush1.xpose.msra.mxu0 0.0
    %2482 = vmatprep.subr.mxu0 0.0
    %2483 = vmatpush1.xpose.msra.mxu0 0.0
    %2484 = vmatprep.subr.mxu0 0.0
    %2485 = vmatpush1.xpose.msra.mxu0 0.0
    %2486 = vmatprep.subr.mxu0 0.0
    %2487 = vmatpush1.xpose.msra.mxu0 0.0
    %2488 = vmatprep.subr.mxu0 0.0
    %2489 = vmatpush1.xpose.msra.mxu0 0.0
    %2490 = vmatprep.subr.mxu0 0.0
    %2491 = vmatpush1.xpose.msra.mxu0 0.0
    %2492 = vmatprep.subr.mxu0 0.0
    %2493 = vmatpush1.xpose.msra.mxu0 0.0
    %2494 = vmatprep.subr.mxu0 0.0
    %2495 = vmatpush1.xpose.msra.mxu0 0.0
    %2496 = vmatprep.subr.mxu0 0.0
    %2497 = vmatpush1.xpose.msra.mxu0 0.0
    %2498 = vmatprep.subr.mxu0 0.0
    %2499 = vmatpush1.xpose.msra.mxu0 0.0
    %2500 = vmatprep.subr.mxu0 0.0
    %2501 = vmatpush1.xpose.msra.mxu0 0.0
    %2502 = vmatprep.subr.mxu0 0.0
    %2503 = vmatpush1.xpose.msra.mxu0 0.0
    %2504 = vmatprep.subr.mxu0 0.0
    %2505 = vmatpush1.xpose.msra.mxu0 0.0
    %2506 = vmatprep.subr.mxu0 0.0
    %2507 = vmatpush1.xpose.msra.mxu0 0.0
    %2508 = vmatprep.subr.mxu0 0.0
    %2509 = vmatpush1.xpose.msra.mxu0 0.0
    %2510 = vmatprep.subr.mxu0 0.0
    %2511 = vmatpush1.xpose.msra.mxu0 0.0
    %2512 = vmatprep.subr.mxu0 0.0
    %2513 = vmatpush1.xpose.msra.mxu0 0.0
    %2514 = vmatprep.subr.mxu0 0.0
    %2515 = vmatpush1.xpose.msra.mxu0 0.0
    %2516 = vmatprep.subr.mxu0 0.0
    %2517 = vmatpush1.xpose.msra.mxu0 0.0
    %2518 = vmatprep.subr.mxu0 0.0
    %2519 = vmatpush1.xpose.msra.mxu0 0.0
    %2520 = vmatprep.subr.mxu0 0.0
    %2521 = vmatpush1.xpose.msra.mxu0 0.0
    %2522 = vmatprep.subr.mxu0 0.0
    %2523 = vmatpush1.xpose.msra.mxu0 0.0
    %2524 = vmatprep.subr.mxu0 0.0
    %2525 = vmatpush1.xpose.msra.mxu0 0.0
    %2526 = vmatprep.subr.mxu0 0.0
    %2527 = vmatpush1.xpose.msra.mxu0 0.0
    %2528 = vmatprep.subr.mxu0 0.0
    %2529 = vmatpush1.xpose.msra.mxu0 0.0
    %2530 = vmatprep.mubr.f32.mxu0 0.0
    %2531 = vmatmul.mubr.f32.gmra.mrb[0].mxu0 %v2454
    %v2532 = vpop.f32.mrb[0].mxu0
    %v2533 = vadd.f32 %v257, %v2532
    %v2534 = vpop.f32.mrb[0].mxu0
    %2535 = vmatprep.mubr.f32.mxu0 0.0
    %2536 = vmatmul.mubr.f32.gmra.mrb[0].mxu0 %v2456
    %v2537 = vpop.f32.mrb[0].mxu0
    %v2538 = vadd.f32 %v258, %v2537
    %v2539 = vpop.f32.mrb[0].mxu0
    %2540 = vmatprep.mubr.f32.mxu0 0.0
    %2541 = vmatmul.mubr.f32.gmra.mrb[0].mxu0 %v2458
    %v2542 = vpop.f32.mrb[0].mxu0
    %v2543 = vadd.f32 %v259, %v2542
    %v2544 = vpop.f32.mrb[0].mxu0
    %2545 = vdwg.mxu0
    %v2546 = vsel %vm521, %v2533, -inf
    %2547 = vmax.xlane.f32.xlu0 %v2546
    %v2548 = vpop.xlane.xlu0 %2547
    %v2549 = vsel %vm521, %v2538, -inf
    %2550 = vmax.xlane.f32.xlu0 %v2549
    %v2551 = vpop.xlane.xlu0 %2550
    %v2552 = vsel %vm528, %v2543, -inf
    %2553 = vmax.xlane.f32.xlu0 %v2552
    %v2554 = vpop.xlane.xlu0 %2553
    %v2555 = vsub.f32 %v2533, %v2548
    %v2556 = vsub.f32 %v2538, %v2551
    %v2557 = vsub.f32 %v2543, %v2554
    %v2558 = vmul.f32 %v2555, 1.442695
    %v2559 = vpow.pop %v2558
    %v2560 = vmul.f32 %v2556, 1.442695
    %v2561 = vpow.pop %v2560
    %v2562 = vmul.f32 %v2557, 1.442695
    %v2563 = vpow.pop %v2562
    %v2564 = vsel %vm521, %v2559, 0.0
    %2565 = vadd.xlane.f32.xlu0 %v2564
    %v2566 = vpop.xlane.xlu0 %2565
    %v2567 = vsel %vm521, %v2561, 0.0
    %2568 = vadd.xlane.f32.xlu0 %v2567
    %v2569 = vpop.xlane.xlu0 %2568
    %v2570 = vsel %vm528, %v2563, 0.0
    %2571 = vadd.xlane.f32.xlu0 %v2570
    %v2572 = vpop.xlane.xlu0 %2571
    %v2573 = vrcp.pop %v2566
    %v2574 = vrcp.pop %v2569
    %v2575 = vrcp.pop %v2572
    %v2576 = vmul.f32 %v2559, %v2573
    %v2577 = vmul.f32 %v2561, %v2574
    %v2578 = vmul.f32 %v2563, %v2575
    %2579 = vrot.lane.b32.xlu0 %v1960, 48
    %v2580 = vpop.permute.xlu0 %2579
    %2581 = vrot.lane.b32.xlu0 %v1965, 48
    %v2582 = vpop.permute.xlu0 %2581
    %2583 = vrot.lane.b32.xlu0 %v1970, 48
    %v2584 = vpop.permute.xlu0 %2583
    %v2588 = vsel %vm521, %v2576, 0
    %v2591 = vsel %vm521, %v2577, 0
    %v2594 = vsel %vm521, %v2578, 0
    %v2596 = vsel %vm573, %v2584, 0
    %2598 = vmatprep.subr.mxu0 0.0
    %2599 = vmatpush1.msra.mxu0 %v2580
    %2600 = vmatprep.subr.mxu0 0.0
    %2601 = vmatpush1.msra.mxu0 %v2582
    %2602 = vmatprep.subr.mxu0 0.0
    %2603 = vmatpush1.msra.mxu0 %v2596
    %2604 = vmatprep.subr.mxu0 0.0
    %2605 = vmatpush1.msra.mxu0 0.0
    %2606 = vmatprep.subr.mxu0 0.0
    %2607 = vmatpush1.msra.mxu0 0.0
    %2608 = vmatprep.subr.mxu0 0.0
    %2609 = vmatpush1.msra.mxu0 0.0
    %2610 = vmatprep.subr.mxu0 0.0
    %2611 = vmatpush1.msra.mxu0 0.0
    %2612 = vmatprep.subr.mxu0 0.0
    %2613 = vmatpush1.msra.mxu0 0.0
    %2614 = vmatprep.subr.mxu0 0.0
    %2615 = vmatpush1.msra.mxu0 0.0
    %2616 = vmatprep.subr.mxu0 0.0
    %2617 = vmatpush1.msra.mxu0 0.0
    %2618 = vmatprep.subr.mxu0 0.0
    %2619 = vmatpush1.msra.mxu0 0.0
    %2620 = vmatprep.subr.mxu0 0.0
    %2621 = vmatpush1.msra.mxu0 0.0
    %2622 = vmatprep.subr.mxu0 0.0
    %2623 = vmatpush1.msra.mxu0 0.0
    %2624 = vmatprep.subr.mxu0 0.0
    %2625 = vmatpush1.msra.mxu0 0.0
    %2626 = vmatprep.subr.mxu0 0.0
    %2627 = vmatpush1.msra.mxu0 0.0
    %2628 = vmatprep.subr.mxu0 0.0
    %2629 = vmatpush1.msra.mxu0 0.0
    %2630 = vmatprep.subr.mxu0 0.0
    %2631 = vmatpush1.msra.mxu0 0.0
    %2632 = vmatprep.subr.mxu0 0.0
    %2633 = vmatpush1.msra.mxu0 0.0
    %2634 = vmatprep.subr.mxu0 0.0
    %2635 = vmatpush1.msra.mxu0 0.0
    %2636 = vmatprep.subr.mxu0 0.0
    %2637 = vmatpush1.msra.mxu0 0.0
    %2638 = vmatprep.subr.mxu0 0.0
    %2639 = vmatpush1.msra.mxu0 0.0
    %2640 = vmatprep.subr.mxu0 0.0
    %2641 = vmatpush1.msra.mxu0 0.0
    %2642 = vmatprep.subr.mxu0 0.0
    %2643 = vmatpush1.msra.mxu0 0.0
    %2644 = vmatprep.subr.mxu0 0.0
    %2645 = vmatpush1.msra.mxu0 0.0
    %2646 = vmatprep.subr.mxu0 0.0
    %2647 = vmatpush1.msra.mxu0 0.0
    %2648 = vmatprep.subr.mxu0 0.0
    %2649 = vmatpush1.msra.mxu0 0.0
    %2650 = vmatprep.subr.mxu0 0.0
    %2651 = vmatpush1.msra.mxu0 0.0
    %2652 = vmatprep.subr.mxu0 0.0
    %2653 = vmatpush1.msra.mxu0 0.0
    %2654 = vmatprep.subr.mxu0 0.0
    %2655 = vmatpush1.msra.mxu0 0.0
    %2656 = vmatprep.subr.mxu0 0.0
    %2657 = vmatpush1.msra.mxu0 0.0
    %2658 = vmatprep.subr.mxu0 0.0
    %2659 = vmatpush1.msra.mxu0 0.0
    %2660 = vmatprep.subr.mxu0 0.0
    %2661 = vmatpush1.msra.mxu0 0.0
    %2662 = vmatprep.mubr.f32.mxu0 0.0
    %2663 = vmatmul.mubr.f32.gmra.mrb[0].mxu0 %v2588
    %v2664 = vpop.f32.mrb[0].mxu0
    %v2665 = vadd.f32 0.0, %v2664
    %v2666 = vpop.f32.mrb[0].mxu0
    %2667 = vmatprep.mubr.f32.mxu0 0.0
    %2668 = vmatmul.mubr.f32.gmra.mrb[0].mxu0 %v2591
    %v2669 = vpop.f32.mrb[0].mxu0
    %v2670 = vadd.f32 0.0, %v2669
    %v2671 = vpop.f32.mrb[0].mxu0
    %2672 = vmatprep.mubr.f32.mxu0 0.0
    %2673 = vmatmul.mubr.f32.gmra.mrb[0].mxu0 %v2594
    %v2674 = vpop.f32.mrb[0].mxu0
    %v2675 = vadd.f32 0.0, %v2674
    %v2676 = vpop.f32.mrb[0].mxu0
    %2677 = vdwg.mxu0
    %2678 = vrot.lane.b32.xlu0 %v1960, 104
    %v2679 = vpop.permute.xlu0 %2678
    %2680 = vrot.lane.b32.xlu0 %v1965, 104
    %v2681 = vpop.permute.xlu0 %2680
    %2682 = vrot.lane.b32.xlu0 %v1970, 104
    %v2683 = vpop.permute.xlu0 %2682
    %2684 = vrot.lane.b32.xlu0 %v1960, 72
    %v2685 = vpop.permute.xlu0 %2684
    %2686 = vrot.lane.b32.xlu0 %v1965, 72
    %v2687 = vpop.permute.xlu0 %2686
    %2688 = vrot.lane.b32.xlu0 %v1970, 72
    %v2689 = vpop.permute.xlu0 %2688
    %v2690 = vsel %vm428, %v2679, 0
    %v2692 = vsel %vm428, %v2681, 0
    %v2694 = vsel %vm428, %v2683, 0
    %v2696 = vsel %vm428, %v2685, 0
    %v2698 = vsel %vm428, %v2687, 0
    %v2700 = vsel %vm428, %v2689, 0
    %2702 = vmatprep.subr.mxu0 0.0
    %2703 = vmatpush1.xpose.msra.mxu0 %v2696
    %2704 = vmatprep.subr.mxu0 0.0
    %2705 = vmatpush1.xpose.msra.mxu0 %v2698
    %2706 = vmatprep.subr.mxu0 0.0
    %2707 = vmatpush1.xpose.msra.mxu0 %v2700
    %2708 = vmatprep.subr.mxu0 0.0
    %2709 = vmatpush1.xpose.msra.mxu0 0.0
    %2710 = vmatprep.subr.mxu0 0.0
    %2711 = vmatpush1.xpose.msra.mxu0 0.0
    %2712 = vmatprep.subr.mxu0 0.0
    %2713 = vmatpush1.xpose.msra.mxu0 0.0
    %2714 = vmatprep.subr.mxu0 0.0
    %2715 = vmatpush1.xpose.msra.mxu0 0.0
    %2716 = vmatprep.subr.mxu0 0.0
    %2717 = vmatpush1.xpose.msra.mxu0 0.0
    %2718 = vmatprep.subr.mxu0 0.0
    %2719 = vmatpush1.xpose.msra.mxu0 0.0
    %2720 = vmatprep.subr.mxu0 0.0
    %2721 = vmatpush1.xpose.msra.mxu0 0.0
    %2722 = vmatprep.subr.mxu0 0.0
    %2723 = vmatpush1.xpose.msra.mxu0 0.0
    %2724 = vmatprep.subr.mxu0 0.0
    %2725 = vmatpush1.xpose.msra.mxu0 0.0
    %2726 = vmatprep.subr.mxu0 0.0
    %2727 = vmatpush1.xpose.msra.mxu0 0.0
    %2728 = vmatprep.subr.mxu0 0.0
    %2729 = vmatpush1.xpose.msra.mxu0 0.0
    %2730 = vmatprep.subr.mxu0 0.0
    %2731 = vmatpush1.xpose.msra.mxu0 0.0
    %2732 = vmatprep.subr.mxu0 0.0
    %2733 = vmatpush1.xpose.msra.mxu0 0.0
    %2734 = vmatprep.subr.mxu0 0.0
    %2735 = vmatpush1.xpose.msra.mxu0 0.0
    %2736 = vmatprep.subr.mxu0 0.0
    %2737 = vmatpush1.xpose.msra.mxu0 0.0
    %2738 = vmatprep.subr.mxu0 0.0
    %2739 = vmatpush1.xpose.msra.mxu0 0.0
    %2740 = vmatprep.subr.mxu0 0.0
    %2741 = vmatpush1.xpose.msra.mxu0 0.0
    %2742 = vmatprep.subr.mxu0 0.0
    %2743 = vmatpush1.xpose.msra.mxu0 0.0
    %2744 = vmatprep.subr.mxu0 0.0
    %2745 = vmatpush1.xpose.msra.mxu0 0.0
    %2746 = vmatprep.subr.mxu0 0.0
    %2747 = vmatpush1.xpose.msra.mxu0 0.0
    %2748 = vmatprep.subr.mxu0 0.0
    %2749 = vmatpush1.xpose.msra.mxu0 0.0
    %2750 = vmatprep.subr.mxu0 0.0
    %2751 = vmatpush1.xpose.msra.mxu0 0.0
    %2752 = vmatprep.subr.mxu0 0.0
    %2753 = vmatpush1.xpose.msra.mxu0 0.0
    %2754 = vmatprep.subr.mxu0 0.0
    %2755 = vmatpush1.xpose.msra.mxu0 0.0
    %2756 = vmatprep.subr.mxu0 0.0
    %2757 = vmatpush1.xpose.msra.mxu0 0.0
    %2758 = vmatprep.subr.mxu0 0.0
    %2759 = vmatpush1.xpose.msra.mxu0 0.0
    %2760 = vmatprep.subr.mxu0 0.0
    %2761 = vmatpush1.xpose.msra.mxu0 0.0
    %2762 = vmatprep.subr.mxu0 0.0
    %2763 = vmatpush1.xpose.msra.mxu0 0.0
    %2764 = vmatprep.subr.mxu0 0.0
    %2765 = vmatpush1.xpose.msra.mxu0 0.0
    %2766 = vmatprep.mubr.f32.mxu0 0.0
    %2767 = vmatmul.mubr.f32.gmra.mrb[0].mxu0 %v2690
    %v2768 = vpop.f32.mrb[0].mxu0
    %v2769 = vadd.f32 %v257, %v2768
    %v2770 = vpop.f32.mrb[0].mxu0
    %2771 = vmatprep.mubr.f32.mxu0 0.0
    %2772 = vmatmul.mubr.f32.gmra.mrb[0].mxu0 %v2692
    %v2773 = vpop.f32.mrb[0].mxu0
    %v2774 = vadd.f32 %v258, %v2773
    %v2775 = vpop.f32.mrb[0].mxu0
    %2776 = vmatprep.mubr.f32.mxu0 0.0
    %2777 = vmatmul.mubr.f32.gmra.mrb[0].mxu0 %v2694
    %v2778 = vpop.f32.mrb[0].mxu0
    %v2779 = vadd.f32 %v259, %v2778
    %v2780 = vpop.f32.mrb[0].mxu0
    %2781 = vdwg.mxu0
    %v2782 = vsel %vm521, %v2769, -inf
    %2783 = vmax.xlane.f32.xlu0 %v2782
    %v2784 = vpop.xlane.xlu0 %2783
    %v2785 = vsel %vm521, %v2774, -inf
    %2786 = vmax.xlane.f32.xlu0 %v2785
    %v2787 = vpop.xlane.xlu0 %2786
    %v2788 = vsel %vm528, %v2779, -inf
    %2789 = vmax.xlane.f32.xlu0 %v2788
    %v2790 = vpop.xlane.xlu0 %2789
    %v2791 = vsub.f32 %v2769, %v2784
    %v2792 = vsub.f32 %v2774, %v2787
    %v2793 = vsub.f32 %v2779, %v2790
    %v2794 = vmul.f32 %v2791, 1.442695
    %v2795 = vpow.pop %v2794
    %v2796 = vmul.f32 %v2792, 1.442695
    %v2797 = vpow.pop %v2796
    %v2798 = vmul.f32 %v2793, 1.442695
    %v2799 = vpow.pop %v2798
    %v2800 = vsel %vm521, %v2795, 0.0
    %2801 = vadd.xlane.f32.xlu0 %v2800
    %v2802 = vpop.xlane.xlu0 %2801
    %v2803 = vsel %vm521, %v2797, 0.0
    %2804 = vadd.xlane.f32.xlu0 %v2803
    %v2805 = vpop.xlane.xlu0 %2804
    %v2806 = vsel %vm528, %v2799, 0.0
    %2807 = vadd.xlane.f32.xlu0 %v2806
    %v2808 = vpop.xlane.xlu0 %2807
    %v2809 = vrcp.pop %v2802
    %v2810 = vrcp.pop %v2805
    %v2811 = vrcp.pop %v2808
    %v2812 = vmul.f32 %v2795, %v2809
    %v2813 = vmul.f32 %v2797, %v2810
    %v2814 = vmul.f32 %v2799, %v2811
    %2815 = vrot.lane.b32.xlu0 %v1960, 40
    %v2816 = vpop.permute.xlu0 %2815
    %2817 = vrot.lane.b32.xlu0 %v1965, 40
    %v2818 = vpop.permute.xlu0 %2817
    %2819 = vrot.lane.b32.xlu0 %v1970, 40
    %v2820 = vpop.permute.xlu0 %2819
    %v2824 = vsel %vm521, %v2812, 0
    %v2827 = vsel %vm521, %v2813, 0
    %v2830 = vsel %vm521, %v2814, 0
    %v2832 = vsel %vm573, %v2820, 0
    %2834 = vmatprep.subr.mxu0 0.0
    %2835 = vmatpush1.msra.mxu0 %v2816
    %2836 = vmatprep.subr.mxu0 0.0
    %2837 = vmatpush1.msra.mxu0 %v2818
    %2838 = vmatprep.subr.mxu0 0.0
    %2839 = vmatpush1.msra.mxu0 %v2832
    %2840 = vmatprep.subr.mxu0 0.0
    %2841 = vmatpush1.msra.mxu0 0.0
    %2842 = vmatprep.subr.mxu0 0.0
    %2843 = vmatpush1.msra.mxu0 0.0
    %2844 = vmatprep.subr.mxu0 0.0
    %2845 = vmatpush1.msra.mxu0 0.0
    %2846 = vmatprep.subr.mxu0 0.0
    %2847 = vmatpush1.msra.mxu0 0.0
    %2848 = vmatprep.subr.mxu0 0.0
    %2849 = vmatpush1.msra.mxu0 0.0
    %2850 = vmatprep.subr.mxu0 0.0
    %2851 = vmatpush1.msra.mxu0 0.0
    %2852 = vmatprep.subr.mxu0 0.0
    %2853 = vmatpush1.msra.mxu0 0.0
    %2854 = vmatprep.subr.mxu0 0.0
    %2855 = vmatpush1.msra.mxu0 0.0
    %2856 = vmatprep.subr.mxu0 0.0
    %2857 = vmatpush1.msra.mxu0 0.0
    %2858 = vmatprep.subr.mxu0 0.0
    %2859 = vmatpush1.msra.mxu0 0.0
    %2860 = vmatprep.subr.mxu0 0.0
    %2861 = vmatpush1.msra.mxu0 0.0
    %2862 = vmatprep.subr.mxu0 0.0
    %2863 = vmatpush1.msra.mxu0 0.0
    %2864 = vmatprep.subr.mxu0 0.0
    %2865 = vmatpush1.msra.mxu0 0.0
    %2866 = vmatprep.subr.mxu0 0.0
    %2867 = vmatpush1.msra.mxu0 0.0
    %2868 = vmatprep.subr.mxu0 0.0
    %2869 = vmatpush1.msra.mxu0 0.0
    %2870 = vmatprep.subr.mxu0 0.0
    %2871 = vmatpush1.msra.mxu0 0.0
    %2872 = vmatprep.subr.mxu0 0.0
    %2873 = vmatpush1.msra.mxu0 0.0
    %2874 = vmatprep.subr.mxu0 0.0
    %2875 = vmatpush1.msra.mxu0 0.0
    %2876 = vmatprep.subr.mxu0 0.0
    %2877 = vmatpush1.msra.mxu0 0.0
    %2878 = vmatprep.subr.mxu0 0.0
    %2879 = vmatpush1.msra.mxu0 0.0
    %2880 = vmatprep.subr.mxu0 0.0
    %2881 = vmatpush1.msra.mxu0 0.0
    %2882 = vmatprep.subr.mxu0 0.0
    %2883 = vmatpush1.msra.mxu0 0.0
    %2884 = vmatprep.subr.mxu0 0.0
    %2885 = vmatpush1.msra.mxu0 0.0
    %2886 = vmatprep.subr.mxu0 0.0
    %2887 = vmatpush1.msra.mxu0 0.0
    %2888 = vmatprep.subr.mxu0 0.0
    %2889 = vmatpush1.msra.mxu0 0.0
    %2890 = vmatprep.subr.mxu0 0.0
    %2891 = vmatpush1.msra.mxu0 0.0
    %2892 = vmatprep.subr.mxu0 0.0
    %2893 = vmatpush1.msra.mxu0 0.0
    %2894 = vmatprep.subr.mxu0 0.0
    %2895 = vmatpush1.msra.mxu0 0.0
    %2896 = vmatprep.subr.mxu0 0.0
    %2897 = vmatpush1.msra.mxu0 0.0
    %2898 = vmatprep.mubr.f32.mxu0 0.0
    %2899 = vmatmul.mubr.f32.gmra.mrb[0].mxu0 %v2824
    %v2900 = vpop.f32.mrb[0].mxu0
    %v2901 = vadd.f32 0.0, %v2900
    %v2902 = vpop.f32.mrb[0].mxu0
    %2903 = vmatprep.mubr.f32.mxu0 0.0
    %2904 = vmatmul.mubr.f32.gmra.mrb[0].mxu0 %v2827
    %v2905 = vpop.f32.mrb[0].mxu0
    %v2906 = vadd.f32 0.0, %v2905
    %v2907 = vpop.f32.mrb[0].mxu0
    %2908 = vmatprep.mubr.f32.mxu0 0.0
    %2909 = vmatmul.mubr.f32.gmra.mrb[0].mxu0 %v2830
    %v2910 = vpop.f32.mrb[0].mxu0
    %v2911 = vadd.f32 0.0, %v2910
    %v2912 = vpop.f32.mrb[0].mxu0
    %2913 = vdwg.mxu0
    %2917 = vrot.lane.b32.xlu0 %v2429, 8
    %v2918 = vpop.permute.xlu0 %2917
    %2919 = vrot.lane.b32.xlu0 %v2434, 8
    %v2920 = vpop.permute.xlu0 %2919
    %2921 = vrot.lane.b32.xlu0 %v2439, 8
    %v2922 = vpop.permute.xlu0 %2921
    %2929 = vrot.lane.b32.xlu0 %v2665, 16
    %v2930 = vpop.permute.xlu0 %2929
    %2931 = vrot.lane.b32.xlu0 %v2670, 16
    %v2932 = vpop.permute.xlu0 %2931
    %2933 = vrot.lane.b32.xlu0 %v2675, 16
    %v2934 = vpop.permute.xlu0 %2933
    %2941 = vrot.lane.b32.xlu0 %v2901, 24
    %v2942 = vpop.permute.xlu0 %2941
    %2943 = vrot.lane.b32.xlu0 %v2906, 24
    %v2944 = vpop.permute.xlu0 %2943
    %2945 = vrot.lane.b32.xlu0 %v2911, 24
    %v2946 = vpop.permute.xlu0 %2945
    %v2950 = vsel %vm428, %v2193, %v2918
    %v2951 = vsel %vm428, %v2198, %v2920
    %v2952 = vsel %vm428, %v2203, %v2922
    %v2953 = vsel %vm1403, %v2950, %v2930
    %v2954 = vsel %vm1403, %v2951, %v2932
    %v2955 = vsel %vm1403, %v2952, %v2934
    %v2956 = vsel %vm1407, %v2953, %v2942
    %v2957 = vsel %vm1407, %v2954, %v2944
    %v2958 = vsel %vm1407, %v2955, %v2946
    %s2959 = scalar_lea.vmem %s10, 32
    %v2960 = vld [vmem:[%s2959] sm:$0xff]
    %v2961 = vld [vmem:[%s2959 + $0x8] sm:$0xff]
    %v2962 = vld [vmem:[%s2959 + $0x10] sm:$0xff]
    %v2963 = vld [vmem:[%s2959 + $0x18] sm:$0xff]
    %v2965 = vsel %vm197, %v2956, 0
    %v2968 = vsel %vm197, %v2957, 0
    %v2971 = vsel %vm197, %v2958, 0
    %2973 = vmatprep.subr.mxu0 0.0
    %2974 = vmatpush1.msra.mxu0 %v2960
    %2975 = vmatprep.subr.mxu0 0.0
    %2976 = vmatpush1.msra.mxu0 %v2961
    %2977 = vmatprep.subr.mxu0 0.0
    %2978 = vmatpush1.msra.mxu0 %v2962
    %2979 = vmatprep.subr.mxu0 0.0
    %2980 = vmatpush1.msra.mxu0 %v2963
    %2981 = vmatprep.subr.mxu0 0.0
    %2982 = vmatpush1.msra.mxu0 0.0
    %2983 = vmatprep.subr.mxu0 0.0
    %2984 = vmatpush1.msra.mxu0 0.0
    %2985 = vmatprep.subr.mxu0 0.0
    %2986 = vmatpush1.msra.mxu0 0.0
    %2987 = vmatprep.subr.mxu0 0.0
    %2988 = vmatpush1.msra.mxu0 0.0
    %2989 = vmatprep.subr.mxu0 0.0
    %2990 = vmatpush1.msra.mxu0 0.0
    %2991 = vmatprep.subr.mxu0 0.0
    %2992 = vmatpush1.msra.mxu0 0.0
    %2993 = vmatprep.subr.mxu0 0.0
    %2994 = vmatpush1.msra.mxu0 0.0
    %2995 = vmatprep.subr.mxu0 0.0
    %2996 = vmatpush1.msra.mxu0 0.0
    %2997 = vmatprep.subr.mxu0 0.0
    %2998 = vmatpush1.msra.mxu0 0.0
    %2999 = vmatprep.subr.mxu0 0.0
    %3000 = vmatpush1.msra.mxu0 0.0
    %3001 = vmatprep.subr.mxu0 0.0
    %3002 = vmatpush1.msra.mxu0 0.0
    %3003 = vmatprep.subr.mxu0 0.0
    %3004 = vmatpush1.msra.mxu0 0.0
    %3005 = vmatprep.subr.mxu0 0.0
    %3006 = vmatpush1.msra.mxu0 0.0
    %3007 = vmatprep.subr.mxu0 0.0
    %3008 = vmatpush1.msra.mxu0 0.0
    %3009 = vmatprep.subr.mxu0 0.0
    %3010 = vmatpush1.msra.mxu0 0.0
    %3011 = vmatprep.subr.mxu0 0.0
    %3012 = vmatpush1.msra.mxu0 0.0
    %3013 = vmatprep.subr.mxu0 0.0
    %3014 = vmatpush1.msra.mxu0 0.0
    %3015 = vmatprep.subr.mxu0 0.0
    %3016 = vmatpush1.msra.mxu0 0.0
    %3017 = vmatprep.subr.mxu0 0.0
    %3018 = vmatpush1.msra.mxu0 0.0
    %3019 = vmatprep.subr.mxu0 0.0
    %3020 = vmatpush1.msra.mxu0 0.0
    %3021 = vmatprep.subr.mxu0 0.0
    %3022 = vmatpush1.msra.mxu0 0.0
    %3023 = vmatprep.subr.mxu0 0.0
    %3024 = vmatpush1.msra.mxu0 0.0
    %3025 = vmatprep.subr.mxu0 0.0
    %3026 = vmatpush1.msra.mxu0 0.0
    %3027 = vmatprep.subr.mxu0 0.0
    %3028 = vmatpush1.msra.mxu0 0.0
    %3029 = vmatprep.subr.mxu0 0.0
    %3030 = vmatpush1.msra.mxu0 0.0
    %3031 = vmatprep.subr.mxu0 0.0
    %3032 = vmatpush1.msra.mxu0 0.0
    %3033 = vmatprep.subr.mxu0 0.0
    %3034 = vmatpush1.msra.mxu0 0.0
    %3035 = vmatprep.subr.mxu0 0.0
    %3036 = vmatpush1.msra.mxu0 0.0
    %3037 = vmatprep.mubr.f32.mxu0 0.0
    %3038 = vmatmul.mubr.f32.gmra.mrb[0].mxu0 %v2965
    %v3039 = vpop.f32.mrb[0].mxu0
    %v3040 = vadd.f32 0.0, %v3039
    %v3041 = vpop.f32.mrb[0].mxu0
    %3042 = vmatprep.mubr.f32.mxu0 0.0
    %3043 = vmatmul.mubr.f32.gmra.mrb[0].mxu0 %v2968
    %v3044 = vpop.f32.mrb[0].mxu0
    %v3045 = vadd.f32 0.0, %v3044
    %v3046 = vpop.f32.mrb[0].mxu0
    %3047 = vmatprep.mubr.f32.mxu0 0.0
    %3048 = vmatmul.mubr.f32.gmra.mrb[0].mxu0 %v2971
    %v3049 = vpop.f32.mrb[0].mxu0
    %v3050 = vadd.f32 0.0, %v3049
    %v3051 = vpop.f32.mrb[0].mxu0
    %3052 = vdwg.mxu0
    %v3053 = vadd.f32 %v1807, %v3040
    %v3054 = vadd.f32 %v1808, %v3045
    %v3055 = vadd.f32 %v1809, %v3050
    %s3056 = scalar_lea.vmem %s11, 1
    %v3057 = vld [vmem:[%s3056] sm:$0x1]
    %v3059 = vlaneseq
    %v3060 = vshrl.u32 %v3059, 7
    %v3061 = vsub.s32 0, %v3060
    %v3062 = vrot.slane %v3057, %v3061
    %v3064 = vadd.f32 %v3053, %v3062
    %v3065 = vadd.f32 %v3054, %v3062
    %v3066 = vadd.f32 %v3055, %v3062
    %s3067 = scalar_lea.vmem %s12, 1
    %v3068 = vld [vmem:[%s3067] sm:$0x1]
    %s3069 = scalar_lea.vmem %s13, 1
    %v3070 = vld [vmem:[%s3069] sm:$0x1]
    %v3071 = vsel %vm197, %v3064, 0.0
    %3072 = vadd.xlane.f32.xlu0 %v3071
    %v3073 = vpop.xlane.xlu0 %3072
    %v3074 = vsel %vm197, %v3065, 0.0
    %3075 = vadd.xlane.f32.xlu0 %v3074
    %v3076 = vpop.xlane.xlu0 %3075
    %v3077 = vsel %vm204, %v3066, 0.0
    %3078 = vadd.xlane.f32.xlu0 %v3077
    %v3079 = vpop.xlane.xlu0 %3078
    %v3080 = vmul.f32 %v3073, %v208
    %v3081 = vmul.f32 %v3076, %v208
    %v3082 = vmul.f32 %v3079, %v208
    %v3083 = vsub.f32 %v3064, %v3080
    %v3084 = vsub.f32 %v3065, %v3081
    %v3085 = vsub.f32 %v3066, %v3082
    %v3086 = vmul.f32 %v3083, %v3083
    %v3087 = vmul.f32 %v3084, %v3084
    %v3088 = vmul.f32 %v3085, %v3085
    %v3089 = vsel %vm197, %v3086, 0.0
    %3090 = vadd.xlane.f32.xlu0 %v3089
    %v3091 = vpop.xlane.xlu0 %3090
    %v3092 = vsel %vm197, %v3087, 0.0
    %3093 = vadd.xlane.f32.xlu0 %v3092
    %v3094 = vpop.xlane.xlu0 %3093
    %v3095 = vsel %vm204, %v3088, 0.0
    %3096 = vadd.xlane.f32.xlu0 %v3095
    %v3097 = vpop.xlane.xlu0 %3096
    %v3098 = vmul.f32 %v3091, %v208
    %v3099 = vmul.f32 %v3094, %v208
    %v3100 = vmul.f32 %v3097, %v208
    %v3101 = vadd.f32 %v3098, 1e-05
    %v3102 = vadd.f32 %v3099, 1e-05
    %v3103 = vadd.f32 %v3100, 1e-05
    %v3104 = vrsqrt.pop %v3101
    %v3105 = vrsqrt.pop %v3102
    %v3106 = vrsqrt.pop %v3103
    %v3107 = vmul.f32 %v3083, %v3104
    %v3108 = vmul.f32 %v3084, %v3105
    %v3109 = vmul.f32 %v3085, %v3106
    %v3111 = vlaneseq
    %v3112 = vshrl.u32 %v3111, 7
    %v3113 = vsub.s32 0, %v3112
    %v3114 = vrot.slane %v3068, %v3113
    %v3116 = vmul.f32 %v3107, %v3114
    %v3117 = vmul.f32 %v3108, %v3114
    %v3118 = vmul.f32 %v3109, %v3114
    %v3120 = vlaneseq
    %v3121 = vshrl.u32 %v3120, 7
    %v3122 = vsub.s32 0, %v3121
    %v3123 = vrot.slane %v3070, %v3122
    %v3125 = vadd.f32 %v3116, %v3123
    %v3126 = vadd.f32 %v3117, %v3123
    %v3127 = vadd.f32 %v3118, %v3123
    %s3128 = scalar_lea.vmem %s14, 32
    %v3129 = vld [vmem:[%s3128] sm:$0xff]
    %v3130 = vld [vmem:[%s3128 + $0x8] sm:$0xff]
    %v3131 = vld [vmem:[%s3128 + $0x10] sm:$0xff]
    %v3132 = vld [vmem:[%s3128 + $0x18] sm:$0xff]
    %s3133 = scalar_lea.vmem %s15, 1
    %v3134 = vld [vmem:[%s3133] sm:$0x1]
    %v3136 = vlaneseq
    %v3137 = vshrl.u32 %v3136, 7
    %v3138 = vsub.s32 0, %v3137
    %v3139 = vrot.slane %v3134, %v3138
    %v3142 = vsel %vm197, %v3125, 0
    %v3145 = vsel %vm197, %v3126, 0
    %v3148 = vsel %vm197, %v3127, 0
    %3150 = vmatprep.subr.mxu0 0.0
    %3151 = vmatpush1.msra.mxu0 %v3129
    %3152 = vmatprep.subr.mxu0 0.0
    %3153 = vmatpush1.msra.mxu0 %v3130
    %3154 = vmatprep.subr.mxu0 0.0
    %3155 = vmatpush1.msra.mxu0 %v3131
    %3156 = vmatprep.subr.mxu0 0.0
    %3157 = vmatpush1.msra.mxu0 %v3132
    %3158 = vmatprep.subr.mxu0 0.0
    %3159 = vmatpush1.msra.mxu0 0.0
    %3160 = vmatprep.subr.mxu0 0.0
    %3161 = vmatpush1.msra.mxu0 0.0
    %3162 = vmatprep.subr.mxu0 0.0
    %3163 = vmatpush1.msra.mxu0 0.0
    %3164 = vmatprep.subr.mxu0 0.0
    %3165 = vmatpush1.msra.mxu0 0.0
    %3166 = vmatprep.subr.mxu0 0.0
    %3167 = vmatpush1.msra.mxu0 0.0
    %3168 = vmatprep.subr.mxu0 0.0
    %3169 = vmatpush1.msra.mxu0 0.0
    %3170 = vmatprep.subr.mxu0 0.0
    %3171 = vmatpush1.msra.mxu0 0.0
    %3172 = vmatprep.subr.mxu0 0.0
    %3173 = vmatpush1.msra.mxu0 0.0
    %3174 = vmatprep.subr.mxu0 0.0
    %3175 = vmatpush1.msra.mxu0 0.0
    %3176 = vmatprep.subr.mxu0 0.0
    %3177 = vmatpush1.msra.mxu0 0.0
    %3178 = vmatprep.subr.mxu0 0.0
    %3179 = vmatpush1.msra.mxu0 0.0
    %3180 = vmatprep.subr.mxu0 0.0
    %3181 = vmatpush1.msra.mxu0 0.0
    %3182 = vmatprep.subr.mxu0 0.0
    %3183 = vmatpush1.msra.mxu0 0.0
    %3184 = vmatprep.subr.mxu0 0.0
    %3185 = vmatpush1.msra.mxu0 0.0
    %3186 = vmatprep.subr.mxu0 0.0
    %3187 = vmatpush1.msra.mxu0 0.0
    %3188 = vmatprep.subr.mxu0 0.0
    %3189 = vmatpush1.msra.mxu0 0.0
    %3190 = vmatprep.subr.mxu0 0.0
    %3191 = vmatpush1.msra.mxu0 0.0
    %3192 = vmatprep.subr.mxu0 0.0
    %3193 = vmatpush1.msra.mxu0 0.0
    %3194 = vmatprep.subr.mxu0 0.0
    %3195 = vmatpush1.msra.mxu0 0.0
    %3196 = vmatprep.subr.mxu0 0.0
    %3197 = vmatpush1.msra.mxu0 0.0
    %3198 = vmatprep.subr.mxu0 0.0
    %3199 = vmatpush1.msra.mxu0 0.0
    %3200 = vmatprep.subr.mxu0 0.0
    %3201 = vmatpush1.msra.mxu0 0.0
    %3202 = vmatprep.subr.mxu0 0.0
    %3203 = vmatpush1.msra.mxu0 0.0
    %3204 = vmatprep.subr.mxu0 0.0
    %3205 = vmatpush1.msra.mxu0 0.0
    %3206 = vmatprep.subr.mxu0 0.0
    %3207 = vmatpush1.msra.mxu0 0.0
    %3208 = vmatprep.subr.mxu0 0.0
    %3209 = vmatpush1.msra.mxu0 0.0
    %3210 = vmatprep.subr.mxu0 0.0
    %3211 = vmatpush1.msra.mxu0 0.0
    %3212 = vmatprep.subr.mxu0 0.0
    %3213 = vmatpush1.msra.mxu0 0.0
    %3214 = vmatprep.mubr.f32.mxu0 0.0
    %3215 = vmatmul.mubr.f32.gmra.mrb[0].mxu0 %v3142
    %v3216 = vpop.f32.mrb[0].mxu0
    %v3217 = vadd.f32 %v3139, %v3216
    %v3218 = vpop.f32.mrb[0].mxu0
    %3219 = vmatprep.mubr.f32.mxu0 0.0
    %3220 = vmatmul.mubr.f32.gmra.mrb[0].mxu0 %v3145
    %v3221 = vpop.f32.mrb[0].mxu0
    %v3222 = vadd.f32 %v3139, %v3221
    %v3223 = vpop.f32.mrb[0].mxu0
    %3224 = vmatprep.mubr.f32.mxu0 0.0
    %3225 = vmatmul.mubr.f32.gmra.mrb[0].mxu0 %v3148
    %v3226 = vpop.f32.mrb[0].mxu0
    %v3227 = vadd.f32 %v3139, %v3226
    %v3228 = vpop.f32.mrb[0].mxu0
    %3229 = vdwg.mxu0
    %v3230 = vmul.f32 %v3217, 1.702
    %v3231 = vmul.f32 %v3222, 1.702
    %v3232 = vmul.f32 %v3227, 1.702
    %v3233 = vxor.u32 %v3230, 2147483648
    %v3234 = vxor.u32 %v3231, 2147483648
    %v3235 = vxor.u32 %v3232, 2147483648
    %v3236 = vmul.f32 %v3233, 1.442695
    %v3237 = vpow.pop %v3236
    %v3238 = vmul.f32 %v3234, 1.442695
    %v3239 = vpow.pop %v3238
    %v3240 = vmul.f32 %v3235, 1.442695
    %v3241 = vpow.pop %v3240
    %v3242 = vadd.f32 %v3237, 1.0
    %v3243 = vadd.f32 %v3239, 1.0
    %v3244 = vadd.f32 %v3241, 1.0
    %v3245 = vrcp.pop %v3242
    %v3246 = vmul.f32 1.0, %v3245
    %v3247 = vrcp.pop %v3243
    %v3248 = vmul.f32 1.0, %v3247
    %v3249 = vrcp.pop %v3244
    %v3250 = vmul.f32 1.0, %v3249
    %v3251 = vmul.f32 %v3217, %v3246
    %v3252 = vmul.f32 %v3222, %v3248
    %v3253 = vmul.f32 %v3227, %v3250
    %s3254 = scalar_lea.vmem %s16, 64
    %v3255 = vld [vmem:[%s3254] sm:$0xff]
    %v3256 = vld [vmem:[%s3254 + $0x8] sm:$0xff]
    %v3257 = vld [vmem:[%s3254 + $0x10] sm:$0xff]
    %v3258 = vld [vmem:[%s3254 + $0x18] sm:$0xff]
    %v3259 = vld [vmem:[%s3254 + $0x20] sm:$0xff]
    %v3260 = vld [vmem:[%s3254 + $0x28] sm:$0xff]
    %v3261 = vld [vmem:[%s3254 + $0x30] sm:$0xff]
    %v3262 = vld [vmem:[%s3254 + $0x38] sm:$0xff]
    %v3264 = vsel %vm105, %v3251, 0
    %v3267 = vsel %vm105, %v3252, 0
    %v3270 = vsel %vm105, %v3253, 0
    %3272 = vmatprep.subr.mxu0 0.0
    %3273 = vmatpush1.msra.mxu0 %v3255
    %3274 = vmatprep.subr.mxu0 0.0
    %3275 = vmatpush1.msra.mxu0 %v3256
    %3276 = vmatprep.subr.mxu0 0.0
    %3277 = vmatpush1.msra.mxu0 %v3257
    %3278 = vmatprep.subr.mxu0 0.0
    %3279 = vmatpush1.msra.mxu0 %v3258
    %3280 = vmatprep.subr.mxu0 0.0
    %3281 = vmatpush1.msra.mxu0 %v3259
    %3282 = vmatprep.subr.mxu0 0.0
    %3283 = vmatpush1.msra.mxu0 %v3260
    %3284 = vmatprep.subr.mxu0 0.0
    %3285 = vmatpush1.msra.mxu0 %v3261
    %3286 = vmatprep.subr.mxu0 0.0
    %3287 = vmatpush1.msra.mxu0 %v3262
    %3288 = vmatprep.subr.mxu0 0.0
    %3289 = vmatpush1.msra.mxu0 0.0
    %3290 = vmatprep.subr.mxu0 0.0
    %3291 = vmatpush1.msra.mxu0 0.0
    %3292 = vmatprep.subr.mxu0 0.0
    %3293 = vmatpush1.msra.mxu0 0.0
    %3294 = vmatprep.subr.mxu0 0.0
    %3295 = vmatpush1.msra.mxu0 0.0
    %3296 = vmatprep.subr.mxu0 0.0
    %3297 = vmatpush1.msra.mxu0 0.0
    %3298 = vmatprep.subr.mxu0 0.0
    %3299 = vmatpush1.msra.mxu0 0.0
    %3300 = vmatprep.subr.mxu0 0.0
    %3301 = vmatpush1.msra.mxu0 0.0
    %3302 = vmatprep.subr.mxu0 0.0
    %3303 = vmatpush1.msra.mxu0 0.0
    %3304 = vmatprep.subr.mxu0 0.0
    %3305 = vmatpush1.msra.mxu0 0.0
    %3306 = vmatprep.subr.mxu0 0.0
    %3307 = vmatpush1.msra.mxu0 0.0
    %3308 = vmatprep.subr.mxu0 0.0
    %3309 = vmatpush1.msra.mxu0 0.0
    %3310 = vmatprep.subr.mxu0 0.0
    %3311 = vmatpush1.msra.mxu0 0.0
    %3312 = vmatprep.subr.mxu0 0.0
    %3313 = vmatpush1.msra.mxu0 0.0
    %3314 = vmatprep.subr.mxu0 0.0
    %3315 = vmatpush1.msra.mxu0 0.0
    %3316 = vmatprep.subr.mxu0 0.0
    %3317 = vmatpush1.msra.mxu0 0.0
    %3318 = vmatprep.subr.mxu0 0.0
    %3319 = vmatpush1.msra.mxu0 0.0
    %3320 = vmatprep.subr.mxu0 0.0
    %3321 = vmatpush1.msra.mxu0 0.0
    %3322 = vmatprep.subr.mxu0 0.0
    %3323 = vmatpush1.msra.mxu0 0.0
    %3324 = vmatprep.subr.mxu0 0.0
    %3325 = vmatpush1.msra.mxu0 0.0
    %3326 = vmatprep.subr.mxu0 0.0
    %3327 = vmatpush1.msra.mxu0 0.0
    %3328 = vmatprep.subr.mxu0 0.0
    %3329 = vmatpush1.msra.mxu0 0.0
    %3330 = vmatprep.subr.mxu0 0.0
    %3331 = vmatpush1.msra.mxu0 0.0
    %3332 = vmatprep.subr.mxu0 0.0
    %3333 = vmatpush1.msra.mxu0 0.0
    %3334 = vmatprep.subr.mxu0 0.0
    %3335 = vmatpush1.msra.mxu0 0.0
    %3336 = vmatprep.mubr.f32.mxu0 0.0
    %3337 = vmatmul.mubr.f32.gmra.mrb[0].mxu0 %v3264
    %v3338 = vpop.f32.mrb[0].mxu0
    %v3339 = vadd.f32 0.0, %v3338
    %v3340 = vpop.f32.mrb[0].mxu0
    %3341 = vmatprep.mubr.f32.mxu0 0.0
    %3342 = vmatmul.mubr.f32.gmra.mrb[0].mxu0 %v3267
    %v3343 = vpop.f32.mrb[0].mxu0
    %v3344 = vadd.f32 0.0, %v3343
    %v3345 = vpop.f32.mrb[0].mxu0
    %3346 = vmatprep.mubr.f32.mxu0 0.0
    %3347 = vmatmul.mubr.f32.gmra.mrb[0].mxu0 %v3270
    %v3348 = vpop.f32.mrb[0].mxu0
    %v3349 = vadd.f32 0.0, %v3348
    %v3350 = vpop.f32.mrb[0].mxu0
    %3351 = vdwg.mxu0
    %v3352 = vadd.f32 %v3064, %v3339
    %v3353 = vadd.f32 %v3065, %v3344
    %v3354 = vadd.f32 %v3066, %v3349
    %s3355 = scalar_lea.vmem %s17, 1
    %v3356 = vld [vmem:[%s3355] sm:$0x1]
    %v3358 = vlaneseq
    %v3359 = vshrl.u32 %v3358, 7
    %v3360 = vsub.s32 0, %v3359
    %v3361 = vrot.slane %v3356, %v3360
    %v3363 = vadd.f32 %v3352, %v3361
    %v3364 = vadd.f32 %v3353, %v3361
    %v3365 = vadd.f32 %v3354, %v3361
    %v3366 = vld [vmem:[%s5] sm:$0xf]
    %v3368 = vsel %vm521, %v3366, 0
    %v3371 = vsel %vm573, %v3365, 0
    %3373 = vmatprep.subr.mxu0 0.0
    %3374 = vmatpush1.msra.mxu0 %v3363
    %3375 = vmatprep.subr.mxu0 0.0
    %3376 = vmatpush1.msra.mxu0 %v3364
    %3377 = vmatprep.subr.mxu0 0.0
    %3378 = vmatpush1.msra.mxu0 %v3371
    %3379 = vmatprep.subr.mxu0 0.0
    %3380 = vmatpush1.msra.mxu0 0.0
    %3381 = vmatprep.subr.mxu0 0.0
    %3382 = vmatpush1.msra.mxu0 0.0
    %3383 = vmatprep.subr.mxu0 0.0
    %3384 = vmatpush1.msra.mxu0 0.0
    %3385 = vmatprep.subr.mxu0 0.0
    %3386 = vmatpush1.msra.mxu0 0.0
    %3387 = vmatprep.subr.mxu0 0.0
    %3388 = vmatpush1.msra.mxu0 0.0
    %3389 = vmatprep.subr.mxu0 0.0
    %3390 = vmatpush1.msra.mxu0 0.0
    %3391 = vmatprep.subr.mxu0 0.0
    %3392 = vmatpush1.msra.mxu0 0.0
    %3393 = vmatprep.subr.mxu0 0.0
    %3394 = vmatpush1.msra.mxu0 0.0
    %3395 = vmatprep.subr.mxu0 0.0
    %3396 = vmatpush1.msra.mxu0 0.0
    %3397 = vmatprep.subr.mxu0 0.0
    %3398 = vmatpush1.msra.mxu0 0.0
    %3399 = vmatprep.subr.mxu0 0.0
    %3400 = vmatpush1.msra.mxu0 0.0
    %3401 = vmatprep.subr.mxu0 0.0
    %3402 = vmatpush1.msra.mxu0 0.0
    %3403 = vmatprep.subr.mxu0 0.0
    %3404 = vmatpush1.msra.mxu0 0.0
    %3405 = vmatprep.subr.mxu0 0.0
    %3406 = vmatpush1.msra.mxu0 0.0
    %3407 = vmatprep.subr.mxu0 0.0
    %3408 = vmatpush1.msra.mxu0 0.0
    %3409 = vmatprep.subr.mxu0 0.0
    %3410 = vmatpush1.msra.mxu0 0.0
    %3411 = vmatprep.subr.mxu0 0.0
    %3412 = vmatpush1.msra.mxu0 0.0
    %3413 = vmatprep.subr.mxu0 0.0
    %3414 = vmatpush1.msra.mxu0 0.0
    %3415 = vmatprep.subr.mxu0 0.0
    %3416 = vmatpush1.msra.mxu0 0.0
    %3417 = vmatprep.subr.mxu0 0.0
    %3418 = vmatpush1.msra.mxu0 0.0
    %3419 = vmatprep.subr.mxu0 0.0
    %3420 = vmatpush1.msra.mxu0 0.0
    %3421 = vmatprep.subr.mxu0 0.0
    %3422 = vmatpush1.msra.mxu0 0.0
    %3423 = vmatprep.subr.mxu0 0.0
    %3424 = vmatpush1.msra.mxu0 0.0
    %3425 = vmatprep.subr.mxu0 0.0
    %3426 = vmatpush1.msra.mxu0 0.0
    %3427 = vmatprep.subr.mxu0 0.0
    %3428 = vmatpush1.msra.mxu0 0.0
    %3429 = vmatprep.subr.mxu0 0.0
    %3430 = vmatpush1.msra.mxu0 0.0
    %3431 = vmatprep.subr.mxu0 0.0
    %3432 = vmatpush1.msra.mxu0 0.0
    %3433 = vmatprep.subr.mxu0 0.0
    %3434 = vmatpush1.msra.mxu0 0.0
    %3435 = vmatprep.subr.mxu0 0.0
    %3436 = vmatpush1.msra.mxu0 0.0
    %3437 = vmatprep.mubr.f32.mxu0 0.0
    %3438 = vmatmul.mubr.f32.gmra.mrb[0].mxu0 %v3368
    %v3439 = vpop.f32.mrb[0].mxu0
    %v3440 = vadd.f32 0.0, %v3439
    %v3441 = vpop.f32.mrb[0].mxu0
    %3442 = vdwg.mxu0
    %v3443 = vld [vmem:[%s19] sm:$0x1]
    %v3444 = vld [vmem:[%s20] sm:$0x1]
    %v3445 = vsel %vm204, %v3440, 0.0
    %3446 = vadd.xlane.f32.xlu0 %v3445
    %v3447 = vpop.xlane.xlu0 %3446
    %v3448 = vmul.f32 %v3447, %v208
    %v3449 = vsub.f32 %v3440, %v3448
    %v3450 = vmul.f32 %v3449, %v3449
    %v3451 = vsel %vm204, %v3450, 0.0
    %3452 = vadd.xlane.f32.xlu0 %v3451
    %v3453 = vpop.xlane.xlu0 %3452
    %v3454 = vmul.f32 %v3453, %v208
    %v3455 = vadd.f32 %v3454, 1e-05
    %v3456 = vrsqrt.pop %v3455
    %v3457 = vmul.f32 %v3449, %v3456
    %v3459 = vlaneseq
    %v3460 = vshrl.u32 %v3459, 7
    %v3461 = vsub.s32 0, %v3460
    %v3462 = vrot.slane %v3443, %v3461
    %v3464 = vmul.f32 %v3457, %v3462
    %v3466 = vlaneseq
    %v3467 = vshrl.u32 %v3466, 7
    %v3468 = vsub.s32 0, %v3467
    %v3469 = vrot.slane %v3444, %v3468
    %v3471 = vadd.f32 %v3464, %v3469
    %v3472 = vld [vmem:[%s21] sm:$0xff]
    %v3473 = vld [vmem:[%s21 + $0x8] sm:$0xff]
    %v3474 = vld [vmem:[%s21 + $0x10] sm:$0xff]
    %v3475 = vld [vmem:[%s21 + $0x18] sm:$0xff]
    %v3477 = vsel %vm197, %v3471, 0
    %3479 = vmatprep.subr.mxu0 0.0
    %3480 = vmatpush1.msra.mxu0 %v3472
    %3481 = vmatprep.subr.mxu0 0.0
    %3482 = vmatpush1.msra.mxu0 %v3473
    %3483 = vmatprep.subr.mxu0 0.0
    %3484 = vmatpush1.msra.mxu0 %v3474
    %3485 = vmatprep.subr.mxu0 0.0
    %3486 = vmatpush1.msra.mxu0 %v3475
    %3487 = vmatprep.subr.mxu0 0.0
    %3488 = vmatpush1.msra.mxu0 0.0
    %3489 = vmatprep.subr.mxu0 0.0
    %3490 = vmatpush1.msra.mxu0 0.0
    %3491 = vmatprep.subr.mxu0 0.0
    %3492 = vmatpush1.msra.mxu0 0.0
    %3493 = vmatprep.subr.mxu0 0.0
    %3494 = vmatpush1.msra.mxu0 0.0
    %3495 = vmatprep.subr.mxu0 0.0
    %3496 = vmatpush1.msra.mxu0 0.0
    %3497 = vmatprep.subr.mxu0 0.0
    %3498 = vmatpush1.msra.mxu0 0.0
    %3499 = vmatprep.subr.mxu0 0.0
    %3500 = vmatpush1.msra.mxu0 0.0
    %3501 = vmatprep.subr.mxu0 0.0
    %3502 = vmatpush1.msra.mxu0 0.0
    %3503 = vmatprep.subr.mxu0 0.0
    %3504 = vmatpush1.msra.mxu0 0.0
    %3505 = vmatprep.subr.mxu0 0.0
    %3506 = vmatpush1.msra.mxu0 0.0
    %3507 = vmatprep.subr.mxu0 0.0
    %3508 = vmatpush1.msra.mxu0 0.0
    %3509 = vmatprep.subr.mxu0 0.0
    %3510 = vmatpush1.msra.mxu0 0.0
    %3511 = vmatprep.subr.mxu0 0.0
    %3512 = vmatpush1.msra.mxu0 0.0
    %3513 = vmatprep.subr.mxu0 0.0
    %3514 = vmatpush1.msra.mxu0 0.0
    %3515 = vmatprep.subr.mxu0 0.0
    %3516 = vmatpush1.msra.mxu0 0.0
    %3517 = vmatprep.subr.mxu0 0.0
    %3518 = vmatpush1.msra.mxu0 0.0
    %3519 = vmatprep.subr.mxu0 0.0
    %3520 = vmatpush1.msra.mxu0 0.0
    %3521 = vmatprep.subr.mxu0 0.0
    %3522 = vmatpush1.msra.mxu0 0.0
    %3523 = vmatprep.subr.mxu0 0.0
    %3524 = vmatpush1.msra.mxu0 0.0
    %3525 = vmatprep.subr.mxu0 0.0
    %3526 = vmatpush1.msra.mxu0 0.0
    %3527 = vmatprep.subr.mxu0 0.0
    %3528 = vmatpush1.msra.mxu0 0.0
    %3529 = vmatprep.subr.mxu0 0.0
    %3530 = vmatpush1.msra.mxu0 0.0
    %3531 = vmatprep.subr.mxu0 0.0
    %3532 = vmatpush1.msra.mxu0 0.0
    %3533 = vmatprep.subr.mxu0 0.0
    %3534 = vmatpush1.msra.mxu0 0.0
    %3535 = vmatprep.subr.mxu0 0.0
    %3536 = vmatpush1.msra.mxu0 0.0
    %3537 = vmatprep.subr.mxu0 0.0
    %3538 = vmatpush1.msra.mxu0 0.0
    %3539 = vmatprep.subr.mxu0 0.0
    %3540 = vmatpush1.msra.mxu0 0.0
    %3541 = vmatprep.subr.mxu0 0.0
    %3542 = vmatpush1.msra.mxu0 0.0
    %3543 = vmatprep.mubr.f32.mxu0 0.0
    %3544 = vmatmul.mubr.f32.gmra.mrb[0].mxu0 %v3477
    %v3545 = vpop.f32.mrb[0].mxu0
    %v3546 = vadd.f32 0.0, %v3545
    %v3547 = vpop.f32.mrb[0].mxu0
    %3548 = vdwg.mxu0
    %vm3549 = vcmask 125952
    %3550 = vst.msk [vmem:[#allocation2] sm:$0xf] %vm3549, %v3546
    // Predicated region
    $region90: #{feature_extractor_forward.1} parent=1 // pred_check
      _
    $region91: #{feature_extractor_forward.1} parent=1 // pred_check_branch
      %3552 = sbr.rel (0) target = $region93
    $region92: #{feature_extractor_forward.1} parent=1 // pred_region
      %s3554 = ssub.s32 64, 64
      %3555 = vsyncadd [#allocation3], %s3554
      %s3557 = sshll.u32 [#allocation2], 4
      %s3558 = int_to_ptr.vmem [resolvable:$true] %s3557
      %3560 = dma.vmem_to_hbm [thread:$0]  %s3558, 64, %s22, [#allocation3]
    $region93: #{feature_extractor_forward.1} parent=1 // pred_fallthru
      _
    // Predicated region
    $region94: #{feature_extractor_forward.1} parent=1 // pred_check
      _
    $region95: #{feature_extractor_forward.1} parent=1 // pred_check_branch
      %3562 = sbr.rel (0) target = $region97
    $region96: #{feature_extractor_forward.1} parent=1 // pred_region
      %3563 = dma.done [#allocation3], 64
    $region97: #{feature_extractor_forward.1} parent=1 // pred_fallthru
      _
    %3564 = vsyncpa [#allocation3], 1

</llo_original>
